<compile_context>
chip_gen: v6e
topology: v6e:2x2x1
jax: 0.10.0
libtpu: 0.0.40
codegen_flags: <defaults>
</compile_context>

<pallas_src>
import jax
import jax.numpy as jnp
import numpy as np
from jax.experimental import pallas as pl
from jax.experimental.pallas import tpu as pltpu


def _pool_kernel(x_ref, p_ref, w_ref, g_ref, b_ref, o_ref):
    """Fused conv1d(k=3,s=2,p=1) + Fp32LayerNorm + exact GELU for one time tile.

    x_ref : (TT, 2, B, C)  input pairs (x[2t], x[2t+1]) for this tile
    p_ref : (1, 2, B, C)   pair just before the tile (only meaningful when j > 0)
    w_ref : (3, C, C)      stacked per-tap right-multiply weights
    g_ref, b_ref : (1, C)  LayerNorm affine (fp32)
    o_ref : (TT, B, C)
    """
    j = pl.program_id(0)
    tt, _, n_b, c_in = x_ref.shape
    c_out = o_ref.shape[-1]
    m = tt * n_b

    xv = x_ref[...]                                   # (TT, 2, B, C)
    a1 = xv[:, 0].reshape(m, c_in)                    # x[2t]    -> tap k=1
    a2 = xv[:, 1].reshape(m, c_in)                    # x[2t+1]  -> tap k=2 (and k=0 of next step)

    # Second element of the pair preceding the tile; zero on the very first
    # tile (that's the conv's left zero padding).
    pv = p_ref[0, 1]                                  # (B, C)
    gate = (j > 0).astype(pv.dtype)
    halo = pv * gate

    w0 = w_ref[0]
    w1 = w_ref[1]
    w2 = w_ref[2]

    # fp32 inputs -> true fp32 matmul (matches torch fp32 conv); bf16 path uses
    # the native bf16 MXU with fp32 accumulation.
    prec = (jax.lax.Precision.HIGHEST if a1.dtype == jnp.float32
            else jax.lax.Precision.DEFAULT)

    acc = jnp.dot(a1, w1, precision=prec, preferred_element_type=jnp.float32)
    acc = acc + jnp.dot(a2, w2, precision=prec, preferred_element_type=jnp.float32)

    # Tap k=0 uses x[2t-1]: prepend the halo rows to a2 and drop its last B
    # rows, so a single (M, C) @ (C, C) matmul covers both the in-tile shift
    # and the cross-tile halo.
    if tt > 1:
        a0 = jnp.concatenate([halo, a2[:m - n_b]], axis=0)
    else:
        a0 = halo
    acc = acc + jnp.dot(a0, w0, precision=prec, preferred_element_type=jnp.float32)

    acc = acc.reshape(tt, n_b, c_out)

    # Fp32LayerNorm over channels (eps=1e-5, elementwise affine)
    mean = jnp.mean(acc, axis=-1, keepdims=True)
    var = jnp.mean(jnp.square(acc - mean), axis=-1, keepdims=True)
    y = (acc - mean) * jax.lax.rsqrt(var + 1e-5)
    y = y * g_ref[...] + b_ref[...]

    # exact (erf-based) GELU, matching torch.nn.GELU() default
    y = 0.5 * y * (1.0 + jax.lax.erf(y * 0.7071067811865476))

    o_ref[...] = y.astype(o_ref.dtype)


def pool_layer(x_tbc, conv_w, gamma, beta, *, stride=2, tile_t=64,
               matmul_dtype=None, vmem_limit_bytes=None):
    """PoolLayer forward.

    x_tbc : (T, B, C)          input
    conv_w: (C_out, C_in, K)   torch Conv1d weight layout (no bias)
    gamma, beta : (C,)         Fp32LayerNorm affine
    matmul_dtype: None (exact fp32) or jnp.bfloat16 (fast MXU path)
    returns (T_out, B, C)
    """
    T, B, C = x_tbc.shape
    c_out, c_in, K = conv_w.shape
    assert K == 3 and stride == 2 and c_in == C and c_out == C, (
        "kernel is specialized to PoolLayer defaults: conv pool, k=3, stride=2, pad=1")

    out_dtype = x_tbc.dtype

    # Right-pad time to even so the pair reshape is free (the extra zero step
    # doubles as the conv's right zero padding).
    x = x_tbc
    if T % 2:
        x = jnp.pad(x, ((0, 1), (0, 0), (0, 0)))
    t_out = x.shape[0] // 2

    # Pad batch to a multiple of 8 (sublane) so in-kernel (TT, B, C)->(TT*B, C)
    # reshapes are layout-free; padded rows are sliced off at the end.
    if B % 8:
        b_pad = ((B + 7) // 8) * 8
        x = jnp.pad(x, ((0, 0), (0, b_pad - B), (0, 0)))
    else:
        b_pad = B

    # Free reshape: pair p holds (x[2p], x[2p+1]).  No im2col, no transpose.
    xq = x.reshape(t_out, 2, b_pad, C)

    # torch conv weight (C_out, C_in, K) -> stacked right-multiply (K, C_in, C_out)
    w_stk = jnp.transpose(conv_w, (2, 1, 0))

    if matmul_dtype is not None:
        xq = xq.astype(matmul_dtype)
        w_stk = w_stk.astype(matmul_dtype)

    # Tile selection + explicit scoped-VMEM limit (keep < ~48 MiB of blocks so
    # the config is safe on v7x's 64 MiB VMEM and above v5e/v6e defaults).
    tile_t = max(1, min(tile_t, t_out))
    in_bytes = jnp.dtype(xq.dtype).itemsize
    o_bytes = jnp.dtype(out_dtype).itemsize

    def _est(tt):
        return (2 * tt * 2 * b_pad * C * in_bytes      # x blocks (double-buffered)
                + 2 * tt * b_pad * C * o_bytes          # out blocks
                + 2 * 3 * C * C * in_bytes              # stacked weights
                + 6 * tt * b_pad * C * 4                # fp32 temporaries
                + (2 << 20))

    while tile_t > 8 and _est(tile_t) > (48 << 20):
        tile_t //= 2
    if vmem_limit_bytes is None:
        vmem_limit_bytes = int(min(max(_est(tile_t), 32 << 20), 56 << 20))

    num_tiles = pl.cdiv(t_out, tile_t)
    t_pad = num_tiles * tile_t
    if t_pad != t_out:
        # Zero-pad the time axis so every block is full (avoids any partial-tile
        # clamping / garbage-row issues); extra rows are sliced off below.
        xq = jnp.pad(xq, ((0, t_pad - t_out), (0, 0), (0, 0), (0, 0)))

    out = pl.pallas_call(
        _pool_kernel,
        out_shape=jax.ShapeDtypeStruct((t_pad, b_pad, c_out), out_dtype),
        grid=(num_tiles,),
        in_specs=[
            # current tile of pairs (double-buffered by Pallas)
            pl.BlockSpec((tile_t, 2, b_pad, C), lambda j: (j, 0, 0, 0)),
            # halo: the single pair just before this tile (same array, 1-pair block)
            pl.BlockSpec((1, 2, b_pad, C),
                         lambda j: (jnp.maximum(j * tile_t - 1, 0), 0, 0, 0)),
            # stacked weights & LN affine: constant index maps -> VMEM-resident
            pl.BlockSpec((3, C, c_out), lambda j: (0, 0, 0)),
            pl.BlockSpec((1, c_out), lambda j: (0, 0)),
            pl.BlockSpec((1, c_out), lambda j: (0, 0)),
        ],
        out_specs=pl.BlockSpec((tile_t, b_pad, c_out), lambda j: (j, 0, 0)),
        compiler_params=pltpu.CompilerParams(
            dimension_semantics=("parallel",),        # v7x: shard time tiles across both TCs
            vmem_limit_bytes=vmem_limit_bytes),
    )(xq, xq, w_stk,
      gamma.reshape(1, c_out).astype(jnp.float32),
      beta.reshape(1, c_out).astype(jnp.float32))

    return out[:t_out, :B, :]   # already (T_out, B, C): no post reshape/transpose


if __name__ == "__main__":
    T, B, C, K, STRIDE = 32, 8, 128, 3, 2

    key = jax.random.PRNGKey(0)
    kx, kw = jax.random.split(key)
    x = jax.random.normal(kx, (T, B, C), dtype=jnp.float32)
    # deterministic stand-in for kaiming_normal_ Conv1d init: std = sqrt(2 / fan_in)
    conv_w = jax.random.normal(kw, (C, C, K), dtype=jnp.float32) * np.sqrt(2.0 / (C * K))
    gamma = jnp.ones((C,), jnp.float32)   # torch LayerNorm affine defaults
    beta = jnp.zeros((C,), jnp.float32)

    # tile_t=8 with T_out=16 -> 2 tiles, exercising the cross-tile halo path.
    y = pool_layer(x, conv_w, gamma, beta, stride=STRIDE, tile_t=8)
    y = jax.block_until_ready(y)

    # pure-JAX reference: conv1d(k=3, s=2, p=1) + fp32 layernorm + exact gelu
    pad = K // 2
    x_bct = jnp.transpose(x, (1, 2, 0))                      # (B, C, T)
    ref = jax.lax.conv_general_dilated(
        x_bct, conv_w, window_strides=(STRIDE,), padding=[(pad, pad)],
        dimension_numbers=("NCH", "OIH", "NCH"),
        precision=jax.lax.Precision.HIGHEST)                 # (B, C, T_out)
    ref = jnp.transpose(ref, (0, 2, 1))                      # (B, T_out, C)
    mu = ref.mean(-1, keepdims=True)
    var = ((ref - mu) ** 2).mean(-1, keepdims=True)
    ref = (ref - mu) / jnp.sqrt(var + 1e-5) * gamma + beta
    ref = 0.5 * ref * (1.0 + jax.lax.erf(ref / np.sqrt(2.0)))
    ref = jnp.transpose(ref, (1, 0, 2))                      # (T_out, B, C)

    np.testing.assert_allclose(np.asarray(y), np.asarray(ref), atol=5e-3, rtol=5e-3)

    # Optional fast path: bf16 MXU matmuls, fp32 accumulation/LayerNorm/GELU.
    y_bf16 = pool_layer(x, conv_w, gamma, beta, stride=STRIDE, tile_t=8,
                        matmul_dtype=jnp.bfloat16)
    y_bf16 = jax.block_until_ready(y_bf16)
    np.testing.assert_allclose(np.asarray(y_bf16), np.asarray(ref), atol=1e-1, rtol=1e-1)

    print("KERNEL_OK")
</pallas_src>

<mosaic_0001>
module attributes {stable_mosaic.version = 11 : i64} {
  func.func @_pool_kernel(%arg0: i32, %arg1: memref<8x2x8x128xf32, #tpu.memory_space<vmem>>, %arg2: memref<1x2x8x128xf32, #tpu.memory_space<vmem>>, %arg3: memref<3x128x128xf32, #tpu.memory_space<vmem>>, %arg4: memref<1x128xf32, #tpu.memory_space<vmem>>, %arg5: memref<1x128xf32, #tpu.memory_space<vmem>>, %arg6: memref<8x8x128xf32, #tpu.memory_space<vmem>>) attributes {dimension_semantics = [#tpu.dimension_semantics<parallel>], iteration_bounds = array<i64: 2>, scalar_prefetch = 0 : i64, scratch_operands = 0 : i64, tpu.core_type = #tpu.core_type<tc>, window_params = [{transform_indices = @transform_0, window_bounds = array<i64: 8, 2, 8, 128>}, {transform_indices = @transform_1, window_bounds = array<i64: 1, 2, 8, 128>}, {pipeline_mode = #tpu.pipeline_mode<synchronous>, transform_indices = @transform_2, window_bounds = array<i64: 3, 128, 128>}, {pipeline_mode = #tpu.pipeline_mode<synchronous>, transform_indices = @transform_3, window_bounds = array<i64: 1, 128>}, {pipeline_mode = #tpu.pipeline_mode<synchronous>, transform_indices = @transform_4, window_bounds = array<i64: 1, 128>}, {transform_indices = @transform_5, window_bounds = array<i64: 8, 8, 128>}]} {
    %c0 = arith.constant 0 : index
    %c0_0 = arith.constant 0 : index
    %c0_1 = arith.constant 0 : index
    %c0_2 = arith.constant 0 : index
    %0 = vector.load %arg1[%c0, %c0_0, %c0_1, %c0_2] : memref<8x2x8x128xf32, #tpu.memory_space<vmem>>, vector<8x2x8x128xf32>
    %1 = vector.extract_strided_slice %0 {offsets = [0, 0, 0, 0], sizes = [8, 1, 8, 128], strides = [1, 1, 1, 1]} : vector<8x2x8x128xf32> to vector<8x1x8x128xf32>
    %2 = vector.shape_cast %1 : vector<8x1x8x128xf32> to vector<8x8x128xf32>
    %3 = vector.shape_cast %2 : vector<8x8x128xf32> to vector<64x128xf32>
    %4 = vector.extract_strided_slice %0 {offsets = [0, 1, 0, 0], sizes = [8, 1, 8, 128], strides = [1, 1, 1, 1]} : vector<8x2x8x128xf32> to vector<8x1x8x128xf32>
    %5 = vector.shape_cast %4 : vector<8x1x8x128xf32> to vector<8x8x128xf32>
    %6 = vector.shape_cast %5 : vector<8x8x128xf32> to vector<64x128xf32>
    %c0_3 = arith.constant 0 : index
    %c1 = arith.constant 1 : index
    %c0_4 = arith.constant 0 : index
    %c0_5 = arith.constant 0 : index
    %7 = vector.load %arg2[%c0_3, %c1, %c0_4, %c0_5] : memref<1x2x8x128xf32, #tpu.memory_space<vmem>>, vector<1x1x8x128xf32>
    %8 = vector.shape_cast %7 : vector<1x1x8x128xf32> to vector<8x128xf32>
    %c0_i32 = arith.constant 0 : i32
    %9 = arith.cmpi sgt, %arg0, %c0_i32 : i32
    %10 = arith.extui %9 : i1 to i32
    %11 = arith.sitofp %10 : i32 to f32
    %12 = vector.broadcast %11 : f32 to vector<8x128xf32>
    %13 = arith.mulf %8, %12 : vector<8x128xf32>
    %c0_6 = arith.constant 0 : index
    %c0_7 = arith.constant 0 : index
    %c0_8 = arith.constant 0 : index
    %14 = vector.load %arg3[%c0_6, %c0_7, %c0_8] : memref<3x128x128xf32, #tpu.memory_space<vmem>>, vector<1x128x128xf32>
    %15 = vector.shape_cast %14 : vector<1x128x128xf32> to vector<128x128xf32>
    %c1_9 = arith.constant 1 : index
    %c0_10 = arith.constant 0 : index
    %c0_11 = arith.constant 0 : index
    %16 = vector.load %arg3[%c1_9, %c0_10, %c0_11] : memref<3x128x128xf32, #tpu.memory_space<vmem>>, vector<1x128x128xf32>
    %17 = vector.shape_cast %16 : vector<1x128x128xf32> to vector<128x128xf32>
    %c2 = arith.constant 2 : index
    %c0_12 = arith.constant 0 : index
    %c0_13 = arith.constant 0 : index
    %18 = vector.load %arg3[%c2, %c0_12, %c0_13] : memref<3x128x128xf32, #tpu.memory_space<vmem>>, vector<1x128x128xf32>
    %19 = vector.shape_cast %18 : vector<1x128x128xf32> to vector<128x128xf32>
    %cst = arith.constant dense<0.000000e+00> : vector<64x128xf32>
    %20 = tpu.matmul %3, %17, %cst {dimension_numbers = #tpu.dot_dimension_numbers<[1], [0], [0], [1], [0, 0, 1, 1], [], []>, precision = #tpu.contract_precision<fp32>} : vector<64x128xf32>, vector<128x128xf32>, vector<64x128xf32> -> vector<64x128xf32>
    %cst_14 = arith.constant dense<0.000000e+00> : vector<64x128xf32>
    %21 = tpu.matmul %6, %19, %cst_14 {dimension_numbers = #tpu.dot_dimension_numbers<[1], [0], [0], [1], [0, 0, 1, 1], [], []>, precision = #tpu.contract_precision<fp32>} : vector<64x128xf32>, vector<128x128xf32>, vector<64x128xf32> -> vector<64x128xf32>
    %22 = arith.addf %20, %21 : vector<64x128xf32>
    %23 = vector.extract_strided_slice %6 {offsets = [0, 0], sizes = [56, 128], strides = [1, 1]} : vector<64x128xf32> to vector<56x128xf32>
    %24 = tpu.concatenate %13, %23 in 0 : vector<8x128xf32>, vector<56x128xf32> -> vector<64x128xf32>
    %cst_15 = arith.constant dense<0.000000e+00> : vector<64x128xf32>
    %25 = tpu.matmul %24, %15, %cst_15 {dimension_numbers = #tpu.dot_dimension_numbers<[1], [0], [0], [1], [0, 0, 1, 1], [], []>, precision = #tpu.contract_precision<fp32>} : vector<64x128xf32>, vector<128x128xf32>, vector<64x128xf32> -> vector<64x128xf32>
    %26 = arith.addf %22, %25 : vector<64x128xf32>
    %27 = vector.shape_cast %26 : vector<64x128xf32> to vector<8x8x128xf32>
    %cst_16 = arith.constant dense<0.000000e+00> : vector<8x8xf32>
    %28 = vector.multi_reduction <add>, %27, %cst_16 [2] : vector<8x8x128xf32> to vector<8x8xf32>
    %29 = vector.shape_cast %28 : vector<8x8xf32> to vector<8x8x1xf32>
    %cst_17 = arith.constant 1.280000e+02 : f32
    %30 = vector.broadcast %cst_17 : f32 to vector<8x8x1xf32>
    %31 = arith.divf %29, %30 : vector<8x8x1xf32>
    %32 = vector.broadcast %31 : vector<8x8x1xf32> to vector<8x8x128xf32>
    %33 = arith.subf %27, %32 : vector<8x8x128xf32>
    %34 = arith.mulf %33, %33 : vector<8x8x128xf32>
    %cst_18 = arith.constant dense<0.000000e+00> : vector<8x8xf32>
    %35 = vector.multi_reduction <add>, %34, %cst_18 [2] : vector<8x8x128xf32> to vector<8x8xf32>
    %36 = vector.shape_cast %35 : vector<8x8xf32> to vector<8x8x1xf32>
    %cst_19 = arith.constant 1.280000e+02 : f32
    %37 = vector.broadcast %cst_19 : f32 to vector<8x8x1xf32>
    %38 = arith.divf %36, %37 : vector<8x8x1xf32>
    %39 = vector.broadcast %31 : vector<8x8x1xf32> to vector<8x8x128xf32>
    %40 = arith.subf %27, %39 : vector<8x8x128xf32>
    %cst_20 = arith.constant 9.99999974E-6 : f32
    %41 = vector.broadcast %cst_20 : f32 to vector<8x8x1xf32>
    %42 = arith.addf %38, %41 : vector<8x8x1xf32>
    %43 = math.rsqrt %42 : vector<8x8x1xf32>
    %44 = vector.broadcast %43 : vector<8x8x1xf32> to vector<8x8x128xf32>
    %45 = arith.mulf %40, %44 : vector<8x8x128xf32>
    %c0_21 = arith.constant 0 : index
    %c0_22 = arith.constant 0 : index
    %46 = vector.load %arg4[%c0_21, %c0_22] : memref<1x128xf32, #tpu.memory_space<vmem>>, vector<1x128xf32>
    %47 = vector.shape_cast %46 : vector<1x128xf32> to vector<1x1x128xf32>
    %48 = vector.broadcast %47 : vector<1x1x128xf32> to vector<8x8x128xf32>
    %49 = arith.mulf %45, %48 : vector<8x8x128xf32>
    %c0_23 = arith.constant 0 : index
    %c0_24 = arith.constant 0 : index
    %50 = vector.load %arg5[%c0_23, %c0_24] : memref<1x128xf32, #tpu.memory_space<vmem>>, vector<1x128xf32>
    %51 = vector.shape_cast %50 : vector<1x128xf32> to vector<1x1x128xf32>
    %52 = vector.broadcast %51 : vector<1x1x128xf32> to vector<8x8x128xf32>
    %53 = arith.addf %49, %52 : vector<8x8x128xf32>
    %cst_25 = arith.constant 5.000000e-01 : f32
    %54 = vector.broadcast %cst_25 : f32 to vector<8x8x128xf32>
    %55 = arith.mulf %54, %53 : vector<8x8x128xf32>
    %cst_26 = arith.constant 0.707106769 : f32
    %56 = vector.broadcast %cst_26 : f32 to vector<8x8x128xf32>
    %57 = arith.mulf %53, %56 : vector<8x8x128xf32>
    %58 = math.erf %57 : vector<8x8x128xf32>
    %cst_27 = arith.constant 1.000000e+00 : f32
    %59 = vector.broadcast %cst_27 : f32 to vector<8x8x128xf32>
    %60 = arith.addf %59, %58 : vector<8x8x128xf32>
    %61 = arith.mulf %55, %60 : vector<8x8x128xf32>
    %c0_28 = arith.constant 0 : index
    %c0_29 = arith.constant 0 : index
    %c0_30 = arith.constant 0 : index
    %62 = vector.load %arg6[%c0_28, %c0_29, %c0_30] : memref<8x8x128xf32, #tpu.memory_space<vmem>>, vector<8x8x128xf32>
    tpu.vector_store %arg6[%c0_28, %c0_29, %c0_30], %61 {strides = array<i32>} : memref<8x8x128xf32, #tpu.memory_space<vmem>>, vector<8x8x128xf32>,
    return
  }
  func.func @transform_0(%arg0: i32) -> (i32, i32, i32, i32) {
    %c0_i32 = arith.constant 0 : i32
    %c0_i32_0 = arith.constant 0 : i32
    %c0_i32_1 = arith.constant 0 : i32
    %c0_i32_2 = arith.constant 0 : i32
    return %arg0, %c0_i32, %c0_i32_0, %c0_i32_1 : i32, i32, i32, i32
  }
  func.func @transform_1(%arg0: i32) -> (i32, i32, i32, i32) {
    %c8_i32 = arith.constant 8 : i32
    %0 = arith.muli %arg0, %c8_i32 : i32
    %c1_i32 = arith.constant 1 : i32
    %1 = arith.subi %0, %c1_i32 : i32
    %c0_i32 = arith.constant 0 : i32
    %2 = arith.maxsi %1, %c0_i32 : i32
    %c0_i32_0 = arith.constant 0 : i32
    %c0_i32_1 = arith.constant 0 : i32
    %c0_i32_2 = arith.constant 0 : i32
    %c0_i32_3 = arith.constant 0 : i32
    return %2, %c0_i32_0, %c0_i32_1, %c0_i32_2 : i32, i32, i32, i32
  }
  func.func @transform_2(%arg0: i32) -> (i32, i32, i32) {
    %c0_i32 = arith.constant 0 : i32
    %c0_i32_0 = arith.constant 0 : i32
    %c0_i32_1 = arith.constant 0 : i32
    %c0_i32_2 = arith.constant 0 : i32
    return %c0_i32, %c0_i32_0, %c0_i32_1 : i32, i32, i32
  }
  func.func @transform_3(%arg0: i32) -> (i32, i32) {
    %c0_i32 = arith.constant 0 : i32
    %c0_i32_0 = arith.constant 0 : i32
    %c0_i32_1 = arith.constant 0 : i32
    return %c0_i32, %c0_i32_0 : i32, i32
  }
  func.func @transform_4(%arg0: i32) -> (i32, i32) {
    %c0_i32 = arith.constant 0 : i32
    %c0_i32_0 = arith.constant 0 : i32
    %c0_i32_1 = arith.constant 0 : i32
    return %c0_i32, %c0_i32_0 : i32, i32
  }
  func.func @transform_5(%arg0: i32) -> (i32, i32, i32) {
    %c0_i32 = arith.constant 0 : i32
    %c0_i32_0 = arith.constant 0 : i32
    %c0_i32_1 = arith.constant 0 : i32
    return %arg0, %c0_i32, %c0_i32_0 : i32, i32, i32
  }
}

</mosaic_0001>

<llo_original>
// kernel: tpu_custom_call.1
$region0: #{tpu_custom_call.1}
  #allocation0 [shape = 'u32[]', space=smem, size = 0x4, offset = 0x4, fixed_abs, tag = 'smem constant byte address 0x4 - core index']
  #allocation1 [shape = 'u32[144,128]{1,0:T(1,128)}', space=vmem, size = 0x12000, scoped, tag = 'internal scratch']
  %s0 = inlined_call_operand.hbm [shape: f32[16,2,8,128], index: 0, kind: input, shape index: {}]
  %s1 = inlined_call_operand.hbm [shape: f32[16,2,8,128], index: 1, kind: input, shape index: {}]
  %s2 = inlined_call_operand.hbm [shape: f32[3,128,128], index: 2, kind: input, shape index: {}]
  %s3 = inlined_call_operand.vmem [shape: f32[1,128], index: 3, kind: input, shape index: {}]
  %s4 = inlined_call_operand.vmem [shape: f32[1,128], index: 4, kind: input, shape index: {}]
  %s5 = inlined_call_operand.hbm [shape: f32[16,8,128], index: 5, kind: output, shape index: {}]
  %s6 = sld [smem:[#allocation0]]
  $region65: #{tpu_custom_call.1} parent=0
    _
  %s8 = ssub.s32 1, %s6
  %s9 = scalar_select 0, %s8, %s6
  $region1: #{tpu_custom_call.1} parent=0
    #allocation2 [shape = 'u8[131072]{0}', space=vmem, size = 0x20000, scoped, tag = 'input window, operand 0']
    #allocation3 [shape = 's32[2]{0}', space=sflag, size = 0x8, scoped, tag = 'scoped memory for tpu_custom_call.1']
    #allocation4 [shape = 's32[2]{0}', space=sflag, size = 0x8, scoped, tag = 'scoped memory for tpu_custom_call.1']
    #allocation5 [shape = 'u8[16384]{0}', space=vmem, size = 0x4000, scoped, tag = 'input window, operand 1']
    #allocation6 [shape = 's32[2]{0}', space=sflag, size = 0x8, scoped, tag = 'scoped memory for tpu_custom_call.1']
    #allocation7 [shape = 'u8[196608]{0}', space=vmem, size = 0x30000, scoped, tag = 'input window, operand 2, single buffered']
    #allocation8 [shape = 'u8[65536]{0}', space=vmem, size = 0x10000, scoped, tag = 'output window, operand 0']
    %10 = vsyncpa [#allocation3], 0
    %s11 = scalar_lea.sflag [#allocation3], 1
    %12 = vsyncpa %s11, 0
    %13 = vsyncpa [#allocation6], 0
    %s14 = scalar_lea.sflag [#allocation6], 1
    %15 = vsyncpa %s14, 0
    %16 = vsyncpa [#allocation4], 0
    %s17 = scalar_lea.sflag [#allocation4], 1
    %18 = vsyncpa %s17, 0
    loop: start=0, step=1, limit=4
    $region2: #{tpu_custom_call.1} parent=1 // loop_pre_header
      _
    $region3: #{tpu_custom_call.1} parent=1 // loop_header
      %s20 = sphi 0, %s24
      %p21 = scmp.ge.s32.totalorder %s20, 4
      %s30 = sphi 0, %s32
      %s33 = sphi 0, %s30
      %s34 = sphi 0, %s33
      %s50 = sphi 0, %s34
      %s64 = sphi 0, %s66
      %s67 = sphi 0, %s64
      %s68 = sphi 0, %s67
      %s84 = sphi 0, %s68
      %s88 = sphi 0, %s88
      %s90 = sphi 0, %s88
      %s91 = sphi 0, %s90
      %s105 = sphi 0, %s91
      %s109 = sphi 0, %s109
      %s111 = sphi 0, %s109
      %s112 = sphi 0, %s111
      %s126 = sphi 0, %s112
      %s130 = sphi 0, %s130
      %s132 = sphi 0, %s130
      %s133 = sphi 0, %s132
      %s147 = sphi 0, %s133
      %s153 = sphi 0, %s155
      %s156 = sphi 0, %s153
      %s157 = sphi 0, %s156
      %s173 = sphi 0, %s157
    $region4: #{tpu_custom_call.1} parent=1 // loop_header_branch
      %23 = sbr.rel (%p21) target = $region8
    $region5: #{tpu_custom_call.1} parent=1 // loop_body
      %s25 = ssub.s32 %s20, 1
      %s26 = ssub.s32 %s20, 2
      %s27 = sadd.s32 %s20, 1
      %s28 = ssub.s32 %s20, %s27
      %p29 = scmp.eq.s32.totalorder %s28, 0
      %s31 = sadd.s32 %s30, 1
      %s32 = scalar_select %p29, %s30, %s31
      %p35 = pneg %p29
      %p36 = scmp.eq.s32.totalorder %s20, 1
      %p37 = por %p35, %p36
      %p38 = scmp.ne.s32.totalorder %s30, %s33
      %p39 = scmp.eq.s32.totalorder %s20, 0
      %p40 = por %p38, %p39
      %p41 = scmp.ne.s32.totalorder %s30, %s33
      %p42 = scmp.eq.s32.totalorder %s25, 1
      %p43 = por %p41, %p42
      %p44 = scmp.ne.s32.totalorder %s33, %s34
      %p45 = scmp.eq.s32.totalorder %s25, 0
      %p46 = por %p44, %p45
      %p47 = scmp.ne.s32.totalorder %s33, %s34
      %p48 = scmp.eq.s32.totalorder %s26, 1
      %p49 = por %p47, %p48
      %p51 = scmp.ne.s32.totalorder %s34, %s50
      %p52 = scmp.eq.s32.totalorder %s26, 0
      %p53 = por %p51, %p52
      %s54 = smul.u32 %s20, 8
      %s55 = ssub.s32 %s54, 1
      %p56 = scmp.gt.s32.totalorder %s55, 0
      %s57 = scalar_select %p56, %s55, 0
      %s58 = smul.u32 %s27, 8
      %s59 = ssub.s32 %s58, 1
      %p60 = scmp.gt.s32.totalorder %s59, 0
      %s61 = scalar_select %p60, %s59, 0
      %s62 = ssub.s32 %s57, %s61
      %p63 = scmp.eq.s32.totalorder %s62, 0
      %s65 = sadd.s32 %s64, 1
      %s66 = scalar_select %p63, %s64, %s65
      %p69 = pneg %p63
      %p70 = scmp.eq.s32.totalorder %s20, 1
      %p71 = por %p69, %p70
      %p72 = scmp.ne.s32.totalorder %s64, %s67
      %p73 = scmp.eq.s32.totalorder %s20, 0
      %p74 = por %p72, %p73
      %p75 = scmp.ne.s32.totalorder %s64, %s67
      %p76 = scmp.eq.s32.totalorder %s25, 1
      %p77 = por %p75, %p76
      %p78 = scmp.ne.s32.totalorder %s67, %s68
      %p79 = scmp.eq.s32.totalorder %s25, 0
      %p80 = por %p78, %p79
      %p81 = scmp.ne.s32.totalorder %s67, %s68
      %p82 = scmp.eq.s32.totalorder %s26, 1
      %p83 = por %p81, %p82
      %p85 = scmp.ne.s32.totalorder %s68, %s84
      %p86 = scmp.eq.s32.totalorder %s26, 0
      %p87 = por %p85, %p86
      %s89 = sadd.s32 %s88, 1
      %p92 = scmp.eq.s32.totalorder %s20, 1
      %p93 = scmp.ne.s32.totalorder %s88, %s90
      %p94 = scmp.eq.s32.totalorder %s20, 0
      %p95 = por %p93, %p94
      %p96 = scmp.ne.s32.totalorder %s88, %s90
      %p97 = scmp.eq.s32.totalorder %s25, 1
      %p98 = por %p96, %p97
      %p99 = scmp.ne.s32.totalorder %s90, %s91
      %p100 = scmp.eq.s32.totalorder %s25, 0
      %p101 = por %p99, %p100
      %p102 = scmp.ne.s32.totalorder %s90, %s91
      %p103 = scmp.eq.s32.totalorder %s26, 1
      %p104 = por %p102, %p103
      %p106 = scmp.ne.s32.totalorder %s91, %s105
      %p107 = scmp.eq.s32.totalorder %s26, 0
      %p108 = por %p106, %p107
      %s110 = sadd.s32 %s109, 1
      %p113 = scmp.eq.s32.totalorder %s20, 1
      %p114 = scmp.ne.s32.totalorder %s109, %s111
      %p115 = scmp.eq.s32.totalorder %s20, 0
      %p116 = por %p114, %p115
      %p117 = scmp.ne.s32.totalorder %s109, %s111
      %p118 = scmp.eq.s32.totalorder %s25, 1
      %p119 = por %p117, %p118
      %p120 = scmp.ne.s32.totalorder %s111, %s112
      %p121 = scmp.eq.s32.totalorder %s25, 0
      %p122 = por %p120, %p121
      %p123 = scmp.ne.s32.totalorder %s111, %s112
      %p124 = scmp.eq.s32.totalorder %s26, 1
      %p125 = por %p123, %p124
      %p127 = scmp.ne.s32.totalorder %s112, %s126
      %p128 = scmp.eq.s32.totalorder %s26, 0
      %p129 = por %p127, %p128
      %s131 = sadd.s32 %s130, 1
      %p134 = scmp.eq.s32.totalorder %s20, 1
      %p135 = scmp.ne.s32.totalorder %s130, %s132
      %p136 = scmp.eq.s32.totalorder %s20, 0
      %p137 = por %p135, %p136
      %p138 = scmp.ne.s32.totalorder %s130, %s132
      %p139 = scmp.eq.s32.totalorder %s25, 1
      %p140 = por %p138, %p139
      %p141 = scmp.ne.s32.totalorder %s132, %s133
      %p142 = scmp.eq.s32.totalorder %s25, 0
      %p143 = por %p141, %p142
      %p144 = scmp.ne.s32.totalorder %s132, %s133
      %p145 = scmp.eq.s32.totalorder %s26, 1
      %p146 = por %p144, %p145
      %p148 = scmp.ne.s32.totalorder %s133, %s147
      %p149 = scmp.eq.s32.totalorder %s26, 0
      %p150 = por %p148, %p149
      %s151 = ssub.s32 %s20, %s27
      %p152 = scmp.eq.s32.totalorder %s151, 0
      %s154 = sadd.s32 %s153, 1
      %s155 = scalar_select %p152, %s153, %s154
      %p158 = pneg %p152
      %p159 = scmp.eq.s32.totalorder %s20, 1
      %p160 = por %p158, %p159
      %p161 = scmp.ne.s32.totalorder %s153, %s156
      %p162 = scmp.eq.s32.totalorder %s20, 0
      %p163 = por %p161, %p162
      %p164 = scmp.ne.s32.totalorder %s153, %s156
      %p165 = scmp.eq.s32.totalorder %s25, 1
      %p166 = por %p164, %p165
      %p167 = scmp.ne.s32.totalorder %s156, %s157
      %p168 = scmp.eq.s32.totalorder %s25, 0
      %p169 = por %p167, %p168
      %p170 = scmp.ne.s32.totalorder %s156, %s157
      %p171 = scmp.eq.s32.totalorder %s26, 1
      %p172 = por %p170, %p171
      %p174 = scmp.ne.s32.totalorder %s157, %s173
      %p175 = scmp.eq.s32.totalorder %s26, 0
      %p176 = por %p174, %p175
      %p177 = scmp.le.s32.totalorder 1, %s20
      %p178 = scmp.lt.s32.totalorder %s20, 3
      %p179 = pnand %p177, %p178
      %p180 = pneg %p179
      // Predicated region
      $region9: #{tpu_custom_call.1} parent=5 // pred_check
        _
      $region10: #{tpu_custom_call.1} parent=5 // pred_check_branch
        %182 = sbr.rel (%p179) target = $region12
      $region11: #{tpu_custom_call.1} parent=5 // pred_region
        %s183 = ssub.s32 %s20, 1
        // Predicated region
        $region13: #{tpu_custom_call.1} parent=11 // pred_check
          %p184 = pneg %p101
        $region14: #{tpu_custom_call.1} parent=11 // pred_check_branch
          %186 = sbr.rel (%p184) target = $region16
        $region15: #{tpu_custom_call.1} parent=11 // pred_region
          %s188 = ssub.s32 6144, 6144
          %189 = vsyncadd [#allocation6], %s188
          %s190 = sshll.u32 [#allocation7], 4
          %s191 = int_to_ptr.vmem [resolvable:$true] %s190
          %196 = dma.hbm_to_vmem [thread:$0]  %s2, 6144, %s191, [#allocation6], 128, 128, 8
        $region16: #{tpu_custom_call.1} parent=11 // pred_fallthru
          _
        // Predicated region
        $region17: #{tpu_custom_call.1} parent=11 // pred_check
          %p197 = pneg %p122
        $region18: #{tpu_custom_call.1} parent=11 // pred_check_branch
          %199 = sbr.rel (%p197) target = $region20
        $region19: #{tpu_custom_call.1} parent=11 // pred_region
          _
        $region20: #{tpu_custom_call.1} parent=11 // pred_fallthru
          _
        // Predicated region
        $region21: #{tpu_custom_call.1} parent=11 // pred_check
          %p200 = pneg %p143
        $region22: #{tpu_custom_call.1} parent=11 // pred_check_branch
          %202 = sbr.rel (%p200) target = $region24
        $region23: #{tpu_custom_call.1} parent=11 // pred_region
          _
        $region24: #{tpu_custom_call.1} parent=11 // pred_fallthru
          _
      $region12: #{tpu_custom_call.1} parent=5 // pred_fallthru
        _
      %p203 = scmp.lt.s32.totalorder %s20, 2
      // Predicated region
      $region25: #{tpu_custom_call.1} parent=5 // pred_check
        %p204 = pneg %p203
      $region26: #{tpu_custom_call.1} parent=5 // pred_check_branch
        %206 = sbr.rel (%p204) target = $region28
      $region27: #{tpu_custom_call.1} parent=5 // pred_region
        // Predicated region
        $region29: #{tpu_custom_call.1} parent=27 // pred_check
          %p207 = pneg %p40
        $region30: #{tpu_custom_call.1} parent=27 // pred_check_branch
          %209 = sbr.rel (%p207) target = $region32
        $region31: #{tpu_custom_call.1} parent=27 // pred_region
          %s210 = sand.u32 %s30, 1
          %s211 = scalar_lea.sflag [#allocation3], %s210
          %s212 = sand.u32 %s30, 1
          %s213 = smul.addr %s212, 128
          %s214 = scalar_lea.vmem [#allocation2], %s213
          %s215 = smul.u32 8, %s20
          %s217 = ssub.s32 2048, 2048
          %218 = vsyncadd %s211, %s217
          %s219 = smul.addr %s215, 2
          %s220 = smul.addr %s219, 128
          %s221 = scalar_lea.hbm %s0, %s220
          %s222 = sshll.u32 %s214, 4
          %s223 = int_to_ptr.vmem [resolvable:$true] %s222
          %228 = dma.hbm_to_vmem [thread:$0]  %s221, 2048, %s223, %s211, 128, 128, 8
        $region32: #{tpu_custom_call.1} parent=27 // pred_fallthru
          _
        // Predicated region
        $region33: #{tpu_custom_call.1} parent=27 // pred_check
          %p229 = pneg %p74
        $region34: #{tpu_custom_call.1} parent=27 // pred_check_branch
          %231 = sbr.rel (%p229) target = $region36
        $region35: #{tpu_custom_call.1} parent=27 // pred_region
          %s232 = sand.u32 %s20, 1
          %s233 = scalar_lea.sflag [#allocation6], %s232
          %s234 = sand.u32 %s64, 1
          %s235 = smul.addr %s234, 16
          %s236 = scalar_lea.vmem [#allocation5], %s235
          %s237 = smul.u32 %s20, 8
          %s238 = ssub.s32 %s237, 1
          %p239 = scmp.gt.s32.totalorder %s238, 0
          %s240 = scalar_select %p239, %s238, 0
          %s242 = ssub.s32 256, 256
          %243 = vsyncadd %s233, %s242
          %s244 = smul.addr %s240, 2
          %s245 = smul.addr %s244, 128
          %s246 = scalar_lea.hbm %s1, %s245
          %s247 = sshll.u32 %s236, 4
          %s248 = int_to_ptr.vmem [resolvable:$true] %s247
          %253 = dma.hbm_to_vmem [thread:$0]  %s246, 256, %s248, %s233, 128, 128, 8
        $region36: #{tpu_custom_call.1} parent=27 // pred_fallthru
          _
      $region28: #{tpu_custom_call.1} parent=5 // pred_fallthru
        _
      %p254 = scmp.le.s32.totalorder 1, %s20
      %p255 = scmp.lt.s32.totalorder %s20, 3
      %p256 = pnand %p254, %p255
      %p257 = pneg %p256
      // Predicated region
      $region37: #{tpu_custom_call.1} parent=5 // pred_check
        _
      $region38: #{tpu_custom_call.1} parent=5 // pred_check_branch
        %259 = sbr.rel (%p256) target = $region40
      $region39: #{tpu_custom_call.1} parent=5 // pred_region
        %s260 = ssub.s32 %s20, 1
        %s261 = sand.u32 %s33, 1
        %s262 = scalar_lea.sflag [#allocation3], %s261
        %s263 = sand.u32 %s33, 1
        %s264 = smul.addr %s263, 128
        %s265 = scalar_lea.vmem [#allocation2], %s264
        // Predicated region
        $region41: #{tpu_custom_call.1} parent=39 // pred_check
          %p266 = pneg %p46
        $region42: #{tpu_custom_call.1} parent=39 // pred_check_branch
          %268 = sbr.rel (%p266) target = $region44
        $region43: #{tpu_custom_call.1} parent=39 // pred_region
          %269 = dma.done %s262, 2048
        $region44: #{tpu_custom_call.1} parent=39 // pred_fallthru
          _
        %s270 = sand.u32 %s25, 1
        %s271 = scalar_lea.sflag [#allocation6], %s270
        %s272 = sand.u32 %s67, 1
        %s273 = smul.addr %s272, 16
        %s274 = scalar_lea.vmem [#allocation5], %s273
        // Predicated region
        $region45: #{tpu_custom_call.1} parent=39 // pred_check
          %p275 = pneg %p80
        $region46: #{tpu_custom_call.1} parent=39 // pred_check_branch
          %277 = sbr.rel (%p275) target = $region48
        $region47: #{tpu_custom_call.1} parent=39 // pred_region
          %278 = dma.done %s271, 256
        $region48: #{tpu_custom_call.1} parent=39 // pred_fallthru
          _
        // Predicated region
        $region49: #{tpu_custom_call.1} parent=39 // pred_check
          %p279 = pneg %p101
        $region50: #{tpu_custom_call.1} parent=39 // pred_check_branch
          %281 = sbr.rel (%p279) target = $region52
        $region51: #{tpu_custom_call.1} parent=39 // pred_region
          %282 = dma.done [#allocation6], 6144
        $region52: #{tpu_custom_call.1} parent=39 // pred_fallthru
          _
        %s283 = sand.u32 %s33, 1
        %s284 = scalar_lea.sflag [#allocation3], %s283
        %s285 = sand.u32 %s33, 1
        %s286 = smul.addr %s285, 128
        %s287 = scalar_lea.vmem [#allocation2], %s286
        %p288 = pneg %p46
        %p289 = pneg %p43
        %s290 = sand.u32 %s25, 1
        %s291 = scalar_lea.sflag [#allocation6], %s290
        %s292 = sand.u32 %s67, 1
        %s293 = smul.addr %s292, 16
        %s294 = scalar_lea.vmem [#allocation5], %s293
        %p295 = pneg %p80
        %p296 = pneg %p77
        %p297 = pneg %p101
        %p298 = pneg %p98
        %p299 = pneg %p122
        %p300 = pneg %p119
        %p301 = pneg %p143
        %p302 = pneg %p140
        %p303 = pneg %p169
        %p304 = pneg %p166
        %s305 = sand.u32 %s156, 1
        %s306 = scalar_lea.sflag [#allocation4], %s305
        %s307 = sand.u32 %s156, 1
        %s308 = smul.addr %s307, 64
        %s309 = scalar_lea.vmem [#allocation8], %s308
        %s310 = smul.u32 8, %s25
        %s311 = smul.u32 %s25, 8
        %s312 = ssub.s32 %s311, 1
        %p313 = scmp.gt.s32.totalorder %s312, 0
        %s314 = scalar_select %p313, %s312, 0
        %s315 = smul.u32 8, %s25
        %v316 = vld [vmem:[%s265] sm:$0xff]
        %v317 = vld [vmem:[%s265 + $0x8] sm:$0xff]
        %v318 = vld [vmem:[%s265 + $0x10] sm:$0xff]
        %v319 = vld [vmem:[%s265 + $0x18] sm:$0xff]
        %v320 = vld [vmem:[%s265 + $0x20] sm:$0xff]
        %v321 = vld [vmem:[%s265 + $0x28] sm:$0xff]
        %v322 = vld [vmem:[%s265 + $0x30] sm:$0xff]
        %v323 = vld [vmem:[%s265 + $0x38] sm:$0xff]
        %v324 = vld [vmem:[%s265 + $0x40] sm:$0xff]
        %v325 = vld [vmem:[%s265 + $0x48] sm:$0xff]
        %v326 = vld [vmem:[%s265 + $0x50] sm:$0xff]
        %v327 = vld [vmem:[%s265 + $0x58] sm:$0xff]
        %v328 = vld [vmem:[%s265 + $0x60] sm:$0xff]
        %v329 = vld [vmem:[%s265 + $0x68] sm:$0xff]
        %v330 = vld [vmem:[%s265 + $0x70] sm:$0xff]
        %v331 = vld [vmem:[%s265 + $0x78] sm:$0xff]
        %s332 = scalar_lea.vmem %s274, 8 [#allocation5]
        %v333 = vld [vmem:[%s332] sm:$0xff]
        %p334 = scmp.gt.s32.totalorder %s25, 0
        %s335 = scalar_select %p334, 1, 0
        %s336 = scvt.s32.f32 %s335
        %v337 = vstv %s336
        %v338 = vmul.f32 %v333, %v337
        %v339 = vld [vmem:[#allocation7] sm:$0xff]
        %v340 = vld [vmem:[#allocation7 + $0x8] sm:$0xff]
        %v341 = vld [vmem:[#allocation7 + $0x10] sm:$0xff]
        %v342 = vld [vmem:[#allocation7 + $0x18] sm:$0xff]
        %v343 = vld [vmem:[#allocation7 + $0x20] sm:$0xff]
        %v344 = vld [vmem:[#allocation7 + $0x28] sm:$0xff]
        %v345 = vld [vmem:[#allocation7 + $0x30] sm:$0xff]
        %v346 = vld [vmem:[#allocation7 + $0x38] sm:$0xff]
        %v347 = vld [vmem:[#allocation7 + $0x40] sm:$0xff]
        %v348 = vld [vmem:[#allocation7 + $0x48] sm:$0xff]
        %v349 = vld [vmem:[#allocation7 + $0x50] sm:$0xff]
        %v350 = vld [vmem:[#allocation7 + $0x58] sm:$0xff]
        %v351 = vld [vmem:[#allocation7 + $0x60] sm:$0xff]
        %v352 = vld [vmem:[#allocation7 + $0x68] sm:$0xff]
        %v353 = vld [vmem:[#allocation7 + $0x70] sm:$0xff]
        %v354 = vld [vmem:[#allocation7 + $0x78] sm:$0xff]
        %s355 = scalar_lea.vmem [#allocation7], 128
        %v356 = vld [vmem:[%s355] sm:$0xff]
        %v357 = vld [vmem:[%s355 + $0x8] sm:$0xff]
        %v358 = vld [vmem:[%s355 + $0x10] sm:$0xff]
        %v359 = vld [vmem:[%s355 + $0x18] sm:$0xff]
        %v360 = vld [vmem:[%s355 + $0x20] sm:$0xff]
        %v361 = vld [vmem:[%s355 + $0x28] sm:$0xff]
        %v362 = vld [vmem:[%s355 + $0x30] sm:$0xff]
        %v363 = vld [vmem:[%s355 + $0x38] sm:$0xff]
        %v364 = vld [vmem:[%s355 + $0x40] sm:$0xff]
        %v365 = vld [vmem:[%s355 + $0x48] sm:$0xff]
        %v366 = vld [vmem:[%s355 + $0x50] sm:$0xff]
        %v367 = vld [vmem:[%s355 + $0x58] sm:$0xff]
        %v368 = vld [vmem:[%s355 + $0x60] sm:$0xff]
        %v369 = vld [vmem:[%s355 + $0x68] sm:$0xff]
        %v370 = vld [vmem:[%s355 + $0x70] sm:$0xff]
        %v371 = vld [vmem:[%s355 + $0x78] sm:$0xff]
        %s372 = scalar_lea.vmem [#allocation7], 256
        %v373 = vld [vmem:[%s372] sm:$0xff]
        %v374 = vld [vmem:[%s372 + $0x8] sm:$0xff]
        %v375 = vld [vmem:[%s372 + $0x10] sm:$0xff]
        %v376 = vld [vmem:[%s372 + $0x18] sm:$0xff]
        %v377 = vld [vmem:[%s372 + $0x20] sm:$0xff]
        %v378 = vld [vmem:[%s372 + $0x28] sm:$0xff]
        %v379 = vld [vmem:[%s372 + $0x30] sm:$0xff]
        %v380 = vld [vmem:[%s372 + $0x38] sm:$0xff]
        %v381 = vld [vmem:[%s372 + $0x40] sm:$0xff]
        %v382 = vld [vmem:[%s372 + $0x48] sm:$0xff]
        %v383 = vld [vmem:[%s372 + $0x50] sm:$0xff]
        %v384 = vld [vmem:[%s372 + $0x58] sm:$0xff]
        %v385 = vld [vmem:[%s372 + $0x60] sm:$0xff]
        %v386 = vld [vmem:[%s372 + $0x68] sm:$0xff]
        %v387 = vld [vmem:[%s372 + $0x70] sm:$0xff]
        %v388 = vld [vmem:[%s372 + $0x78] sm:$0xff]
        %389 = vmatprep.subr.mxu0 0.0
        %v390 = vand.u32 %v388, 4294901760
        %391 = vmatpush1.msra.mxu0 %v390
        %392 = vmatprep.subr.mxu0 0.0
        %v393 = vand.u32 %v387, 4294901760
        %394 = vmatpush1.msra.mxu0 %v393
        %395 = vmatprep.subr.mxu0 0.0
        %v396 = vand.u32 %v386, 4294901760
        %397 = vmatpush1.msra.mxu0 %v396
        %398 = vmatprep.subr.mxu0 0.0
        %v399 = vand.u32 %v385, 4294901760
        %400 = vmatpush1.msra.mxu0 %v399
        %401 = vmatprep.subr.mxu0 0.0
        %v402 = vand.u32 %v384, 4294901760
        %403 = vmatpush1.msra.mxu0 %v402
        %404 = vmatprep.subr.mxu0 0.0
        %v405 = vand.u32 %v383, 4294901760
        %406 = vmatpush1.msra.mxu0 %v405
        %407 = vmatprep.subr.mxu0 0.0
        %v408 = vand.u32 %v382, 4294901760
        %409 = vmatpush1.msra.mxu0 %v408
        %410 = vmatprep.subr.mxu0 0.0
        %v411 = vand.u32 %v381, 4294901760
        %412 = vmatpush1.msra.mxu0 %v411
        %413 = vmatprep.subr.mxu0 0.0
        %v414 = vand.u32 %v380, 4294901760
        %415 = vmatpush1.msra.mxu0 %v414
        %416 = vmatprep.subr.mxu0 0.0
        %v417 = vand.u32 %v379, 4294901760
        %418 = vmatpush1.msra.mxu0 %v417
        %419 = vmatprep.subr.mxu0 0.0
        %v420 = vand.u32 %v378, 4294901760
        %421 = vmatpush1.msra.mxu0 %v420
        %422 = vmatprep.subr.mxu0 0.0
        %v423 = vand.u32 %v377, 4294901760
        %424 = vmatpush1.msra.mxu0 %v423
        %425 = vmatprep.subr.mxu0 0.0
        %v426 = vand.u32 %v376, 4294901760
        %427 = vmatpush1.msra.mxu0 %v426
        %428 = vmatprep.subr.mxu0 0.0
        %v429 = vand.u32 %v375, 4294901760
        %430 = vmatpush1.msra.mxu0 %v429
        %431 = vmatprep.subr.mxu0 0.0
        %v432 = vand.u32 %v374, 4294901760
        %433 = vmatpush1.msra.mxu0 %v432
        %434 = vmatprep.subr.mxu0 0.0
        %v435 = vand.u32 %v373, 4294901760
        %436 = vmatpush1.msra.mxu0 %v435
        %437 = vmatprep.subr.mxu0 0.0
        %438 = vmatpush2.msra.mxu0 0.0
        %439 = vmatprep.subr.mxu0 0.0
        %440 = vmatpush2.msra.mxu0 0.0
        %441 = vmatprep.subr.mxu0 0.0
        %442 = vmatpush2.msra.mxu0 0.0
        %443 = vmatprep.subr.mxu0 0.0
        %444 = vmatpush2.msra.mxu0 0.0
        %445 = vmatprep.subr.mxu0 0.0
        %446 = vmatpush2.msra.mxu0 0.0
        %447 = vmatprep.subr.mxu0 0.0
        %448 = vmatpush2.msra.mxu0 0.0
        %449 = vmatprep.subr.mxu0 0.0
        %450 = vmatpush2.msra.mxu0 0.0
        %451 = vmatprep.subr.mxu0 0.0
        %452 = vmatpush2.msra.mxu0 0.0
        %453 = vmatprep.subr.mxu0 0.0
        %454 = vmatpush2.msra.mxu0 0.0
        %455 = vmatprep.subr.mxu0 0.0
        %456 = vmatpush2.msra.mxu0 0.0
        %457 = vmatprep.subr.mxu0 0.0
        %458 = vmatpush2.msra.mxu0 0.0
        %459 = vmatprep.subr.mxu0 0.0
        %460 = vmatpush2.msra.mxu0 0.0
        %461 = vmatprep.subr.mxu0 0.0
        %462 = vmatpush2.msra.mxu0 0.0
        %463 = vmatprep.subr.mxu0 0.0
        %464 = vmatpush2.msra.mxu0 0.0
        %465 = vmatprep.subr.mxu0 0.0
        %466 = vmatpush2.msra.mxu0 0.0
        %467 = vmatprep.subr.mxu0 0.0
        %468 = vmatpush2.msra.mxu0 0.0
        %469 = vmatprep.mubr.f32.mxu0 0.0
        %v470 = vand.u32 %v317, 4294901760
        %v471 = vsub.f32 %v317, %v470
        %v472 = vand.u32 %v471, 4294901760
        %v473 = vsub.f32 %v471, %v472
        %v474 = vand.u32 %v473, 4294901760
        %475 = vmatmul.mubr.f32.gmra.mxu0 %v474
        %v476 = vpop.f32.mrf.mxu0
        %v477 = vadd.f32 0.0, %v476
        %v478 = vpop.f32.mrf.mxu0
        %479 = vmatprep.mubr.f32.mxu0 0.0
        %v480 = vand.u32 %v319, 4294901760
        %v481 = vsub.f32 %v319, %v480
        %v482 = vand.u32 %v481, 4294901760
        %v483 = vsub.f32 %v481, %v482
        %v484 = vand.u32 %v483, 4294901760
        %485 = vmatmul.mubr.f32.gmra.mxu0 %v484
        %v486 = vpop.f32.mrf.mxu0
        %v487 = vadd.f32 0.0, %v486
        %v488 = vpop.f32.mrf.mxu0
        %489 = vmatprep.mubr.f32.mxu0 0.0
        %v490 = vand.u32 %v321, 4294901760
        %v491 = vsub.f32 %v321, %v490
        %v492 = vand.u32 %v491, 4294901760
        %v493 = vsub.f32 %v491, %v492
        %v494 = vand.u32 %v493, 4294901760
        %495 = vmatmul.mubr.f32.gmra.mxu0 %v494
        %v496 = vpop.f32.mrf.mxu0
        %v497 = vadd.f32 0.0, %v496
        %v498 = vpop.f32.mrf.mxu0
        %499 = vmatprep.mubr.f32.mxu0 0.0
        %v500 = vand.u32 %v323, 4294901760
        %v501 = vsub.f32 %v323, %v500
        %v502 = vand.u32 %v501, 4294901760
        %v503 = vsub.f32 %v501, %v502
        %v504 = vand.u32 %v503, 4294901760
        %505 = vmatmul.mubr.f32.gmra.mxu0 %v504
        %v506 = vpop.f32.mrf.mxu0
        %v507 = vadd.f32 0.0, %v506
        %v508 = vpop.f32.mrf.mxu0
        %509 = vmatprep.mubr.f32.mxu0 0.0
        %v510 = vand.u32 %v325, 4294901760
        %v511 = vsub.f32 %v325, %v510
        %v512 = vand.u32 %v511, 4294901760
        %v513 = vsub.f32 %v511, %v512
        %v514 = vand.u32 %v513, 4294901760
        %515 = vmatmul.mubr.f32.gmra.mxu0 %v514
        %v516 = vpop.f32.mrf.mxu0
        %v517 = vadd.f32 0.0, %v516
        %v518 = vpop.f32.mrf.mxu0
        %519 = vmatprep.mubr.f32.mxu0 0.0
        %v520 = vand.u32 %v327, 4294901760
        %v521 = vsub.f32 %v327, %v520
        %v522 = vand.u32 %v521, 4294901760
        %v523 = vsub.f32 %v521, %v522
        %v524 = vand.u32 %v523, 4294901760
        %525 = vmatmul.mubr.f32.gmra.mxu0 %v524
        %v526 = vpop.f32.mrf.mxu0
        %v527 = vadd.f32 0.0, %v526
        %v528 = vpop.f32.mrf.mxu0
        %529 = vmatprep.mubr.f32.mxu0 0.0
        %v530 = vand.u32 %v329, 4294901760
        %v531 = vsub.f32 %v329, %v530
        %v532 = vand.u32 %v531, 4294901760
        %v533 = vsub.f32 %v531, %v532
        %v534 = vand.u32 %v533, 4294901760
        %535 = vmatmul.mubr.f32.gmra.mxu0 %v534
        %v536 = vpop.f32.mrf.mxu0
        %v537 = vadd.f32 0.0, %v536
        %v538 = vpop.f32.mrf.mxu0
        %539 = vmatprep.mubr.f32.mxu0 0.0
        %v540 = vand.u32 %v331, 4294901760
        %v541 = vsub.f32 %v331, %v540
        %v542 = vand.u32 %v541, 4294901760
        %v543 = vsub.f32 %v541, %v542
        %v544 = vand.u32 %v543, 4294901760
        %545 = vmatmul.mubr.f32.gmra.mxu0 %v544
        %v546 = vpop.f32.mrf.mxu0
        %v547 = vadd.f32 0.0, %v546
        %v548 = vpop.f32.mrf.mxu0
        %549 = vdwg.mxu0
        %550 = vmatprep.subr.mxu0 0.0
        %v551 = vand.u32 %v388, 4294901760
        %v552 = vsub.f32 %v388, %v551
        %v553 = vand.u32 %v552, 4294901760
        %v554 = vsub.f32 %v552, %v553
        %v555 = vand.u32 %v554, 4294901760
        %556 = vmatpush1.msra.mxu0 %v555
        %557 = vmatprep.subr.mxu0 0.0
        %v558 = vand.u32 %v387, 4294901760
        %v559 = vsub.f32 %v387, %v558
        %v560 = vand.u32 %v559, 4294901760
        %v561 = vsub.f32 %v559, %v560
        %v562 = vand.u32 %v561, 4294901760
        %563 = vmatpush1.msra.mxu0 %v562
        %564 = vmatprep.subr.mxu0 0.0
        %v565 = vand.u32 %v386, 4294901760
        %v566 = vsub.f32 %v386, %v565
        %v567 = vand.u32 %v566, 4294901760
        %v568 = vsub.f32 %v566, %v567
        %v569 = vand.u32 %v568, 4294901760
        %570 = vmatpush1.msra.mxu0 %v569
        %571 = vmatprep.subr.mxu0 0.0
        %v572 = vand.u32 %v385, 4294901760
        %v573 = vsub.f32 %v385, %v572
        %v574 = vand.u32 %v573, 4294901760
        %v575 = vsub.f32 %v573, %v574
        %v576 = vand.u32 %v575, 4294901760
        %577 = vmatpush1.msra.mxu0 %v576
        %578 = vmatprep.subr.mxu0 0.0
        %v579 = vand.u32 %v384, 4294901760
        %v580 = vsub.f32 %v384, %v579
        %v581 = vand.u32 %v580, 4294901760
        %v582 = vsub.f32 %v580, %v581
        %v583 = vand.u32 %v582, 4294901760
        %584 = vmatpush1.msra.mxu0 %v583
        %585 = vmatprep.subr.mxu0 0.0
        %v586 = vand.u32 %v383, 4294901760
        %v587 = vsub.f32 %v383, %v586
        %v588 = vand.u32 %v587, 4294901760
        %v589 = vsub.f32 %v587, %v588
        %v590 = vand.u32 %v589, 4294901760
        %591 = vmatpush1.msra.mxu0 %v590
        %592 = vmatprep.subr.mxu0 0.0
        %v593 = vand.u32 %v382, 4294901760
        %v594 = vsub.f32 %v382, %v593
        %v595 = vand.u32 %v594, 4294901760
        %v596 = vsub.f32 %v594, %v595
        %v597 = vand.u32 %v596, 4294901760
        %598 = vmatpush1.msra.mxu0 %v597
        %599 = vmatprep.subr.mxu0 0.0
        %v600 = vand.u32 %v381, 4294901760
        %v601 = vsub.f32 %v381, %v600
        %v602 = vand.u32 %v601, 4294901760
        %v603 = vsub.f32 %v601, %v602
        %v604 = vand.u32 %v603, 4294901760
        %605 = vmatpush1.msra.mxu0 %v604
        %606 = vmatprep.subr.mxu0 0.0
        %v607 = vand.u32 %v380, 4294901760
        %v608 = vsub.f32 %v380, %v607
        %v609 = vand.u32 %v608, 4294901760
        %v610 = vsub.f32 %v608, %v609
        %v611 = vand.u32 %v610, 4294901760
        %612 = vmatpush1.msra.mxu0 %v611
        %613 = vmatprep.subr.mxu0 0.0
        %v614 = vand.u32 %v379, 4294901760
        %v615 = vsub.f32 %v379, %v614
        %v616 = vand.u32 %v615, 4294901760
        %v617 = vsub.f32 %v615, %v616
        %v618 = vand.u32 %v617, 4294901760
        %619 = vmatpush1.msra.mxu0 %v618
        %620 = vmatprep.subr.mxu0 0.0
        %v621 = vand.u32 %v378, 4294901760
        %v622 = vsub.f32 %v378, %v621
        %v623 = vand.u32 %v622, 4294901760
        %v624 = vsub.f32 %v622, %v623
        %v625 = vand.u32 %v624, 4294901760
        %626 = vmatpush1.msra.mxu0 %v625
        %627 = vmatprep.subr.mxu0 0.0
        %v628 = vand.u32 %v377, 4294901760
        %v629 = vsub.f32 %v377, %v628
        %v630 = vand.u32 %v629, 4294901760
        %v631 = vsub.f32 %v629, %v630
        %v632 = vand.u32 %v631, 4294901760
        %633 = vmatpush1.msra.mxu0 %v632
        %634 = vmatprep.subr.mxu0 0.0
        %v635 = vand.u32 %v376, 4294901760
        %v636 = vsub.f32 %v376, %v635
        %v637 = vand.u32 %v636, 4294901760
        %v638 = vsub.f32 %v636, %v637
        %v639 = vand.u32 %v638, 4294901760
        %640 = vmatpush1.msra.mxu0 %v639
        %641 = vmatprep.subr.mxu0 0.0
        %v642 = vand.u32 %v375, 4294901760
        %v643 = vsub.f32 %v375, %v642
        %v644 = vand.u32 %v643, 4294901760
        %v645 = vsub.f32 %v643, %v644
        %v646 = vand.u32 %v645, 4294901760
        %647 = vmatpush1.msra.mxu0 %v646
        %648 = vmatprep.subr.mxu0 0.0
        %v649 = vand.u32 %v374, 4294901760
        %v650 = vsub.f32 %v374, %v649
        %v651 = vand.u32 %v650, 4294901760
        %v652 = vsub.f32 %v650, %v651
        %v653 = vand.u32 %v652, 4294901760
        %654 = vmatpush1.msra.mxu0 %v653
        %655 = vmatprep.subr.mxu0 0.0
        %v656 = vand.u32 %v373, 4294901760
        %v657 = vsub.f32 %v373, %v656
        %v658 = vand.u32 %v657, 4294901760
        %v659 = vsub.f32 %v657, %v658
        %v660 = vand.u32 %v659, 4294901760
        %661 = vmatpush1.msra.mxu0 %v660
        %662 = vmatprep.subr.mxu0 0.0
        %663 = vmatpush2.msra.mxu0 0.0
        %664 = vmatprep.subr.mxu0 0.0
        %665 = vmatpush2.msra.mxu0 0.0
        %666 = vmatprep.subr.mxu0 0.0
        %667 = vmatpush2.msra.mxu0 0.0
        %668 = vmatprep.subr.mxu0 0.0
        %669 = vmatpush2.msra.mxu0 0.0
        %670 = vmatprep.subr.mxu0 0.0
        %671 = vmatpush2.msra.mxu0 0.0
        %672 = vmatprep.subr.mxu0 0.0
        %673 = vmatpush2.msra.mxu0 0.0
        %674 = vmatprep.subr.mxu0 0.0
        %675 = vmatpush2.msra.mxu0 0.0
        %676 = vmatprep.subr.mxu0 0.0
        %677 = vmatpush2.msra.mxu0 0.0
        %678 = vmatprep.subr.mxu0 0.0
        %679 = vmatpush2.msra.mxu0 0.0
        %680 = vmatprep.subr.mxu0 0.0
        %681 = vmatpush2.msra.mxu0 0.0
        %682 = vmatprep.subr.mxu0 0.0
        %683 = vmatpush2.msra.mxu0 0.0
        %684 = vmatprep.subr.mxu0 0.0
        %685 = vmatpush2.msra.mxu0 0.0
        %686 = vmatprep.subr.mxu0 0.0
        %687 = vmatpush2.msra.mxu0 0.0
        %688 = vmatprep.subr.mxu0 0.0
        %689 = vmatpush2.msra.mxu0 0.0
        %690 = vmatprep.subr.mxu0 0.0
        %691 = vmatpush2.msra.mxu0 0.0
        %692 = vmatprep.subr.mxu0 0.0
        %693 = vmatpush2.msra.mxu0 0.0
        %694 = vmatprep.mubr.f32.mxu0 0.0
        %v695 = vand.u32 %v317, 4294901760
        %696 = vmatmul.mubr.f32.gmra.mxu0 %v695
        %v697 = vpop.f32.mrf.mxu0
        %v698 = vadd.f32 %v477, %v697
        %v699 = vpop.f32.mrf.mxu0
        %700 = vmatprep.mubr.f32.mxu0 0.0
        %v701 = vand.u32 %v319, 4294901760
        %702 = vmatmul.mubr.f32.gmra.mxu0 %v701
        %v703 = vpop.f32.mrf.mxu0
        %v704 = vadd.f32 %v487, %v703
        %v705 = vpop.f32.mrf.mxu0
        %706 = vmatprep.mubr.f32.mxu0 0.0
        %v707 = vand.u32 %v321, 4294901760
        %708 = vmatmul.mubr.f32.gmra.mxu0 %v707
        %v709 = vpop.f32.mrf.mxu0
        %v710 = vadd.f32 %v497, %v709
        %v711 = vpop.f32.mrf.mxu0
        %712 = vmatprep.mubr.f32.mxu0 0.0
        %v713 = vand.u32 %v323, 4294901760
        %714 = vmatmul.mubr.f32.gmra.mxu0 %v713
        %v715 = vpop.f32.mrf.mxu0
        %v716 = vadd.f32 %v507, %v715
        %v717 = vpop.f32.mrf.mxu0
        %718 = vmatprep.mubr.f32.mxu0 0.0
        %v719 = vand.u32 %v325, 4294901760
        %720 = vmatmul.mubr.f32.gmra.mxu0 %v719
        %v721 = vpop.f32.mrf.mxu0
        %v722 = vadd.f32 %v517, %v721
        %v723 = vpop.f32.mrf.mxu0
        %724 = vmatprep.mubr.f32.mxu0 0.0
        %v725 = vand.u32 %v327, 4294901760
        %726 = vmatmul.mubr.f32.gmra.mxu0 %v725
        %v727 = vpop.f32.mrf.mxu0
        %v728 = vadd.f32 %v527, %v727
        %v729 = vpop.f32.mrf.mxu0
        %730 = vmatprep.mubr.f32.mxu0 0.0
        %v731 = vand.u32 %v329, 4294901760
        %732 = vmatmul.mubr.f32.gmra.mxu0 %v731
        %v733 = vpop.f32.mrf.mxu0
        %v734 = vadd.f32 %v537, %v733
        %v735 = vpop.f32.mrf.mxu0
        %736 = vmatprep.mubr.f32.mxu0 0.0
        %v737 = vand.u32 %v331, 4294901760
        %738 = vmatmul.mubr.f32.gmra.mxu0 %v737
        %v739 = vpop.f32.mrf.mxu0
        %v740 = vadd.f32 %v547, %v739
        %v741 = vpop.f32.mrf.mxu0
        %742 = vdwg.mxu0
        %743 = vmatprep.subr.mxu0 0.0
        %v744 = vand.u32 %v388, 4294901760
        %v745 = vsub.f32 %v388, %v744
        %746 = vmatpush1.msra.mxu0 %v745
        %747 = vmatprep.subr.mxu0 0.0
        %v748 = vand.u32 %v387, 4294901760
        %v749 = vsub.f32 %v387, %v748
        %750 = vmatpush1.msra.mxu0 %v749
        %751 = vmatprep.subr.mxu0 0.0
        %v752 = vand.u32 %v386, 4294901760
        %v753 = vsub.f32 %v386, %v752
        %754 = vmatpush1.msra.mxu0 %v753
        %755 = vmatprep.subr.mxu0 0.0
        %v756 = vand.u32 %v385, 4294901760
        %v757 = vsub.f32 %v385, %v756
        %758 = vmatpush1.msra.mxu0 %v757
        %759 = vmatprep.subr.mxu0 0.0
        %v760 = vand.u32 %v384, 4294901760
        %v761 = vsub.f32 %v384, %v760
        %762 = vmatpush1.msra.mxu0 %v761
        %763 = vmatprep.subr.mxu0 0.0
        %v764 = vand.u32 %v383, 4294901760
        %v765 = vsub.f32 %v383, %v764
        %766 = vmatpush1.msra.mxu0 %v765
        %767 = vmatprep.subr.mxu0 0.0
        %v768 = vand.u32 %v382, 4294901760
        %v769 = vsub.f32 %v382, %v768
        %770 = vmatpush1.msra.mxu0 %v769
        %771 = vmatprep.subr.mxu0 0.0
        %v772 = vand.u32 %v381, 4294901760
        %v773 = vsub.f32 %v381, %v772
        %774 = vmatpush1.msra.mxu0 %v773
        %775 = vmatprep.subr.mxu0 0.0
        %v776 = vand.u32 %v380, 4294901760
        %v777 = vsub.f32 %v380, %v776
        %778 = vmatpush1.msra.mxu0 %v777
        %779 = vmatprep.subr.mxu0 0.0
        %v780 = vand.u32 %v379, 4294901760
        %v781 = vsub.f32 %v379, %v780
        %782 = vmatpush1.msra.mxu0 %v781
        %783 = vmatprep.subr.mxu0 0.0
        %v784 = vand.u32 %v378, 4294901760
        %v785 = vsub.f32 %v378, %v784
        %786 = vmatpush1.msra.mxu0 %v785
        %787 = vmatprep.subr.mxu0 0.0
        %v788 = vand.u32 %v377, 4294901760
        %v789 = vsub.f32 %v377, %v788
        %790 = vmatpush1.msra.mxu0 %v789
        %791 = vmatprep.subr.mxu0 0.0
        %v792 = vand.u32 %v376, 4294901760
        %v793 = vsub.f32 %v376, %v792
        %794 = vmatpush1.msra.mxu0 %v793
        %795 = vmatprep.subr.mxu0 0.0
        %v796 = vand.u32 %v375, 4294901760
        %v797 = vsub.f32 %v375, %v796
        %798 = vmatpush1.msra.mxu0 %v797
        %799 = vmatprep.subr.mxu0 0.0
        %v800 = vand.u32 %v374, 4294901760
        %v801 = vsub.f32 %v374, %v800
        %802 = vmatpush1.msra.mxu0 %v801
        %803 = vmatprep.subr.mxu0 0.0
        %v804 = vand.u32 %v373, 4294901760
        %v805 = vsub.f32 %v373, %v804
        %806 = vmatpush1.msra.mxu0 %v805
        %807 = vmatprep.subr.mxu0 0.0
        %808 = vmatpush2.msra.mxu0 0.0
        %809 = vmatprep.subr.mxu0 0.0
        %810 = vmatpush2.msra.mxu0 0.0
        %811 = vmatprep.subr.mxu0 0.0
        %812 = vmatpush2.msra.mxu0 0.0
        %813 = vmatprep.subr.mxu0 0.0
        %814 = vmatpush2.msra.mxu0 0.0
        %815 = vmatprep.subr.mxu0 0.0
        %816 = vmatpush2.msra.mxu0 0.0
        %817 = vmatprep.subr.mxu0 0.0
        %818 = vmatpush2.msra.mxu0 0.0
        %819 = vmatprep.subr.mxu0 0.0
        %820 = vmatpush2.msra.mxu0 0.0
        %821 = vmatprep.subr.mxu0 0.0
        %822 = vmatpush2.msra.mxu0 0.0
        %823 = vmatprep.subr.mxu0 0.0
        %824 = vmatpush2.msra.mxu0 0.0
        %825 = vmatprep.subr.mxu0 0.0
        %826 = vmatpush2.msra.mxu0 0.0
        %827 = vmatprep.subr.mxu0 0.0
        %828 = vmatpush2.msra.mxu0 0.0
        %829 = vmatprep.subr.mxu0 0.0
        %830 = vmatpush2.msra.mxu0 0.0
        %831 = vmatprep.subr.mxu0 0.0
        %832 = vmatpush2.msra.mxu0 0.0
        %833 = vmatprep.subr.mxu0 0.0
        %834 = vmatpush2.msra.mxu0 0.0
        %835 = vmatprep.subr.mxu0 0.0
        %836 = vmatpush2.msra.mxu0 0.0
        %837 = vmatprep.subr.mxu0 0.0
        %838 = vmatpush2.msra.mxu0 0.0
        %839 = vmatprep.mubr.f32.mxu0 0.0
        %v840 = vand.u32 %v317, 4294901760
        %v841 = vsub.f32 %v317, %v840
        %842 = vmatmul.mubr.f32.gmra.mxu0 %v841
        %v843 = vpop.f32.mrf.mxu0
        %v844 = vadd.f32 %v698, %v843
        %v845 = vpop.f32.mrf.mxu0
        %846 = vmatprep.mubr.f32.mxu0 0.0
        %v847 = vand.u32 %v319, 4294901760
        %v848 = vsub.f32 %v319, %v847
        %849 = vmatmul.mubr.f32.gmra.mxu0 %v848
        %v850 = vpop.f32.mrf.mxu0
        %v851 = vadd.f32 %v704, %v850
        %v852 = vpop.f32.mrf.mxu0
        %853 = vmatprep.mubr.f32.mxu0 0.0
        %v854 = vand.u32 %v321, 4294901760
        %v855 = vsub.f32 %v321, %v854
        %856 = vmatmul.mubr.f32.gmra.mxu0 %v855
        %v857 = vpop.f32.mrf.mxu0
        %v858 = vadd.f32 %v710, %v857
        %v859 = vpop.f32.mrf.mxu0
        %860 = vmatprep.mubr.f32.mxu0 0.0
        %v861 = vand.u32 %v323, 4294901760
        %v862 = vsub.f32 %v323, %v861
        %863 = vmatmul.mubr.f32.gmra.mxu0 %v862
        %v864 = vpop.f32.mrf.mxu0
        %v865 = vadd.f32 %v716, %v864
        %v866 = vpop.f32.mrf.mxu0
        %867 = vmatprep.mubr.f32.mxu0 0.0
        %v868 = vand.u32 %v325, 4294901760
        %v869 = vsub.f32 %v325, %v868
        %870 = vmatmul.mubr.f32.gmra.mxu0 %v869
        %v871 = vpop.f32.mrf.mxu0
        %v872 = vadd.f32 %v722, %v871
        %v873 = vpop.f32.mrf.mxu0
        %874 = vmatprep.mubr.f32.mxu0 0.0
        %v875 = vand.u32 %v327, 4294901760
        %v876 = vsub.f32 %v327, %v875
        %877 = vmatmul.mubr.f32.gmra.mxu0 %v876
        %v878 = vpop.f32.mrf.mxu0
        %v879 = vadd.f32 %v728, %v878
        %v880 = vpop.f32.mrf.mxu0
        %881 = vmatprep.mubr.f32.mxu0 0.0
        %v882 = vand.u32 %v329, 4294901760
        %v883 = vsub.f32 %v329, %v882
        %884 = vmatmul.mubr.f32.gmra.mxu0 %v883
        %v885 = vpop.f32.mrf.mxu0
        %v886 = vadd.f32 %v734, %v885
        %v887 = vpop.f32.mrf.mxu0
        %888 = vmatprep.mubr.f32.mxu0 0.0
        %v889 = vand.u32 %v331, 4294901760
        %v890 = vsub.f32 %v331, %v889
        %891 = vmatmul.mubr.f32.gmra.mxu0 %v890
        %v892 = vpop.f32.mrf.mxu0
        %v893 = vadd.f32 %v740, %v892
        %v894 = vpop.f32.mrf.mxu0
        %895 = vdwg.mxu0
        %896 = vmatprep.subr.mxu0 0.0
        %v897 = vand.u32 %v388, 4294901760
        %898 = vmatpush1.msra.mxu0 %v897
        %899 = vmatprep.subr.mxu0 0.0
        %v900 = vand.u32 %v387, 4294901760
        %901 = vmatpush1.msra.mxu0 %v900
        %902 = vmatprep.subr.mxu0 0.0
        %v903 = vand.u32 %v386, 4294901760
        %904 = vmatpush1.msra.mxu0 %v903
        %905 = vmatprep.subr.mxu0 0.0
        %v906 = vand.u32 %v385, 4294901760
        %907 = vmatpush1.msra.mxu0 %v906
        %908 = vmatprep.subr.mxu0 0.0
        %v909 = vand.u32 %v384, 4294901760
        %910 = vmatpush1.msra.mxu0 %v909
        %911 = vmatprep.subr.mxu0 0.0
        %v912 = vand.u32 %v383, 4294901760
        %913 = vmatpush1.msra.mxu0 %v912
        %914 = vmatprep.subr.mxu0 0.0
        %v915 = vand.u32 %v382, 4294901760
        %916 = vmatpush1.msra.mxu0 %v915
        %917 = vmatprep.subr.mxu0 0.0
        %v918 = vand.u32 %v381, 4294901760
        %919 = vmatpush1.msra.mxu0 %v918
        %920 = vmatprep.subr.mxu0 0.0
        %v921 = vand.u32 %v380, 4294901760
        %922 = vmatpush1.msra.mxu0 %v921
        %923 = vmatprep.subr.mxu0 0.0
        %v924 = vand.u32 %v379, 4294901760
        %925 = vmatpush1.msra.mxu0 %v924
        %926 = vmatprep.subr.mxu0 0.0
        %v927 = vand.u32 %v378, 4294901760
        %928 = vmatpush1.msra.mxu0 %v927
        %929 = vmatprep.subr.mxu0 0.0
        %v930 = vand.u32 %v377, 4294901760
        %931 = vmatpush1.msra.mxu0 %v930
        %932 = vmatprep.subr.mxu0 0.0
        %v933 = vand.u32 %v376, 4294901760
        %934 = vmatpush1.msra.mxu0 %v933
        %935 = vmatprep.subr.mxu0 0.0
        %v936 = vand.u32 %v375, 4294901760
        %937 = vmatpush1.msra.mxu0 %v936
        %938 = vmatprep.subr.mxu0 0.0
        %v939 = vand.u32 %v374, 4294901760
        %940 = vmatpush1.msra.mxu0 %v939
        %941 = vmatprep.subr.mxu0 0.0
        %v942 = vand.u32 %v373, 4294901760
        %943 = vmatpush1.msra.mxu0 %v942
        %944 = vmatprep.subr.mxu0 0.0
        %945 = vmatpush2.msra.mxu0 0.0
        %946 = vmatprep.subr.mxu0 0.0
        %947 = vmatpush2.msra.mxu0 0.0
        %948 = vmatprep.subr.mxu0 0.0
        %949 = vmatpush2.msra.mxu0 0.0
        %950 = vmatprep.subr.mxu0 0.0
        %951 = vmatpush2.msra.mxu0 0.0
        %952 = vmatprep.subr.mxu0 0.0
        %953 = vmatpush2.msra.mxu0 0.0
        %954 = vmatprep.subr.mxu0 0.0
        %955 = vmatpush2.msra.mxu0 0.0
        %956 = vmatprep.subr.mxu0 0.0
        %957 = vmatpush2.msra.mxu0 0.0
        %958 = vmatprep.subr.mxu0 0.0
        %959 = vmatpush2.msra.mxu0 0.0
        %960 = vmatprep.subr.mxu0 0.0
        %961 = vmatpush2.msra.mxu0 0.0
        %962 = vmatprep.subr.mxu0 0.0
        %963 = vmatpush2.msra.mxu0 0.0
        %964 = vmatprep.subr.mxu0 0.0
        %965 = vmatpush2.msra.mxu0 0.0
        %966 = vmatprep.subr.mxu0 0.0
        %967 = vmatpush2.msra.mxu0 0.0
        %968 = vmatprep.subr.mxu0 0.0
        %969 = vmatpush2.msra.mxu0 0.0
        %970 = vmatprep.subr.mxu0 0.0
        %971 = vmatpush2.msra.mxu0 0.0
        %972 = vmatprep.subr.mxu0 0.0
        %973 = vmatpush2.msra.mxu0 0.0
        %974 = vmatprep.subr.mxu0 0.0
        %975 = vmatpush2.msra.mxu0 0.0
        %976 = vmatprep.mubr.f32.mxu0 0.0
        %v977 = vand.u32 %v317, 4294901760
        %v978 = vsub.f32 %v317, %v977
        %v979 = vand.u32 %v978, 4294901760
        %980 = vmatmul.mubr.f32.gmra.mxu0 %v979
        %v981 = vpop.f32.mrf.mxu0
        %v982 = vadd.f32 %v844, %v981
        %v983 = vpop.f32.mrf.mxu0
        %984 = vmatprep.mubr.f32.mxu0 0.0
        %v985 = vand.u32 %v319, 4294901760
        %v986 = vsub.f32 %v319, %v985
        %v987 = vand.u32 %v986, 4294901760
        %988 = vmatmul.mubr.f32.gmra.mxu0 %v987
        %v989 = vpop.f32.mrf.mxu0
        %v990 = vadd.f32 %v851, %v989
        %v991 = vpop.f32.mrf.mxu0
        %992 = vmatprep.mubr.f32.mxu0 0.0
        %v993 = vand.u32 %v321, 4294901760
        %v994 = vsub.f32 %v321, %v993
        %v995 = vand.u32 %v994, 4294901760
        %996 = vmatmul.mubr.f32.gmra.mxu0 %v995
        %v997 = vpop.f32.mrf.mxu0
        %v998 = vadd.f32 %v858, %v997
        %v999 = vpop.f32.mrf.mxu0
        %1000 = vmatprep.mubr.f32.mxu0 0.0
        %v1001 = vand.u32 %v323, 4294901760
        %v1002 = vsub.f32 %v323, %v1001
        %v1003 = vand.u32 %v1002, 4294901760
        %1004 = vmatmul.mubr.f32.gmra.mxu0 %v1003
        %v1005 = vpop.f32.mrf.mxu0
        %v1006 = vadd.f32 %v865, %v1005
        %v1007 = vpop.f32.mrf.mxu0
        %1008 = vmatprep.mubr.f32.mxu0 0.0
        %v1009 = vand.u32 %v325, 4294901760
        %v1010 = vsub.f32 %v325, %v1009
        %v1011 = vand.u32 %v1010, 4294901760
        %1012 = vmatmul.mubr.f32.gmra.mxu0 %v1011
        %v1013 = vpop.f32.mrf.mxu0
        %v1014 = vadd.f32 %v872, %v1013
        %v1015 = vpop.f32.mrf.mxu0
        %1016 = vmatprep.mubr.f32.mxu0 0.0
        %v1017 = vand.u32 %v327, 4294901760
        %v1018 = vsub.f32 %v327, %v1017
        %v1019 = vand.u32 %v1018, 4294901760
        %1020 = vmatmul.mubr.f32.gmra.mxu0 %v1019
        %v1021 = vpop.f32.mrf.mxu0
        %v1022 = vadd.f32 %v879, %v1021
        %v1023 = vpop.f32.mrf.mxu0
        %1024 = vmatprep.mubr.f32.mxu0 0.0
        %v1025 = vand.u32 %v329, 4294901760
        %v1026 = vsub.f32 %v329, %v1025
        %v1027 = vand.u32 %v1026, 4294901760
        %1028 = vmatmul.mubr.f32.gmra.mxu0 %v1027
        %v1029 = vpop.f32.mrf.mxu0
        %v1030 = vadd.f32 %v886, %v1029
        %v1031 = vpop.f32.mrf.mxu0
        %1032 = vmatprep.mubr.f32.mxu0 0.0
        %v1033 = vand.u32 %v331, 4294901760
        %v1034 = vsub.f32 %v331, %v1033
        %v1035 = vand.u32 %v1034, 4294901760
        %1036 = vmatmul.mubr.f32.gmra.mxu0 %v1035
        %v1037 = vpop.f32.mrf.mxu0
        %v1038 = vadd.f32 %v893, %v1037
        %v1039 = vpop.f32.mrf.mxu0
        %1040 = vdwg.mxu0
        %1041 = vmatprep.subr.mxu0 0.0
        %v1042 = vand.u32 %v388, 4294901760
        %v1043 = vsub.f32 %v388, %v1042
        %v1044 = vand.u32 %v1043, 4294901760
        %1045 = vmatpush1.msra.mxu0 %v1044
        %1046 = vmatprep.subr.mxu0 0.0
        %v1047 = vand.u32 %v387, 4294901760
        %v1048 = vsub.f32 %v387, %v1047
        %v1049 = vand.u32 %v1048, 4294901760
        %1050 = vmatpush1.msra.mxu0 %v1049
        %1051 = vmatprep.subr.mxu0 0.0
        %v1052 = vand.u32 %v386, 4294901760
        %v1053 = vsub.f32 %v386, %v1052
        %v1054 = vand.u32 %v1053, 4294901760
        %1055 = vmatpush1.msra.mxu0 %v1054
        %1056 = vmatprep.subr.mxu0 0.0
        %v1057 = vand.u32 %v385, 4294901760
        %v1058 = vsub.f32 %v385, %v1057
        %v1059 = vand.u32 %v1058, 4294901760
        %1060 = vmatpush1.msra.mxu0 %v1059
        %1061 = vmatprep.subr.mxu0 0.0
        %v1062 = vand.u32 %v384, 4294901760
        %v1063 = vsub.f32 %v384, %v1062
        %v1064 = vand.u32 %v1063, 4294901760
        %1065 = vmatpush1.msra.mxu0 %v1064
        %1066 = vmatprep.subr.mxu0 0.0
        %v1067 = vand.u32 %v383, 4294901760
        %v1068 = vsub.f32 %v383, %v1067
        %v1069 = vand.u32 %v1068, 4294901760
        %1070 = vmatpush1.msra.mxu0 %v1069
        %1071 = vmatprep.subr.mxu0 0.0
        %v1072 = vand.u32 %v382, 4294901760
        %v1073 = vsub.f32 %v382, %v1072
        %v1074 = vand.u32 %v1073, 4294901760
        %1075 = vmatpush1.msra.mxu0 %v1074
        %1076 = vmatprep.subr.mxu0 0.0
        %v1077 = vand.u32 %v381, 4294901760
        %v1078 = vsub.f32 %v381, %v1077
        %v1079 = vand.u32 %v1078, 4294901760
        %1080 = vmatpush1.msra.mxu0 %v1079
        %1081 = vmatprep.subr.mxu0 0.0
        %v1082 = vand.u32 %v380, 4294901760
        %v1083 = vsub.f32 %v380, %v1082
        %v1084 = vand.u32 %v1083, 4294901760
        %1085 = vmatpush1.msra.mxu0 %v1084
        %1086 = vmatprep.subr.mxu0 0.0
        %v1087 = vand.u32 %v379, 4294901760
        %v1088 = vsub.f32 %v379, %v1087
        %v1089 = vand.u32 %v1088, 4294901760
        %1090 = vmatpush1.msra.mxu0 %v1089
        %1091 = vmatprep.subr.mxu0 0.0
        %v1092 = vand.u32 %v378, 4294901760
        %v1093 = vsub.f32 %v378, %v1092
        %v1094 = vand.u32 %v1093, 4294901760
        %1095 = vmatpush1.msra.mxu0 %v1094
        %1096 = vmatprep.subr.mxu0 0.0
        %v1097 = vand.u32 %v377, 4294901760
        %v1098 = vsub.f32 %v377, %v1097
        %v1099 = vand.u32 %v1098, 4294901760
        %1100 = vmatpush1.msra.mxu0 %v1099
        %1101 = vmatprep.subr.mxu0 0.0
        %v1102 = vand.u32 %v376, 4294901760
        %v1103 = vsub.f32 %v376, %v1102
        %v1104 = vand.u32 %v1103, 4294901760
        %1105 = vmatpush1.msra.mxu0 %v1104
        %1106 = vmatprep.subr.mxu0 0.0
        %v1107 = vand.u32 %v375, 4294901760
        %v1108 = vsub.f32 %v375, %v1107
        %v1109 = vand.u32 %v1108, 4294901760
        %1110 = vmatpush1.msra.mxu0 %v1109
        %1111 = vmatprep.subr.mxu0 0.0
        %v1112 = vand.u32 %v374, 4294901760
        %v1113 = vsub.f32 %v374, %v1112
        %v1114 = vand.u32 %v1113, 4294901760
        %1115 = vmatpush1.msra.mxu0 %v1114
        %1116 = vmatprep.subr.mxu0 0.0
        %v1117 = vand.u32 %v373, 4294901760
        %v1118 = vsub.f32 %v373, %v1117
        %v1119 = vand.u32 %v1118, 4294901760
        %1120 = vmatpush1.msra.mxu0 %v1119
        %1121 = vmatprep.subr.mxu0 0.0
        %1122 = vmatpush2.msra.mxu0 0.0
        %1123 = vmatprep.subr.mxu0 0.0
        %1124 = vmatpush2.msra.mxu0 0.0
        %1125 = vmatprep.subr.mxu0 0.0
        %1126 = vmatpush2.msra.mxu0 0.0
        %1127 = vmatprep.subr.mxu0 0.0
        %1128 = vmatpush2.msra.mxu0 0.0
        %1129 = vmatprep.subr.mxu0 0.0
        %1130 = vmatpush2.msra.mxu0 0.0
        %1131 = vmatprep.subr.mxu0 0.0
        %1132 = vmatpush2.msra.mxu0 0.0
        %1133 = vmatprep.subr.mxu0 0.0
        %1134 = vmatpush2.msra.mxu0 0.0
        %1135 = vmatprep.subr.mxu0 0.0
        %1136 = vmatpush2.msra.mxu0 0.0
        %1137 = vmatprep.subr.mxu0 0.0
        %1138 = vmatpush2.msra.mxu0 0.0
        %1139 = vmatprep.subr.mxu0 0.0
        %1140 = vmatpush2.msra.mxu0 0.0
        %1141 = vmatprep.subr.mxu0 0.0
        %1142 = vmatpush2.msra.mxu0 0.0
        %1143 = vmatprep.subr.mxu0 0.0
        %1144 = vmatpush2.msra.mxu0 0.0
        %1145 = vmatprep.subr.mxu0 0.0
        %1146 = vmatpush2.msra.mxu0 0.0
        %1147 = vmatprep.subr.mxu0 0.0
        %1148 = vmatpush2.msra.mxu0 0.0
        %1149 = vmatprep.subr.mxu0 0.0
        %1150 = vmatpush2.msra.mxu0 0.0
        %1151 = vmatprep.subr.mxu0 0.0
        %1152 = vmatpush2.msra.mxu0 0.0
        %1153 = vmatprep.mubr.f32.mxu0 0.0
        %v1154 = vand.u32 %v317, 4294901760
        %1155 = vmatmul.mubr.f32.gmra.mxu0 %v1154
        %v1156 = vpop.f32.mrf.mxu0
        %v1157 = vadd.f32 %v982, %v1156
        %v1158 = vpop.f32.mrf.mxu0
        %1159 = vmatprep.mubr.f32.mxu0 0.0
        %v1160 = vand.u32 %v319, 4294901760
        %1161 = vmatmul.mubr.f32.gmra.mxu0 %v1160
        %v1162 = vpop.f32.mrf.mxu0
        %v1163 = vadd.f32 %v990, %v1162
        %v1164 = vpop.f32.mrf.mxu0
        %1165 = vmatprep.mubr.f32.mxu0 0.0
        %v1166 = vand.u32 %v321, 4294901760
        %1167 = vmatmul.mubr.f32.gmra.mxu0 %v1166
        %v1168 = vpop.f32.mrf.mxu0
        %v1169 = vadd.f32 %v998, %v1168
        %v1170 = vpop.f32.mrf.mxu0
        %1171 = vmatprep.mubr.f32.mxu0 0.0
        %v1172 = vand.u32 %v323, 4294901760
        %1173 = vmatmul.mubr.f32.gmra.mxu0 %v1172
        %v1174 = vpop.f32.mrf.mxu0
        %v1175 = vadd.f32 %v1006, %v1174
        %v1176 = vpop.f32.mrf.mxu0
        %1177 = vmatprep.mubr.f32.mxu0 0.0
        %v1178 = vand.u32 %v325, 4294901760
        %1179 = vmatmul.mubr.f32.gmra.mxu0 %v1178
        %v1180 = vpop.f32.mrf.mxu0
        %v1181 = vadd.f32 %v1014, %v1180
        %v1182 = vpop.f32.mrf.mxu0
        %1183 = vmatprep.mubr.f32.mxu0 0.0
        %v1184 = vand.u32 %v327, 4294901760
        %1185 = vmatmul.mubr.f32.gmra.mxu0 %v1184
        %v1186 = vpop.f32.mrf.mxu0
        %v1187 = vadd.f32 %v1022, %v1186
        %v1188 = vpop.f32.mrf.mxu0
        %1189 = vmatprep.mubr.f32.mxu0 0.0
        %v1190 = vand.u32 %v329, 4294901760
        %1191 = vmatmul.mubr.f32.gmra.mxu0 %v1190
        %v1192 = vpop.f32.mrf.mxu0
        %v1193 = vadd.f32 %v1030, %v1192
        %v1194 = vpop.f32.mrf.mxu0
        %1195 = vmatprep.mubr.f32.mxu0 0.0
        %v1196 = vand.u32 %v331, 4294901760
        %1197 = vmatmul.mubr.f32.gmra.mxu0 %v1196
        %v1198 = vpop.f32.mrf.mxu0
        %v1199 = vadd.f32 %v1038, %v1198
        %v1200 = vpop.f32.mrf.mxu0
        %1201 = vdwg.mxu0
        %1202 = vmatprep.subr.mxu0 0.0
        %v1203 = vand.u32 %v388, 4294901760
        %1204 = vmatpush1.msra.mxu0 %v1203
        %1205 = vmatprep.subr.mxu0 0.0
        %v1206 = vand.u32 %v387, 4294901760
        %1207 = vmatpush1.msra.mxu0 %v1206
        %1208 = vmatprep.subr.mxu0 0.0
        %v1209 = vand.u32 %v386, 4294901760
        %1210 = vmatpush1.msra.mxu0 %v1209
        %1211 = vmatprep.subr.mxu0 0.0
        %v1212 = vand.u32 %v385, 4294901760
        %1213 = vmatpush1.msra.mxu0 %v1212
        %1214 = vmatprep.subr.mxu0 0.0
        %v1215 = vand.u32 %v384, 4294901760
        %1216 = vmatpush1.msra.mxu0 %v1215
        %1217 = vmatprep.subr.mxu0 0.0
        %v1218 = vand.u32 %v383, 4294901760
        %1219 = vmatpush1.msra.mxu0 %v1218
        %1220 = vmatprep.subr.mxu0 0.0
        %v1221 = vand.u32 %v382, 4294901760
        %1222 = vmatpush1.msra.mxu0 %v1221
        %1223 = vmatprep.subr.mxu0 0.0
        %v1224 = vand.u32 %v381, 4294901760
        %1225 = vmatpush1.msra.mxu0 %v1224
        %1226 = vmatprep.subr.mxu0 0.0
        %v1227 = vand.u32 %v380, 4294901760
        %1228 = vmatpush1.msra.mxu0 %v1227
        %1229 = vmatprep.subr.mxu0 0.0
        %v1230 = vand.u32 %v379, 4294901760
        %1231 = vmatpush1.msra.mxu0 %v1230
        %1232 = vmatprep.subr.mxu0 0.0
        %v1233 = vand.u32 %v378, 4294901760
        %1234 = vmatpush1.msra.mxu0 %v1233
        %1235 = vmatprep.subr.mxu0 0.0
        %v1236 = vand.u32 %v377, 4294901760
        %1237 = vmatpush1.msra.mxu0 %v1236
        %1238 = vmatprep.subr.mxu0 0.0
        %v1239 = vand.u32 %v376, 4294901760
        %1240 = vmatpush1.msra.mxu0 %v1239
        %1241 = vmatprep.subr.mxu0 0.0
        %v1242 = vand.u32 %v375, 4294901760
        %1243 = vmatpush1.msra.mxu0 %v1242
        %1244 = vmatprep.subr.mxu0 0.0
        %v1245 = vand.u32 %v374, 4294901760
        %1246 = vmatpush1.msra.mxu0 %v1245
        %1247 = vmatprep.subr.mxu0 0.0
        %v1248 = vand.u32 %v373, 4294901760
        %1249 = vmatpush1.msra.mxu0 %v1248
        %1250 = vmatprep.subr.mxu0 0.0
        %1251 = vmatpush2.msra.mxu0 0.0
        %1252 = vmatprep.subr.mxu0 0.0
        %1253 = vmatpush2.msra.mxu0 0.0
        %1254 = vmatprep.subr.mxu0 0.0
        %1255 = vmatpush2.msra.mxu0 0.0
        %1256 = vmatprep.subr.mxu0 0.0
        %1257 = vmatpush2.msra.mxu0 0.0
        %1258 = vmatprep.subr.mxu0 0.0
        %1259 = vmatpush2.msra.mxu0 0.0
        %1260 = vmatprep.subr.mxu0 0.0
        %1261 = vmatpush2.msra.mxu0 0.0
        %1262 = vmatprep.subr.mxu0 0.0
        %1263 = vmatpush2.msra.mxu0 0.0
        %1264 = vmatprep.subr.mxu0 0.0
        %1265 = vmatpush2.msra.mxu0 0.0
        %1266 = vmatprep.subr.mxu0 0.0
        %1267 = vmatpush2.msra.mxu0 0.0
        %1268 = vmatprep.subr.mxu0 0.0
        %1269 = vmatpush2.msra.mxu0 0.0
        %1270 = vmatprep.subr.mxu0 0.0
        %1271 = vmatpush2.msra.mxu0 0.0
        %1272 = vmatprep.subr.mxu0 0.0
        %1273 = vmatpush2.msra.mxu0 0.0
        %1274 = vmatprep.subr.mxu0 0.0
        %1275 = vmatpush2.msra.mxu0 0.0
        %1276 = vmatprep.subr.mxu0 0.0
        %1277 = vmatpush2.msra.mxu0 0.0
        %1278 = vmatprep.subr.mxu0 0.0
        %1279 = vmatpush2.msra.mxu0 0.0
        %1280 = vmatprep.subr.mxu0 0.0
        %1281 = vmatpush2.msra.mxu0 0.0
        %1282 = vmatprep.mubr.f32.mxu0 0.0
        %v1283 = vand.u32 %v317, 4294901760
        %1284 = vmatmul.mubr.f32.gmra.mxu0 %v1283
        %v1285 = vpop.f32.mrf.mxu0
        %v1286 = vadd.f32 %v1157, %v1285
        %v1287 = vpop.f32.mrf.mxu0
        %1288 = vmatprep.mubr.f32.mxu0 0.0
        %v1289 = vand.u32 %v319, 4294901760
        %1290 = vmatmul.mubr.f32.gmra.mxu0 %v1289
        %v1291 = vpop.f32.mrf.mxu0
        %v1292 = vadd.f32 %v1163, %v1291
        %v1293 = vpop.f32.mrf.mxu0
        %1294 = vmatprep.mubr.f32.mxu0 0.0
        %v1295 = vand.u32 %v321, 4294901760
        %1296 = vmatmul.mubr.f32.gmra.mxu0 %v1295
        %v1297 = vpop.f32.mrf.mxu0
        %v1298 = vadd.f32 %v1169, %v1297
        %v1299 = vpop.f32.mrf.mxu0
        %1300 = vmatprep.mubr.f32.mxu0 0.0
        %v1301 = vand.u32 %v323, 4294901760
        %1302 = vmatmul.mubr.f32.gmra.mxu0 %v1301
        %v1303 = vpop.f32.mrf.mxu0
        %v1304 = vadd.f32 %v1175, %v1303
        %v1305 = vpop.f32.mrf.mxu0
        %1306 = vmatprep.mubr.f32.mxu0 0.0
        %v1307 = vand.u32 %v325, 4294901760
        %1308 = vmatmul.mubr.f32.gmra.mxu0 %v1307
        %v1309 = vpop.f32.mrf.mxu0
        %v1310 = vadd.f32 %v1181, %v1309
        %v1311 = vpop.f32.mrf.mxu0
        %1312 = vmatprep.mubr.f32.mxu0 0.0
        %v1313 = vand.u32 %v327, 4294901760
        %1314 = vmatmul.mubr.f32.gmra.mxu0 %v1313
        %v1315 = vpop.f32.mrf.mxu0
        %v1316 = vadd.f32 %v1187, %v1315
        %v1317 = vpop.f32.mrf.mxu0
        %1318 = vmatprep.mubr.f32.mxu0 0.0
        %v1319 = vand.u32 %v329, 4294901760
        %1320 = vmatmul.mubr.f32.gmra.mxu0 %v1319
        %v1321 = vpop.f32.mrf.mxu0
        %v1322 = vadd.f32 %v1193, %v1321
        %v1323 = vpop.f32.mrf.mxu0
        %1324 = vmatprep.mubr.f32.mxu0 0.0
        %v1325 = vand.u32 %v331, 4294901760
        %1326 = vmatmul.mubr.f32.gmra.mxu0 %v1325
        %v1327 = vpop.f32.mrf.mxu0
        %v1328 = vadd.f32 %v1199, %v1327
        %v1329 = vpop.f32.mrf.mxu0
        %1330 = vdwg.mxu0
        %1331 = vmatprep.subr.mxu0 0.0
        %v1332 = vand.u32 %v371, 4294901760
        %1333 = vmatpush1.msra.mxu0 %v1332
        %1334 = vmatprep.subr.mxu0 0.0
        %v1335 = vand.u32 %v370, 4294901760
        %1336 = vmatpush1.msra.mxu0 %v1335
        %1337 = vmatprep.subr.mxu0 0.0
        %v1338 = vand.u32 %v369, 4294901760
        %1339 = vmatpush1.msra.mxu0 %v1338
        %1340 = vmatprep.subr.mxu0 0.0
        %v1341 = vand.u32 %v368, 4294901760
        %1342 = vmatpush1.msra.mxu0 %v1341
        %1343 = vmatprep.subr.mxu0 0.0
        %v1344 = vand.u32 %v367, 4294901760
        %1345 = vmatpush1.msra.mxu0 %v1344
        %1346 = vmatprep.subr.mxu0 0.0
        %v1347 = vand.u32 %v366, 4294901760
        %1348 = vmatpush1.msra.mxu0 %v1347
        %1349 = vmatprep.subr.mxu0 0.0
        %v1350 = vand.u32 %v365, 4294901760
        %1351 = vmatpush1.msra.mxu0 %v1350
        %1352 = vmatprep.subr.mxu0 0.0
        %v1353 = vand.u32 %v364, 4294901760
        %1354 = vmatpush1.msra.mxu0 %v1353
        %1355 = vmatprep.subr.mxu0 0.0
        %v1356 = vand.u32 %v363, 4294901760
        %1357 = vmatpush1.msra.mxu0 %v1356
        %1358 = vmatprep.subr.mxu0 0.0
        %v1359 = vand.u32 %v362, 4294901760
        %1360 = vmatpush1.msra.mxu0 %v1359
        %1361 = vmatprep.subr.mxu0 0.0
        %v1362 = vand.u32 %v361, 4294901760
        %1363 = vmatpush1.msra.mxu0 %v1362
        %1364 = vmatprep.subr.mxu0 0.0
        %v1365 = vand.u32 %v360, 4294901760
        %1366 = vmatpush1.msra.mxu0 %v1365
        %1367 = vmatprep.subr.mxu0 0.0
        %v1368 = vand.u32 %v359, 4294901760
        %1369 = vmatpush1.msra.mxu0 %v1368
        %1370 = vmatprep.subr.mxu0 0.0
        %v1371 = vand.u32 %v358, 4294901760
        %1372 = vmatpush1.msra.mxu0 %v1371
        %1373 = vmatprep.subr.mxu0 0.0
        %v1374 = vand.u32 %v357, 4294901760
        %1375 = vmatpush1.msra.mxu0 %v1374
        %1376 = vmatprep.subr.mxu0 0.0
        %v1377 = vand.u32 %v356, 4294901760
        %1378 = vmatpush1.msra.mxu0 %v1377
        %1379 = vmatprep.subr.mxu0 0.0
        %1380 = vmatpush2.msra.mxu0 0.0
        %1381 = vmatprep.subr.mxu0 0.0
        %1382 = vmatpush2.msra.mxu0 0.0
        %1383 = vmatprep.subr.mxu0 0.0
        %1384 = vmatpush2.msra.mxu0 0.0
        %1385 = vmatprep.subr.mxu0 0.0
        %1386 = vmatpush2.msra.mxu0 0.0
        %1387 = vmatprep.subr.mxu0 0.0
        %1388 = vmatpush2.msra.mxu0 0.0
        %1389 = vmatprep.subr.mxu0 0.0
        %1390 = vmatpush2.msra.mxu0 0.0
        %1391 = vmatprep.subr.mxu0 0.0
        %1392 = vmatpush2.msra.mxu0 0.0
        %1393 = vmatprep.subr.mxu0 0.0
        %1394 = vmatpush2.msra.mxu0 0.0
        %1395 = vmatprep.subr.mxu0 0.0
        %1396 = vmatpush2.msra.mxu0 0.0
        %1397 = vmatprep.subr.mxu0 0.0
        %1398 = vmatpush2.msra.mxu0 0.0
        %1399 = vmatprep.subr.mxu0 0.0
        %1400 = vmatpush2.msra.mxu0 0.0
        %1401 = vmatprep.subr.mxu0 0.0
        %1402 = vmatpush2.msra.mxu0 0.0
        %1403 = vmatprep.subr.mxu0 0.0
        %1404 = vmatpush2.msra.mxu0 0.0
        %1405 = vmatprep.subr.mxu0 0.0
        %1406 = vmatpush2.msra.mxu0 0.0
        %1407 = vmatprep.subr.mxu0 0.0
        %1408 = vmatpush2.msra.mxu0 0.0
        %1409 = vmatprep.subr.mxu0 0.0
        %1410 = vmatpush2.msra.mxu0 0.0
        %1411 = vmatprep.mubr.f32.mxu0 0.0
        %v1412 = vand.u32 %v316, 4294901760
        %v1413 = vsub.f32 %v316, %v1412
        %v1414 = vand.u32 %v1413, 4294901760
        %v1415 = vsub.f32 %v1413, %v1414
        %v1416 = vand.u32 %v1415, 4294901760
        %1417 = vmatmul.mubr.f32.gmra.mxu0 %v1416
        %v1418 = vpop.f32.mrf.mxu0
        %v1419 = vadd.f32 %v1286, %v1418
        %v1420 = vpop.f32.mrf.mxu0
        %1421 = vmatprep.mubr.f32.mxu0 0.0
        %v1422 = vand.u32 %v318, 4294901760
        %v1423 = vsub.f32 %v318, %v1422
        %v1424 = vand.u32 %v1423, 4294901760
        %v1425 = vsub.f32 %v1423, %v1424
        %v1426 = vand.u32 %v1425, 4294901760
        %1427 = vmatmul.mubr.f32.gmra.mxu0 %v1426
        %v1428 = vpop.f32.mrf.mxu0
        %v1429 = vadd.f32 %v1292, %v1428
        %v1430 = vpop.f32.mrf.mxu0
        %1431 = vmatprep.mubr.f32.mxu0 0.0
        %v1432 = vand.u32 %v320, 4294901760
        %v1433 = vsub.f32 %v320, %v1432
        %v1434 = vand.u32 %v1433, 4294901760
        %v1435 = vsub.f32 %v1433, %v1434
        %v1436 = vand.u32 %v1435, 4294901760
        %1437 = vmatmul.mubr.f32.gmra.mxu0 %v1436
        %v1438 = vpop.f32.mrf.mxu0
        %v1439 = vadd.f32 %v1298, %v1438
        %v1440 = vpop.f32.mrf.mxu0
        %1441 = vmatprep.mubr.f32.mxu0 0.0
        %v1442 = vand.u32 %v322, 4294901760
        %v1443 = vsub.f32 %v322, %v1442
        %v1444 = vand.u32 %v1443, 4294901760
        %v1445 = vsub.f32 %v1443, %v1444
        %v1446 = vand.u32 %v1445, 4294901760
        %1447 = vmatmul.mubr.f32.gmra.mxu0 %v1446
        %v1448 = vpop.f32.mrf.mxu0
        %v1449 = vadd.f32 %v1304, %v1448
        %v1450 = vpop.f32.mrf.mxu0
        %1451 = vmatprep.mubr.f32.mxu0 0.0
        %v1452 = vand.u32 %v324, 4294901760
        %v1453 = vsub.f32 %v324, %v1452
        %v1454 = vand.u32 %v1453, 4294901760
        %v1455 = vsub.f32 %v1453, %v1454
        %v1456 = vand.u32 %v1455, 4294901760
        %1457 = vmatmul.mubr.f32.gmra.mxu0 %v1456
        %v1458 = vpop.f32.mrf.mxu0
        %v1459 = vadd.f32 %v1310, %v1458
        %v1460 = vpop.f32.mrf.mxu0
        %1461 = vmatprep.mubr.f32.mxu0 0.0
        %v1462 = vand.u32 %v326, 4294901760
        %v1463 = vsub.f32 %v326, %v1462
        %v1464 = vand.u32 %v1463, 4294901760
        %v1465 = vsub.f32 %v1463, %v1464
        %v1466 = vand.u32 %v1465, 4294901760
        %1467 = vmatmul.mubr.f32.gmra.mxu0 %v1466
        %v1468 = vpop.f32.mrf.mxu0
        %v1469 = vadd.f32 %v1316, %v1468
        %v1470 = vpop.f32.mrf.mxu0
        %1471 = vmatprep.mubr.f32.mxu0 0.0
        %v1472 = vand.u32 %v328, 4294901760
        %v1473 = vsub.f32 %v328, %v1472
        %v1474 = vand.u32 %v1473, 4294901760
        %v1475 = vsub.f32 %v1473, %v1474
        %v1476 = vand.u32 %v1475, 4294901760
        %1477 = vmatmul.mubr.f32.gmra.mxu0 %v1476
        %v1478 = vpop.f32.mrf.mxu0
        %v1479 = vadd.f32 %v1322, %v1478
        %v1480 = vpop.f32.mrf.mxu0
        %1481 = vmatprep.mubr.f32.mxu0 0.0
        %v1482 = vand.u32 %v330, 4294901760
        %v1483 = vsub.f32 %v330, %v1482
        %v1484 = vand.u32 %v1483, 4294901760
        %v1485 = vsub.f32 %v1483, %v1484
        %v1486 = vand.u32 %v1485, 4294901760
        %1487 = vmatmul.mubr.f32.gmra.mxu0 %v1486
        %v1488 = vpop.f32.mrf.mxu0
        %v1489 = vadd.f32 %v1328, %v1488
        %v1490 = vpop.f32.mrf.mxu0
        %1491 = vdwg.mxu0
        %1492 = vmatprep.subr.mxu0 0.0
        %v1493 = vand.u32 %v371, 4294901760
        %v1494 = vsub.f32 %v371, %v1493
        %v1495 = vand.u32 %v1494, 4294901760
        %v1496 = vsub.f32 %v1494, %v1495
        %v1497 = vand.u32 %v1496, 4294901760
        %1498 = vmatpush1.msra.mxu0 %v1497
        %1499 = vmatprep.subr.mxu0 0.0
        %v1500 = vand.u32 %v370, 4294901760
        %v1501 = vsub.f32 %v370, %v1500
        %v1502 = vand.u32 %v1501, 4294901760
        %v1503 = vsub.f32 %v1501, %v1502
        %v1504 = vand.u32 %v1503, 4294901760
        %1505 = vmatpush1.msra.mxu0 %v1504
        %1506 = vmatprep.subr.mxu0 0.0
        %v1507 = vand.u32 %v369, 4294901760
        %v1508 = vsub.f32 %v369, %v1507
        %v1509 = vand.u32 %v1508, 4294901760
        %v1510 = vsub.f32 %v1508, %v1509
        %v1511 = vand.u32 %v1510, 4294901760
        %1512 = vmatpush1.msra.mxu0 %v1511
        %1513 = vmatprep.subr.mxu0 0.0
        %v1514 = vand.u32 %v368, 4294901760
        %v1515 = vsub.f32 %v368, %v1514
        %v1516 = vand.u32 %v1515, 4294901760
        %v1517 = vsub.f32 %v1515, %v1516
        %v1518 = vand.u32 %v1517, 4294901760
        %1519 = vmatpush1.msra.mxu0 %v1518
        %1520 = vmatprep.subr.mxu0 0.0
        %v1521 = vand.u32 %v367, 4294901760
        %v1522 = vsub.f32 %v367, %v1521
        %v1523 = vand.u32 %v1522, 4294901760
        %v1524 = vsub.f32 %v1522, %v1523
        %v1525 = vand.u32 %v1524, 4294901760
        %1526 = vmatpush1.msra.mxu0 %v1525
        %1527 = vmatprep.subr.mxu0 0.0
        %v1528 = vand.u32 %v366, 4294901760
        %v1529 = vsub.f32 %v366, %v1528
        %v1530 = vand.u32 %v1529, 4294901760
        %v1531 = vsub.f32 %v1529, %v1530
        %v1532 = vand.u32 %v1531, 4294901760
        %1533 = vmatpush1.msra.mxu0 %v1532
        %1534 = vmatprep.subr.mxu0 0.0
        %v1535 = vand.u32 %v365, 4294901760
        %v1536 = vsub.f32 %v365, %v1535
        %v1537 = vand.u32 %v1536, 4294901760
        %v1538 = vsub.f32 %v1536, %v1537
        %v1539 = vand.u32 %v1538, 4294901760
        %1540 = vmatpush1.msra.mxu0 %v1539
        %1541 = vmatprep.subr.mxu0 0.0
        %v1542 = vand.u32 %v364, 4294901760
        %v1543 = vsub.f32 %v364, %v1542
        %v1544 = vand.u32 %v1543, 4294901760
        %v1545 = vsub.f32 %v1543, %v1544
        %v1546 = vand.u32 %v1545, 4294901760
        %1547 = vmatpush1.msra.mxu0 %v1546
        %1548 = vmatprep.subr.mxu0 0.0
        %v1549 = vand.u32 %v363, 4294901760
        %v1550 = vsub.f32 %v363, %v1549
        %v1551 = vand.u32 %v1550, 4294901760
        %v1552 = vsub.f32 %v1550, %v1551
        %v1553 = vand.u32 %v1552, 4294901760
        %1554 = vmatpush1.msra.mxu0 %v1553
        %1555 = vmatprep.subr.mxu0 0.0
        %v1556 = vand.u32 %v362, 4294901760
        %v1557 = vsub.f32 %v362, %v1556
        %v1558 = vand.u32 %v1557, 4294901760
        %v1559 = vsub.f32 %v1557, %v1558
        %v1560 = vand.u32 %v1559, 4294901760
        %1561 = vmatpush1.msra.mxu0 %v1560
        %1562 = vmatprep.subr.mxu0 0.0
        %v1563 = vand.u32 %v361, 4294901760
        %v1564 = vsub.f32 %v361, %v1563
        %v1565 = vand.u32 %v1564, 4294901760
        %v1566 = vsub.f32 %v1564, %v1565
        %v1567 = vand.u32 %v1566, 4294901760
        %1568 = vmatpush1.msra.mxu0 %v1567
        %1569 = vmatprep.subr.mxu0 0.0
        %v1570 = vand.u32 %v360, 4294901760
        %v1571 = vsub.f32 %v360, %v1570
        %v1572 = vand.u32 %v1571, 4294901760
        %v1573 = vsub.f32 %v1571, %v1572
        %v1574 = vand.u32 %v1573, 4294901760
        %1575 = vmatpush1.msra.mxu0 %v1574
        %1576 = vmatprep.subr.mxu0 0.0
        %v1577 = vand.u32 %v359, 4294901760
        %v1578 = vsub.f32 %v359, %v1577
        %v1579 = vand.u32 %v1578, 4294901760
        %v1580 = vsub.f32 %v1578, %v1579
        %v1581 = vand.u32 %v1580, 4294901760
        %1582 = vmatpush1.msra.mxu0 %v1581
        %1583 = vmatprep.subr.mxu0 0.0
        %v1584 = vand.u32 %v358, 4294901760
        %v1585 = vsub.f32 %v358, %v1584
        %v1586 = vand.u32 %v1585, 4294901760
        %v1587 = vsub.f32 %v1585, %v1586
        %v1588 = vand.u32 %v1587, 4294901760
        %1589 = vmatpush1.msra.mxu0 %v1588
        %1590 = vmatprep.subr.mxu0 0.0
        %v1591 = vand.u32 %v357, 4294901760
        %v1592 = vsub.f32 %v357, %v1591
        %v1593 = vand.u32 %v1592, 4294901760
        %v1594 = vsub.f32 %v1592, %v1593
        %v1595 = vand.u32 %v1594, 4294901760
        %1596 = vmatpush1.msra.mxu0 %v1595
        %1597 = vmatprep.subr.mxu0 0.0
        %v1598 = vand.u32 %v356, 4294901760
        %v1599 = vsub.f32 %v356, %v1598
        %v1600 = vand.u32 %v1599, 4294901760
        %v1601 = vsub.f32 %v1599, %v1600
        %v1602 = vand.u32 %v1601, 4294901760
        %1603 = vmatpush1.msra.mxu0 %v1602
        %1604 = vmatprep.subr.mxu0 0.0
        %1605 = vmatpush2.msra.mxu0 0.0
        %1606 = vmatprep.subr.mxu0 0.0
        %1607 = vmatpush2.msra.mxu0 0.0
        %1608 = vmatprep.subr.mxu0 0.0
        %1609 = vmatpush2.msra.mxu0 0.0
        %1610 = vmatprep.subr.mxu0 0.0
        %1611 = vmatpush2.msra.mxu0 0.0
        %1612 = vmatprep.subr.mxu0 0.0
        %1613 = vmatpush2.msra.mxu0 0.0
        %1614 = vmatprep.subr.mxu0 0.0
        %1615 = vmatpush2.msra.mxu0 0.0
        %1616 = vmatprep.subr.mxu0 0.0
        %1617 = vmatpush2.msra.mxu0 0.0
        %1618 = vmatprep.subr.mxu0 0.0
        %1619 = vmatpush2.msra.mxu0 0.0
        %1620 = vmatprep.subr.mxu0 0.0
        %1621 = vmatpush2.msra.mxu0 0.0
        %1622 = vmatprep.subr.mxu0 0.0
        %1623 = vmatpush2.msra.mxu0 0.0
        %1624 = vmatprep.subr.mxu0 0.0
        %1625 = vmatpush2.msra.mxu0 0.0
        %1626 = vmatprep.subr.mxu0 0.0
        %1627 = vmatpush2.msra.mxu0 0.0
        %1628 = vmatprep.subr.mxu0 0.0
        %1629 = vmatpush2.msra.mxu0 0.0
        %1630 = vmatprep.subr.mxu0 0.0
        %1631 = vmatpush2.msra.mxu0 0.0
        %1632 = vmatprep.subr.mxu0 0.0
        %1633 = vmatpush2.msra.mxu0 0.0
        %1634 = vmatprep.subr.mxu0 0.0
        %1635 = vmatpush2.msra.mxu0 0.0
        %1636 = vmatprep.mubr.f32.mxu0 0.0
        %v1637 = vand.u32 %v316, 4294901760
        %1638 = vmatmul.mubr.f32.gmra.mxu0 %v1637
        %v1639 = vpop.f32.mrf.mxu0
        %v1640 = vadd.f32 %v1419, %v1639
        %v1641 = vpop.f32.mrf.mxu0
        %1642 = vmatprep.mubr.f32.mxu0 0.0
        %v1643 = vand.u32 %v318, 4294901760
        %1644 = vmatmul.mubr.f32.gmra.mxu0 %v1643
        %v1645 = vpop.f32.mrf.mxu0
        %v1646 = vadd.f32 %v1429, %v1645
        %v1647 = vpop.f32.mrf.mxu0
        %1648 = vmatprep.mubr.f32.mxu0 0.0
        %v1649 = vand.u32 %v320, 4294901760
        %1650 = vmatmul.mubr.f32.gmra.mxu0 %v1649
        %v1651 = vpop.f32.mrf.mxu0
        %v1652 = vadd.f32 %v1439, %v1651
        %v1653 = vpop.f32.mrf.mxu0
        %1654 = vmatprep.mubr.f32.mxu0 0.0
        %v1655 = vand.u32 %v322, 4294901760
        %1656 = vmatmul.mubr.f32.gmra.mxu0 %v1655
        %v1657 = vpop.f32.mrf.mxu0
        %v1658 = vadd.f32 %v1449, %v1657
        %v1659 = vpop.f32.mrf.mxu0
        %1660 = vmatprep.mubr.f32.mxu0 0.0
        %v1661 = vand.u32 %v324, 4294901760
        %1662 = vmatmul.mubr.f32.gmra.mxu0 %v1661
        %v1663 = vpop.f32.mrf.mxu0
        %v1664 = vadd.f32 %v1459, %v1663
        %v1665 = vpop.f32.mrf.mxu0
        %1666 = vmatprep.mubr.f32.mxu0 0.0
        %v1667 = vand.u32 %v326, 4294901760
        %1668 = vmatmul.mubr.f32.gmra.mxu0 %v1667
        %v1669 = vpop.f32.mrf.mxu0
        %v1670 = vadd.f32 %v1469, %v1669
        %v1671 = vpop.f32.mrf.mxu0
        %1672 = vmatprep.mubr.f32.mxu0 0.0
        %v1673 = vand.u32 %v328, 4294901760
        %1674 = vmatmul.mubr.f32.gmra.mxu0 %v1673
        %v1675 = vpop.f32.mrf.mxu0
        %v1676 = vadd.f32 %v1479, %v1675
        %v1677 = vpop.f32.mrf.mxu0
        %1678 = vmatprep.mubr.f32.mxu0 0.0
        %v1679 = vand.u32 %v330, 4294901760
        %1680 = vmatmul.mubr.f32.gmra.mxu0 %v1679
        %v1681 = vpop.f32.mrf.mxu0
        %v1682 = vadd.f32 %v1489, %v1681
        %v1683 = vpop.f32.mrf.mxu0
        %1684 = vdwg.mxu0
        %1685 = vmatprep.subr.mxu0 0.0
        %v1686 = vand.u32 %v371, 4294901760
        %v1687 = vsub.f32 %v371, %v1686
        %1688 = vmatpush1.msra.mxu0 %v1687
        %1689 = vmatprep.subr.mxu0 0.0
        %v1690 = vand.u32 %v370, 4294901760
        %v1691 = vsub.f32 %v370, %v1690
        %1692 = vmatpush1.msra.mxu0 %v1691
        %1693 = vmatprep.subr.mxu0 0.0
        %v1694 = vand.u32 %v369, 4294901760
        %v1695 = vsub.f32 %v369, %v1694
        %1696 = vmatpush1.msra.mxu0 %v1695
        %1697 = vmatprep.subr.mxu0 0.0
        %v1698 = vand.u32 %v368, 4294901760
        %v1699 = vsub.f32 %v368, %v1698
        %1700 = vmatpush1.msra.mxu0 %v1699
        %1701 = vmatprep.subr.mxu0 0.0
        %v1702 = vand.u32 %v367, 4294901760
        %v1703 = vsub.f32 %v367, %v1702
        %1704 = vmatpush1.msra.mxu0 %v1703
        %1705 = vmatprep.subr.mxu0 0.0
        %v1706 = vand.u32 %v366, 4294901760
        %v1707 = vsub.f32 %v366, %v1706
        %1708 = vmatpush1.msra.mxu0 %v1707
        %1709 = vmatprep.subr.mxu0 0.0
        %v1710 = vand.u32 %v365, 4294901760
        %v1711 = vsub.f32 %v365, %v1710
        %1712 = vmatpush1.msra.mxu0 %v1711
        %1713 = vmatprep.subr.mxu0 0.0
        %v1714 = vand.u32 %v364, 4294901760
        %v1715 = vsub.f32 %v364, %v1714
        %1716 = vmatpush1.msra.mxu0 %v1715
        %1717 = vmatprep.subr.mxu0 0.0
        %v1718 = vand.u32 %v363, 4294901760
        %v1719 = vsub.f32 %v363, %v1718
        %1720 = vmatpush1.msra.mxu0 %v1719
        %1721 = vmatprep.subr.mxu0 0.0
        %v1722 = vand.u32 %v362, 4294901760
        %v1723 = vsub.f32 %v362, %v1722
        %1724 = vmatpush1.msra.mxu0 %v1723
        %1725 = vmatprep.subr.mxu0 0.0
        %v1726 = vand.u32 %v361, 4294901760
        %v1727 = vsub.f32 %v361, %v1726
        %1728 = vmatpush1.msra.mxu0 %v1727
        %1729 = vmatprep.subr.mxu0 0.0
        %v1730 = vand.u32 %v360, 4294901760
        %v1731 = vsub.f32 %v360, %v1730
        %1732 = vmatpush1.msra.mxu0 %v1731
        %1733 = vmatprep.subr.mxu0 0.0
        %v1734 = vand.u32 %v359, 4294901760
        %v1735 = vsub.f32 %v359, %v1734
        %1736 = vmatpush1.msra.mxu0 %v1735
        %1737 = vmatprep.subr.mxu0 0.0
        %v1738 = vand.u32 %v358, 4294901760
        %v1739 = vsub.f32 %v358, %v1738
        %1740 = vmatpush1.msra.mxu0 %v1739
        %1741 = vmatprep.subr.mxu0 0.0
        %v1742 = vand.u32 %v357, 4294901760
        %v1743 = vsub.f32 %v357, %v1742
        %1744 = vmatpush1.msra.mxu0 %v1743
        %1745 = vmatprep.subr.mxu0 0.0
        %v1746 = vand.u32 %v356, 4294901760
        %v1747 = vsub.f32 %v356, %v1746
        %1748 = vmatpush1.msra.mxu0 %v1747
        %1749 = vmatprep.subr.mxu0 0.0
        %1750 = vmatpush2.msra.mxu0 0.0
        %1751 = vmatprep.subr.mxu0 0.0
        %1752 = vmatpush2.msra.mxu0 0.0
        %1753 = vmatprep.subr.mxu0 0.0
        %1754 = vmatpush2.msra.mxu0 0.0
        %1755 = vmatprep.subr.mxu0 0.0
        %1756 = vmatpush2.msra.mxu0 0.0
        %1757 = vmatprep.subr.mxu0 0.0
        %1758 = vmatpush2.msra.mxu0 0.0
        %1759 = vmatprep.subr.mxu0 0.0
        %1760 = vmatpush2.msra.mxu0 0.0
        %1761 = vmatprep.subr.mxu0 0.0
        %1762 = vmatpush2.msra.mxu0 0.0
        %1763 = vmatprep.subr.mxu0 0.0
        %1764 = vmatpush2.msra.mxu0 0.0
        %1765 = vmatprep.subr.mxu0 0.0
        %1766 = vmatpush2.msra.mxu0 0.0
        %1767 = vmatprep.subr.mxu0 0.0
        %1768 = vmatpush2.msra.mxu0 0.0
        %1769 = vmatprep.subr.mxu0 0.0
        %1770 = vmatpush2.msra.mxu0 0.0
        %1771 = vmatprep.subr.mxu0 0.0
        %1772 = vmatpush2.msra.mxu0 0.0
        %1773 = vmatprep.subr.mxu0 0.0
        %1774 = vmatpush2.msra.mxu0 0.0
        %1775 = vmatprep.subr.mxu0 0.0
        %1776 = vmatpush2.msra.mxu0 0.0
        %1777 = vmatprep.subr.mxu0 0.0
        %1778 = vmatpush2.msra.mxu0 0.0
        %1779 = vmatprep.subr.mxu0 0.0
        %1780 = vmatpush2.msra.mxu0 0.0
        %1781 = vmatprep.mubr.f32.mxu0 0.0
        %v1782 = vand.u32 %v316, 4294901760
        %v1783 = vsub.f32 %v316, %v1782
        %1784 = vmatmul.mubr.f32.gmra.mxu0 %v1783
        %v1785 = vpop.f32.mrf.mxu0
        %v1786 = vadd.f32 %v1640, %v1785
        %v1787 = vpop.f32.mrf.mxu0
        %1788 = vmatprep.mubr.f32.mxu0 0.0
        %v1789 = vand.u32 %v318, 4294901760
        %v1790 = vsub.f32 %v318, %v1789
        %1791 = vmatmul.mubr.f32.gmra.mxu0 %v1790
        %v1792 = vpop.f32.mrf.mxu0
        %v1793 = vadd.f32 %v1646, %v1792
        %v1794 = vpop.f32.mrf.mxu0
        %1795 = vmatprep.mubr.f32.mxu0 0.0
        %v1796 = vand.u32 %v320, 4294901760
        %v1797 = vsub.f32 %v320, %v1796
        %1798 = vmatmul.mubr.f32.gmra.mxu0 %v1797
        %v1799 = vpop.f32.mrf.mxu0
        %v1800 = vadd.f32 %v1652, %v1799
        %v1801 = vpop.f32.mrf.mxu0
        %1802 = vmatprep.mubr.f32.mxu0 0.0
        %v1803 = vand.u32 %v322, 4294901760
        %v1804 = vsub.f32 %v322, %v1803
        %1805 = vmatmul.mubr.f32.gmra.mxu0 %v1804
        %v1806 = vpop.f32.mrf.mxu0
        %v1807 = vadd.f32 %v1658, %v1806
        %v1808 = vpop.f32.mrf.mxu0
        %1809 = vmatprep.mubr.f32.mxu0 0.0
        %v1810 = vand.u32 %v324, 4294901760
        %v1811 = vsub.f32 %v324, %v1810
        %1812 = vmatmul.mubr.f32.gmra.mxu0 %v1811
        %v1813 = vpop.f32.mrf.mxu0
        %v1814 = vadd.f32 %v1664, %v1813
        %v1815 = vpop.f32.mrf.mxu0
        %1816 = vmatprep.mubr.f32.mxu0 0.0
        %v1817 = vand.u32 %v326, 4294901760
        %v1818 = vsub.f32 %v326, %v1817
        %1819 = vmatmul.mubr.f32.gmra.mxu0 %v1818
        %v1820 = vpop.f32.mrf.mxu0
        %v1821 = vadd.f32 %v1670, %v1820
        %v1822 = vpop.f32.mrf.mxu0
        %1823 = vmatprep.mubr.f32.mxu0 0.0
        %v1824 = vand.u32 %v328, 4294901760
        %v1825 = vsub.f32 %v328, %v1824
        %1826 = vmatmul.mubr.f32.gmra.mxu0 %v1825
        %v1827 = vpop.f32.mrf.mxu0
        %v1828 = vadd.f32 %v1676, %v1827
        %v1829 = vpop.f32.mrf.mxu0
        %1830 = vmatprep.mubr.f32.mxu0 0.0
        %v1831 = vand.u32 %v330, 4294901760
        %v1832 = vsub.f32 %v330, %v1831
        %1833 = vmatmul.mubr.f32.gmra.mxu0 %v1832
        %v1834 = vpop.f32.mrf.mxu0
        %v1835 = vadd.f32 %v1682, %v1834
        %v1836 = vpop.f32.mrf.mxu0
        %1837 = vdwg.mxu0
        %1838 = vmatprep.subr.mxu0 0.0
        %v1839 = vand.u32 %v371, 4294901760
        %1840 = vmatpush1.msra.mxu0 %v1839
        %1841 = vmatprep.subr.mxu0 0.0
        %v1842 = vand.u32 %v370, 4294901760
        %1843 = vmatpush1.msra.mxu0 %v1842
        %1844 = vmatprep.subr.mxu0 0.0
        %v1845 = vand.u32 %v369, 4294901760
        %1846 = vmatpush1.msra.mxu0 %v1845
        %1847 = vmatprep.subr.mxu0 0.0
        %v1848 = vand.u32 %v368, 4294901760
        %1849 = vmatpush1.msra.mxu0 %v1848
        %1850 = vmatprep.subr.mxu0 0.0
        %v1851 = vand.u32 %v367, 4294901760
        %1852 = vmatpush1.msra.mxu0 %v1851
        %1853 = vmatprep.subr.mxu0 0.0
        %v1854 = vand.u32 %v366, 4294901760
        %1855 = vmatpush1.msra.mxu0 %v1854
        %1856 = vmatprep.subr.mxu0 0.0
        %v1857 = vand.u32 %v365, 4294901760
        %1858 = vmatpush1.msra.mxu0 %v1857
        %1859 = vmatprep.subr.mxu0 0.0
        %v1860 = vand.u32 %v364, 4294901760
        %1861 = vmatpush1.msra.mxu0 %v1860
        %1862 = vmatprep.subr.mxu0 0.0
        %v1863 = vand.u32 %v363, 4294901760
        %1864 = vmatpush1.msra.mxu0 %v1863
        %1865 = vmatprep.subr.mxu0 0.0
        %v1866 = vand.u32 %v362, 4294901760
        %1867 = vmatpush1.msra.mxu0 %v1866
        %1868 = vmatprep.subr.mxu0 0.0
        %v1869 = vand.u32 %v361, 4294901760
        %1870 = vmatpush1.msra.mxu0 %v1869
        %1871 = vmatprep.subr.mxu0 0.0
        %v1872 = vand.u32 %v360, 4294901760
        %1873 = vmatpush1.msra.mxu0 %v1872
        %1874 = vmatprep.subr.mxu0 0.0
        %v1875 = vand.u32 %v359, 4294901760
        %1876 = vmatpush1.msra.mxu0 %v1875
        %1877 = vmatprep.subr.mxu0 0.0
        %v1878 = vand.u32 %v358, 4294901760
        %1879 = vmatpush1.msra.mxu0 %v1878
        %1880 = vmatprep.subr.mxu0 0.0
        %v1881 = vand.u32 %v357, 4294901760
        %1882 = vmatpush1.msra.mxu0 %v1881
        %1883 = vmatprep.subr.mxu0 0.0
        %v1884 = vand.u32 %v356, 4294901760
        %1885 = vmatpush1.msra.mxu0 %v1884
        %1886 = vmatprep.subr.mxu0 0.0
        %1887 = vmatpush2.msra.mxu0 0.0
        %1888 = vmatprep.subr.mxu0 0.0
        %1889 = vmatpush2.msra.mxu0 0.0
        %1890 = vmatprep.subr.mxu0 0.0
        %1891 = vmatpush2.msra.mxu0 0.0
        %1892 = vmatprep.subr.mxu0 0.0
        %1893 = vmatpush2.msra.mxu0 0.0
        %1894 = vmatprep.subr.mxu0 0.0
        %1895 = vmatpush2.msra.mxu0 0.0
        %1896 = vmatprep.subr.mxu0 0.0
        %1897 = vmatpush2.msra.mxu0 0.0
        %1898 = vmatprep.subr.mxu0 0.0
        %1899 = vmatpush2.msra.mxu0 0.0
        %1900 = vmatprep.subr.mxu0 0.0
        %1901 = vmatpush2.msra.mxu0 0.0
        %1902 = vmatprep.subr.mxu0 0.0
        %1903 = vmatpush2.msra.mxu0 0.0
        %1904 = vmatprep.subr.mxu0 0.0
        %1905 = vmatpush2.msra.mxu0 0.0
        %1906 = vmatprep.subr.mxu0 0.0
        %1907 = vmatpush2.msra.mxu0 0.0
        %1908 = vmatprep.subr.mxu0 0.0
        %1909 = vmatpush2.msra.mxu0 0.0
        %1910 = vmatprep.subr.mxu0 0.0
        %1911 = vmatpush2.msra.mxu0 0.0
        %1912 = vmatprep.subr.mxu0 0.0
        %1913 = vmatpush2.msra.mxu0 0.0
        %1914 = vmatprep.subr.mxu0 0.0
        %1915 = vmatpush2.msra.mxu0 0.0
        %1916 = vmatprep.subr.mxu0 0.0
        %1917 = vmatpush2.msra.mxu0 0.0
        %1918 = vmatprep.mubr.f32.mxu0 0.0
        %v1919 = vand.u32 %v316, 4294901760
        %v1920 = vsub.f32 %v316, %v1919
        %v1921 = vand.u32 %v1920, 4294901760
        %1922 = vmatmul.mubr.f32.gmra.mxu0 %v1921
        %v1923 = vpop.f32.mrf.mxu0
        %v1924 = vadd.f32 %v1786, %v1923
        %v1925 = vpop.f32.mrf.mxu0
        %1926 = vmatprep.mubr.f32.mxu0 0.0
        %v1927 = vand.u32 %v318, 4294901760
        %v1928 = vsub.f32 %v318, %v1927
        %v1929 = vand.u32 %v1928, 4294901760
        %1930 = vmatmul.mubr.f32.gmra.mxu0 %v1929
        %v1931 = vpop.f32.mrf.mxu0
        %v1932 = vadd.f32 %v1793, %v1931
        %v1933 = vpop.f32.mrf.mxu0
        %1934 = vmatprep.mubr.f32.mxu0 0.0
        %v1935 = vand.u32 %v320, 4294901760
        %v1936 = vsub.f32 %v320, %v1935
        %v1937 = vand.u32 %v1936, 4294901760
        %1938 = vmatmul.mubr.f32.gmra.mxu0 %v1937
        %v1939 = vpop.f32.mrf.mxu0
        %v1940 = vadd.f32 %v1800, %v1939
        %v1941 = vpop.f32.mrf.mxu0
        %1942 = vmatprep.mubr.f32.mxu0 0.0
        %v1943 = vand.u32 %v322, 4294901760
        %v1944 = vsub.f32 %v322, %v1943
        %v1945 = vand.u32 %v1944, 4294901760
        %1946 = vmatmul.mubr.f32.gmra.mxu0 %v1945
        %v1947 = vpop.f32.mrf.mxu0
        %v1948 = vadd.f32 %v1807, %v1947
        %v1949 = vpop.f32.mrf.mxu0
        %1950 = vmatprep.mubr.f32.mxu0 0.0
        %v1951 = vand.u32 %v324, 4294901760
        %v1952 = vsub.f32 %v324, %v1951
        %v1953 = vand.u32 %v1952, 4294901760
        %1954 = vmatmul.mubr.f32.gmra.mxu0 %v1953
        %v1955 = vpop.f32.mrf.mxu0
        %v1956 = vadd.f32 %v1814, %v1955
        %v1957 = vpop.f32.mrf.mxu0
        %1958 = vmatprep.mubr.f32.mxu0 0.0
        %v1959 = vand.u32 %v326, 4294901760
        %v1960 = vsub.f32 %v326, %v1959
        %v1961 = vand.u32 %v1960, 4294901760
        %1962 = vmatmul.mubr.f32.gmra.mxu0 %v1961
        %v1963 = vpop.f32.mrf.mxu0
        %v1964 = vadd.f32 %v1821, %v1963
        %v1965 = vpop.f32.mrf.mxu0
        %1966 = vmatprep.mubr.f32.mxu0 0.0
        %v1967 = vand.u32 %v328, 4294901760
        %v1968 = vsub.f32 %v328, %v1967
        %v1969 = vand.u32 %v1968, 4294901760
        %1970 = vmatmul.mubr.f32.gmra.mxu0 %v1969
        %v1971 = vpop.f32.mrf.mxu0
        %v1972 = vadd.f32 %v1828, %v1971
        %v1973 = vpop.f32.mrf.mxu0
        %1974 = vmatprep.mubr.f32.mxu0 0.0
        %v1975 = vand.u32 %v330, 4294901760
        %v1976 = vsub.f32 %v330, %v1975
        %v1977 = vand.u32 %v1976, 4294901760
        %1978 = vmatmul.mubr.f32.gmra.mxu0 %v1977
        %v1979 = vpop.f32.mrf.mxu0
        %v1980 = vadd.f32 %v1835, %v1979
        %v1981 = vpop.f32.mrf.mxu0
        %1982 = vdwg.mxu0
        %1983 = vmatprep.subr.mxu0 0.0
        %v1984 = vand.u32 %v371, 4294901760
        %v1985 = vsub.f32 %v371, %v1984
        %v1986 = vand.u32 %v1985, 4294901760
        %1987 = vmatpush1.msra.mxu0 %v1986
        %1988 = vmatprep.subr.mxu0 0.0
        %v1989 = vand.u32 %v370, 4294901760
        %v1990 = vsub.f32 %v370, %v1989
        %v1991 = vand.u32 %v1990, 4294901760
        %1992 = vmatpush1.msra.mxu0 %v1991
        %1993 = vmatprep.subr.mxu0 0.0
        %v1994 = vand.u32 %v369, 4294901760
        %v1995 = vsub.f32 %v369, %v1994
        %v1996 = vand.u32 %v1995, 4294901760
        %1997 = vmatpush1.msra.mxu0 %v1996
        %1998 = vmatprep.subr.mxu0 0.0
        %v1999 = vand.u32 %v368, 4294901760
        %v2000 = vsub.f32 %v368, %v1999
        %v2001 = vand.u32 %v2000, 4294901760
        %2002 = vmatpush1.msra.mxu0 %v2001
        %2003 = vmatprep.subr.mxu0 0.0
        %v2004 = vand.u32 %v367, 4294901760
        %v2005 = vsub.f32 %v367, %v2004
        %v2006 = vand.u32 %v2005, 4294901760
        %2007 = vmatpush1.msra.mxu0 %v2006
        %2008 = vmatprep.subr.mxu0 0.0
        %v2009 = vand.u32 %v366, 4294901760
        %v2010 = vsub.f32 %v366, %v2009
        %v2011 = vand.u32 %v2010, 4294901760
        %2012 = vmatpush1.msra.mxu0 %v2011
        %2013 = vmatprep.subr.mxu0 0.0
        %v2014 = vand.u32 %v365, 4294901760
        %v2015 = vsub.f32 %v365, %v2014
        %v2016 = vand.u32 %v2015, 4294901760
        %2017 = vmatpush1.msra.mxu0 %v2016
        %2018 = vmatprep.subr.mxu0 0.0
        %v2019 = vand.u32 %v364, 4294901760
        %v2020 = vsub.f32 %v364, %v2019
        %v2021 = vand.u32 %v2020, 4294901760
        %2022 = vmatpush1.msra.mxu0 %v2021
        %2023 = vmatprep.subr.mxu0 0.0
        %v2024 = vand.u32 %v363, 4294901760
        %v2025 = vsub.f32 %v363, %v2024
        %v2026 = vand.u32 %v2025, 4294901760
        %2027 = vmatpush1.msra.mxu0 %v2026
        %2028 = vmatprep.subr.mxu0 0.0
        %v2029 = vand.u32 %v362, 4294901760
        %v2030 = vsub.f32 %v362, %v2029
        %v2031 = vand.u32 %v2030, 4294901760
        %2032 = vmatpush1.msra.mxu0 %v2031
        %2033 = vmatprep.subr.mxu0 0.0
        %v2034 = vand.u32 %v361, 4294901760
        %v2035 = vsub.f32 %v361, %v2034
        %v2036 = vand.u32 %v2035, 4294901760
        %2037 = vmatpush1.msra.mxu0 %v2036
        %2038 = vmatprep.subr.mxu0 0.0
        %v2039 = vand.u32 %v360, 4294901760
        %v2040 = vsub.f32 %v360, %v2039
        %v2041 = vand.u32 %v2040, 4294901760
        %2042 = vmatpush1.msra.mxu0 %v2041
        %2043 = vmatprep.subr.mxu0 0.0
        %v2044 = vand.u32 %v359, 4294901760
        %v2045 = vsub.f32 %v359, %v2044
        %v2046 = vand.u32 %v2045, 4294901760
        %2047 = vmatpush1.msra.mxu0 %v2046
        %2048 = vmatprep.subr.mxu0 0.0
        %v2049 = vand.u32 %v358, 4294901760
        %v2050 = vsub.f32 %v358, %v2049
        %v2051 = vand.u32 %v2050, 4294901760
        %2052 = vmatpush1.msra.mxu0 %v2051
        %2053 = vmatprep.subr.mxu0 0.0
        %v2054 = vand.u32 %v357, 4294901760
        %v2055 = vsub.f32 %v357, %v2054
        %v2056 = vand.u32 %v2055, 4294901760
        %2057 = vmatpush1.msra.mxu0 %v2056
        %2058 = vmatprep.subr.mxu0 0.0
        %v2059 = vand.u32 %v356, 4294901760
        %v2060 = vsub.f32 %v356, %v2059
        %v2061 = vand.u32 %v2060, 4294901760
        %2062 = vmatpush1.msra.mxu0 %v2061
        %2063 = vmatprep.subr.mxu0 0.0
        %2064 = vmatpush2.msra.mxu0 0.0
        %2065 = vmatprep.subr.mxu0 0.0
        %2066 = vmatpush2.msra.mxu0 0.0
        %2067 = vmatprep.subr.mxu0 0.0
        %2068 = vmatpush2.msra.mxu0 0.0
        %2069 = vmatprep.subr.mxu0 0.0
        %2070 = vmatpush2.msra.mxu0 0.0
        %2071 = vmatprep.subr.mxu0 0.0
        %2072 = vmatpush2.msra.mxu0 0.0
        %2073 = vmatprep.subr.mxu0 0.0
        %2074 = vmatpush2.msra.mxu0 0.0
        %2075 = vmatprep.subr.mxu0 0.0
        %2076 = vmatpush2.msra.mxu0 0.0
        %2077 = vmatprep.subr.mxu0 0.0
        %2078 = vmatpush2.msra.mxu0 0.0
        %2079 = vmatprep.subr.mxu0 0.0
        %2080 = vmatpush2.msra.mxu0 0.0
        %2081 = vmatprep.subr.mxu0 0.0
        %2082 = vmatpush2.msra.mxu0 0.0
        %2083 = vmatprep.subr.mxu0 0.0
        %2084 = vmatpush2.msra.mxu0 0.0
        %2085 = vmatprep.subr.mxu0 0.0
        %2086 = vmatpush2.msra.mxu0 0.0
        %2087 = vmatprep.subr.mxu0 0.0
        %2088 = vmatpush2.msra.mxu0 0.0
        %2089 = vmatprep.subr.mxu0 0.0
        %2090 = vmatpush2.msra.mxu0 0.0
        %2091 = vmatprep.subr.mxu0 0.0
        %2092 = vmatpush2.msra.mxu0 0.0
        %2093 = vmatprep.subr.mxu0 0.0
        %2094 = vmatpush2.msra.mxu0 0.0
        %2095 = vmatprep.mubr.f32.mxu0 0.0
        %v2096 = vand.u32 %v316, 4294901760
        %2097 = vmatmul.mubr.f32.gmra.mxu0 %v2096
        %v2098 = vpop.f32.mrf.mxu0
        %v2099 = vadd.f32 %v1924, %v2098
        %v2100 = vpop.f32.mrf.mxu0
        %2101 = vmatprep.mubr.f32.mxu0 0.0
        %v2102 = vand.u32 %v318, 4294901760
        %2103 = vmatmul.mubr.f32.gmra.mxu0 %v2102
        %v2104 = vpop.f32.mrf.mxu0
        %v2105 = vadd.f32 %v1932, %v2104
        %v2106 = vpop.f32.mrf.mxu0
        %2107 = vmatprep.mubr.f32.mxu0 0.0
        %v2108 = vand.u32 %v320, 4294901760
        %2109 = vmatmul.mubr.f32.gmra.mxu0 %v2108
        %v2110 = vpop.f32.mrf.mxu0
        %v2111 = vadd.f32 %v1940, %v2110
        %v2112 = vpop.f32.mrf.mxu0
        %2113 = vmatprep.mubr.f32.mxu0 0.0
        %v2114 = vand.u32 %v322, 4294901760
        %2115 = vmatmul.mubr.f32.gmra.mxu0 %v2114
        %v2116 = vpop.f32.mrf.mxu0
        %v2117 = vadd.f32 %v1948, %v2116
        %v2118 = vpop.f32.mrf.mxu0
        %2119 = vmatprep.mubr.f32.mxu0 0.0
        %v2120 = vand.u32 %v324, 4294901760
        %2121 = vmatmul.mubr.f32.gmra.mxu0 %v2120
        %v2122 = vpop.f32.mrf.mxu0
        %v2123 = vadd.f32 %v1956, %v2122
        %v2124 = vpop.f32.mrf.mxu0
        %2125 = vmatprep.mubr.f32.mxu0 0.0
        %v2126 = vand.u32 %v326, 4294901760
        %2127 = vmatmul.mubr.f32.gmra.mxu0 %v2126
        %v2128 = vpop.f32.mrf.mxu0
        %v2129 = vadd.f32 %v1964, %v2128
        %v2130 = vpop.f32.mrf.mxu0
        %2131 = vmatprep.mubr.f32.mxu0 0.0
        %v2132 = vand.u32 %v328, 4294901760
        %2133 = vmatmul.mubr.f32.gmra.mxu0 %v2132
        %v2134 = vpop.f32.mrf.mxu0
        %v2135 = vadd.f32 %v1972, %v2134
        %v2136 = vpop.f32.mrf.mxu0
        %2137 = vmatprep.mubr.f32.mxu0 0.0
        %v2138 = vand.u32 %v330, 4294901760
        %2139 = vmatmul.mubr.f32.gmra.mxu0 %v2138
        %v2140 = vpop.f32.mrf.mxu0
        %v2141 = vadd.f32 %v1980, %v2140
        %v2142 = vpop.f32.mrf.mxu0
        %2143 = vdwg.mxu0
        %2144 = vmatprep.subr.mxu0 0.0
        %v2145 = vand.u32 %v371, 4294901760
        %2146 = vmatpush1.msra.mxu0 %v2145
        %2147 = vmatprep.subr.mxu0 0.0
        %v2148 = vand.u32 %v370, 4294901760
        %2149 = vmatpush1.msra.mxu0 %v2148
        %2150 = vmatprep.subr.mxu0 0.0
        %v2151 = vand.u32 %v369, 4294901760
        %2152 = vmatpush1.msra.mxu0 %v2151
        %2153 = vmatprep.subr.mxu0 0.0
        %v2154 = vand.u32 %v368, 4294901760
        %2155 = vmatpush1.msra.mxu0 %v2154
        %2156 = vmatprep.subr.mxu0 0.0
        %v2157 = vand.u32 %v367, 4294901760
        %2158 = vmatpush1.msra.mxu0 %v2157
        %2159 = vmatprep.subr.mxu0 0.0
        %v2160 = vand.u32 %v366, 4294901760
        %2161 = vmatpush1.msra.mxu0 %v2160
        %2162 = vmatprep.subr.mxu0 0.0
        %v2163 = vand.u32 %v365, 4294901760
        %2164 = vmatpush1.msra.mxu0 %v2163
        %2165 = vmatprep.subr.mxu0 0.0
        %v2166 = vand.u32 %v364, 4294901760
        %2167 = vmatpush1.msra.mxu0 %v2166
        %2168 = vmatprep.subr.mxu0 0.0
        %v2169 = vand.u32 %v363, 4294901760
        %2170 = vmatpush1.msra.mxu0 %v2169
        %2171 = vmatprep.subr.mxu0 0.0
        %v2172 = vand.u32 %v362, 4294901760
        %2173 = vmatpush1.msra.mxu0 %v2172
        %2174 = vmatprep.subr.mxu0 0.0
        %v2175 = vand.u32 %v361, 4294901760
        %2176 = vmatpush1.msra.mxu0 %v2175
        %2177 = vmatprep.subr.mxu0 0.0
        %v2178 = vand.u32 %v360, 4294901760
        %2179 = vmatpush1.msra.mxu0 %v2178
        %2180 = vmatprep.subr.mxu0 0.0
        %v2181 = vand.u32 %v359, 4294901760
        %2182 = vmatpush1.msra.mxu0 %v2181
        %2183 = vmatprep.subr.mxu0 0.0
        %v2184 = vand.u32 %v358, 4294901760
        %2185 = vmatpush1.msra.mxu0 %v2184
        %2186 = vmatprep.subr.mxu0 0.0
        %v2187 = vand.u32 %v357, 4294901760
        %2188 = vmatpush1.msra.mxu0 %v2187
        %2189 = vmatprep.subr.mxu0 0.0
        %v2190 = vand.u32 %v356, 4294901760
        %2191 = vmatpush1.msra.mxu0 %v2190
        %2192 = vmatprep.subr.mxu0 0.0
        %2193 = vmatpush2.msra.mxu0 0.0
        %2194 = vmatprep.subr.mxu0 0.0
        %2195 = vmatpush2.msra.mxu0 0.0
        %2196 = vmatprep.subr.mxu0 0.0
        %2197 = vmatpush2.msra.mxu0 0.0
        %2198 = vmatprep.subr.mxu0 0.0
        %2199 = vmatpush2.msra.mxu0 0.0
        %2200 = vmatprep.subr.mxu0 0.0
        %2201 = vmatpush2.msra.mxu0 0.0
        %2202 = vmatprep.subr.mxu0 0.0
        %2203 = vmatpush2.msra.mxu0 0.0
        %2204 = vmatprep.subr.mxu0 0.0
        %2205 = vmatpush2.msra.mxu0 0.0
        %2206 = vmatprep.subr.mxu0 0.0
        %2207 = vmatpush2.msra.mxu0 0.0
        %2208 = vmatprep.subr.mxu0 0.0
        %2209 = vmatpush2.msra.mxu0 0.0
        %2210 = vmatprep.subr.mxu0 0.0
        %2211 = vmatpush2.msra.mxu0 0.0
        %2212 = vmatprep.subr.mxu0 0.0
        %2213 = vmatpush2.msra.mxu0 0.0
        %2214 = vmatprep.subr.mxu0 0.0
        %2215 = vmatpush2.msra.mxu0 0.0
        %2216 = vmatprep.subr.mxu0 0.0
        %2217 = vmatpush2.msra.mxu0 0.0
        %2218 = vmatprep.subr.mxu0 0.0
        %2219 = vmatpush2.msra.mxu0 0.0
        %2220 = vmatprep.subr.mxu0 0.0
        %2221 = vmatpush2.msra.mxu0 0.0
        %2222 = vmatprep.subr.mxu0 0.0
        %2223 = vmatpush2.msra.mxu0 0.0
        %2224 = vmatprep.mubr.f32.mxu0 0.0
        %v2225 = vand.u32 %v316, 4294901760
        %2226 = vmatmul.mubr.f32.gmra.mxu0 %v2225
        %v2227 = vpop.f32.mrf.mxu0
        %v2228 = vadd.f32 %v2099, %v2227
        %v2229 = vpop.f32.mrf.mxu0
        %2230 = vmatprep.mubr.f32.mxu0 0.0
        %v2231 = vand.u32 %v318, 4294901760
        %2232 = vmatmul.mubr.f32.gmra.mxu0 %v2231
        %v2233 = vpop.f32.mrf.mxu0
        %v2234 = vadd.f32 %v2105, %v2233
        %v2235 = vpop.f32.mrf.mxu0
        %2236 = vmatprep.mubr.f32.mxu0 0.0
        %v2237 = vand.u32 %v320, 4294901760
        %2238 = vmatmul.mubr.f32.gmra.mxu0 %v2237
        %v2239 = vpop.f32.mrf.mxu0
        %v2240 = vadd.f32 %v2111, %v2239
        %v2241 = vpop.f32.mrf.mxu0
        %2242 = vmatprep.mubr.f32.mxu0 0.0
        %v2243 = vand.u32 %v322, 4294901760
        %2244 = vmatmul.mubr.f32.gmra.mxu0 %v2243
        %v2245 = vpop.f32.mrf.mxu0
        %v2246 = vadd.f32 %v2117, %v2245
        %v2247 = vpop.f32.mrf.mxu0
        %2248 = vmatprep.mubr.f32.mxu0 0.0
        %v2249 = vand.u32 %v324, 4294901760
        %2250 = vmatmul.mubr.f32.gmra.mxu0 %v2249
        %v2251 = vpop.f32.mrf.mxu0
        %v2252 = vadd.f32 %v2123, %v2251
        %v2253 = vpop.f32.mrf.mxu0
        %2254 = vmatprep.mubr.f32.mxu0 0.0
        %v2255 = vand.u32 %v326, 4294901760
        %2256 = vmatmul.mubr.f32.gmra.mxu0 %v2255
        %v2257 = vpop.f32.mrf.mxu0
        %v2258 = vadd.f32 %v2129, %v2257
        %v2259 = vpop.f32.mrf.mxu0
        %2260 = vmatprep.mubr.f32.mxu0 0.0
        %v2261 = vand.u32 %v328, 4294901760
        %2262 = vmatmul.mubr.f32.gmra.mxu0 %v2261
        %v2263 = vpop.f32.mrf.mxu0
        %v2264 = vadd.f32 %v2135, %v2263
        %v2265 = vpop.f32.mrf.mxu0
        %2266 = vmatprep.mubr.f32.mxu0 0.0
        %v2267 = vand.u32 %v330, 4294901760
        %2268 = vmatmul.mubr.f32.gmra.mxu0 %v2267
        %v2269 = vpop.f32.mrf.mxu0
        %v2270 = vadd.f32 %v2141, %v2269
        %v2271 = vpop.f32.mrf.mxu0
        %2272 = vdwg.mxu0
        %2273 = vmatprep.subr.mxu0 0.0
        %v2274 = vand.u32 %v354, 4294901760
        %2275 = vmatpush1.msra.mxu0 %v2274
        %2276 = vmatprep.subr.mxu0 0.0
        %v2277 = vand.u32 %v353, 4294901760
        %2278 = vmatpush1.msra.mxu0 %v2277
        %2279 = vmatprep.subr.mxu0 0.0
        %v2280 = vand.u32 %v352, 4294901760
        %2281 = vmatpush1.msra.mxu0 %v2280
        %2282 = vmatprep.subr.mxu0 0.0
        %v2283 = vand.u32 %v351, 4294901760
        %2284 = vmatpush1.msra.mxu0 %v2283
        %2285 = vmatprep.subr.mxu0 0.0
        %v2286 = vand.u32 %v350, 4294901760
        %2287 = vmatpush1.msra.mxu0 %v2286
        %2288 = vmatprep.subr.mxu0 0.0
        %v2289 = vand.u32 %v349, 4294901760
        %2290 = vmatpush1.msra.mxu0 %v2289
        %2291 = vmatprep.subr.mxu0 0.0
        %v2292 = vand.u32 %v348, 4294901760
        %2293 = vmatpush1.msra.mxu0 %v2292
        %2294 = vmatprep.subr.mxu0 0.0
        %v2295 = vand.u32 %v347, 4294901760
        %2296 = vmatpush1.msra.mxu0 %v2295
        %2297 = vmatprep.subr.mxu0 0.0
        %v2298 = vand.u32 %v346, 4294901760
        %2299 = vmatpush1.msra.mxu0 %v2298
        %2300 = vmatprep.subr.mxu0 0.0
        %v2301 = vand.u32 %v345, 4294901760
        %2302 = vmatpush1.msra.mxu0 %v2301
        %2303 = vmatprep.subr.mxu0 0.0
        %v2304 = vand.u32 %v344, 4294901760
        %2305 = vmatpush1.msra.mxu0 %v2304
        %2306 = vmatprep.subr.mxu0 0.0
        %v2307 = vand.u32 %v343, 4294901760
        %2308 = vmatpush1.msra.mxu0 %v2307
        %2309 = vmatprep.subr.mxu0 0.0
        %v2310 = vand.u32 %v342, 4294901760
        %2311 = vmatpush1.msra.mxu0 %v2310
        %2312 = vmatprep.subr.mxu0 0.0
        %v2313 = vand.u32 %v341, 4294901760
        %2314 = vmatpush1.msra.mxu0 %v2313
        %2315 = vmatprep.subr.mxu0 0.0
        %v2316 = vand.u32 %v340, 4294901760
        %2317 = vmatpush1.msra.mxu0 %v2316
        %2318 = vmatprep.subr.mxu0 0.0
        %v2319 = vand.u32 %v339, 4294901760
        %2320 = vmatpush1.msra.mxu0 %v2319
        %2321 = vmatprep.subr.mxu0 0.0
        %2322 = vmatpush2.msra.mxu0 0.0
        %2323 = vmatprep.subr.mxu0 0.0
        %2324 = vmatpush2.msra.mxu0 0.0
        %2325 = vmatprep.subr.mxu0 0.0
        %2326 = vmatpush2.msra.mxu0 0.0
        %2327 = vmatprep.subr.mxu0 0.0
        %2328 = vmatpush2.msra.mxu0 0.0
        %2329 = vmatprep.subr.mxu0 0.0
        %2330 = vmatpush2.msra.mxu0 0.0
        %2331 = vmatprep.subr.mxu0 0.0
        %2332 = vmatpush2.msra.mxu0 0.0
        %2333 = vmatprep.subr.mxu0 0.0
        %2334 = vmatpush2.msra.mxu0 0.0
        %2335 = vmatprep.subr.mxu0 0.0
        %2336 = vmatpush2.msra.mxu0 0.0
        %2337 = vmatprep.subr.mxu0 0.0
        %2338 = vmatpush2.msra.mxu0 0.0
        %2339 = vmatprep.subr.mxu0 0.0
        %2340 = vmatpush2.msra.mxu0 0.0
        %2341 = vmatprep.subr.mxu0 0.0
        %2342 = vmatpush2.msra.mxu0 0.0
        %2343 = vmatprep.subr.mxu0 0.0
        %2344 = vmatpush2.msra.mxu0 0.0
        %2345 = vmatprep.subr.mxu0 0.0
        %2346 = vmatpush2.msra.mxu0 0.0
        %2347 = vmatprep.subr.mxu0 0.0
        %2348 = vmatpush2.msra.mxu0 0.0
        %2349 = vmatprep.subr.mxu0 0.0
        %2350 = vmatpush2.msra.mxu0 0.0
        %2351 = vmatprep.subr.mxu0 0.0
        %2352 = vmatpush2.msra.mxu0 0.0
        %2353 = vmatprep.mubr.f32.mxu0 0.0
        %v2354 = vand.u32 %v338, 4294901760
        %v2355 = vsub.f32 %v338, %v2354
        %v2356 = vand.u32 %v2355, 4294901760
        %v2357 = vsub.f32 %v2355, %v2356
        %v2358 = vand.u32 %v2357, 4294901760
        %2359 = vmatmul.mubr.f32.gmra.mxu0 %v2358
        %v2360 = vpop.f32.mrf.mxu0
        %v2361 = vadd.f32 0.0, %v2360
        %v2362 = vpop.f32.mrf.mxu0
        %2363 = vmatprep.mubr.f32.mxu0 0.0
        %v2364 = vand.u32 %v317, 4294901760
        %v2365 = vsub.f32 %v317, %v2364
        %v2366 = vand.u32 %v2365, 4294901760
        %v2367 = vsub.f32 %v2365, %v2366
        %v2368 = vand.u32 %v2367, 4294901760
        %2369 = vmatmul.mubr.f32.gmra.mxu0 %v2368
        %v2370 = vpop.f32.mrf.mxu0
        %v2371 = vadd.f32 0.0, %v2370
        %v2372 = vpop.f32.mrf.mxu0
        %2373 = vmatprep.mubr.f32.mxu0 0.0
        %v2374 = vand.u32 %v319, 4294901760
        %v2375 = vsub.f32 %v319, %v2374
        %v2376 = vand.u32 %v2375, 4294901760
        %v2377 = vsub.f32 %v2375, %v2376
        %v2378 = vand.u32 %v2377, 4294901760
        %2379 = vmatmul.mubr.f32.gmra.mxu0 %v2378
        %v2380 = vpop.f32.mrf.mxu0
        %v2381 = vadd.f32 0.0, %v2380
        %v2382 = vpop.f32.mrf.mxu0
        %2383 = vmatprep.mubr.f32.mxu0 0.0
        %v2384 = vand.u32 %v321, 4294901760
        %v2385 = vsub.f32 %v321, %v2384
        %v2386 = vand.u32 %v2385, 4294901760
        %v2387 = vsub.f32 %v2385, %v2386
        %v2388 = vand.u32 %v2387, 4294901760
        %2389 = vmatmul.mubr.f32.gmra.mxu0 %v2388
        %v2390 = vpop.f32.mrf.mxu0
        %v2391 = vadd.f32 0.0, %v2390
        %v2392 = vpop.f32.mrf.mxu0
        %2393 = vmatprep.mubr.f32.mxu0 0.0
        %v2394 = vand.u32 %v323, 4294901760
        %v2395 = vsub.f32 %v323, %v2394
        %v2396 = vand.u32 %v2395, 4294901760
        %v2397 = vsub.f32 %v2395, %v2396
        %v2398 = vand.u32 %v2397, 4294901760
        %2399 = vmatmul.mubr.f32.gmra.mxu0 %v2398
        %v2400 = vpop.f32.mrf.mxu0
        %v2401 = vadd.f32 0.0, %v2400
        %v2402 = vpop.f32.mrf.mxu0
        %2403 = vmatprep.mubr.f32.mxu0 0.0
        %v2404 = vand.u32 %v325, 4294901760
        %v2405 = vsub.f32 %v325, %v2404
        %v2406 = vand.u32 %v2405, 4294901760
        %v2407 = vsub.f32 %v2405, %v2406
        %v2408 = vand.u32 %v2407, 4294901760
        %2409 = vmatmul.mubr.f32.gmra.mxu0 %v2408
        %v2410 = vpop.f32.mrf.mxu0
        %v2411 = vadd.f32 0.0, %v2410
        %v2412 = vpop.f32.mrf.mxu0
        %2413 = vmatprep.mubr.f32.mxu0 0.0
        %v2414 = vand.u32 %v327, 4294901760
        %v2415 = vsub.f32 %v327, %v2414
        %v2416 = vand.u32 %v2415, 4294901760
        %v2417 = vsub.f32 %v2415, %v2416
        %v2418 = vand.u32 %v2417, 4294901760
        %2419 = vmatmul.mubr.f32.gmra.mxu0 %v2418
        %v2420 = vpop.f32.mrf.mxu0
        %v2421 = vadd.f32 0.0, %v2420
        %v2422 = vpop.f32.mrf.mxu0
        %2423 = vmatprep.mubr.f32.mxu0 0.0
        %v2424 = vand.u32 %v329, 4294901760
        %v2425 = vsub.f32 %v329, %v2424
        %v2426 = vand.u32 %v2425, 4294901760
        %v2427 = vsub.f32 %v2425, %v2426
        %v2428 = vand.u32 %v2427, 4294901760
        %2429 = vmatmul.mubr.f32.gmra.mxu0 %v2428
        %v2430 = vpop.f32.mrf.mxu0
        %v2431 = vadd.f32 0.0, %v2430
        %v2432 = vpop.f32.mrf.mxu0
        %2433 = vdwg.mxu0
        %2434 = vmatprep.subr.mxu0 0.0
        %v2435 = vand.u32 %v354, 4294901760
        %v2436 = vsub.f32 %v354, %v2435
        %v2437 = vand.u32 %v2436, 4294901760
        %v2438 = vsub.f32 %v2436, %v2437
        %v2439 = vand.u32 %v2438, 4294901760
        %2440 = vmatpush1.msra.mxu0 %v2439
        %2441 = vmatprep.subr.mxu0 0.0
        %v2442 = vand.u32 %v353, 4294901760
        %v2443 = vsub.f32 %v353, %v2442
        %v2444 = vand.u32 %v2443, 4294901760
        %v2445 = vsub.f32 %v2443, %v2444
        %v2446 = vand.u32 %v2445, 4294901760
        %2447 = vmatpush1.msra.mxu0 %v2446
        %2448 = vmatprep.subr.mxu0 0.0
        %v2449 = vand.u32 %v352, 4294901760
        %v2450 = vsub.f32 %v352, %v2449
        %v2451 = vand.u32 %v2450, 4294901760
        %v2452 = vsub.f32 %v2450, %v2451
        %v2453 = vand.u32 %v2452, 4294901760
        %2454 = vmatpush1.msra.mxu0 %v2453
        %2455 = vmatprep.subr.mxu0 0.0
        %v2456 = vand.u32 %v351, 4294901760
        %v2457 = vsub.f32 %v351, %v2456
        %v2458 = vand.u32 %v2457, 4294901760
        %v2459 = vsub.f32 %v2457, %v2458
        %v2460 = vand.u32 %v2459, 4294901760
        %2461 = vmatpush1.msra.mxu0 %v2460
        %2462 = vmatprep.subr.mxu0 0.0
        %v2463 = vand.u32 %v350, 4294901760
        %v2464 = vsub.f32 %v350, %v2463
        %v2465 = vand.u32 %v2464, 4294901760
        %v2466 = vsub.f32 %v2464, %v2465
        %v2467 = vand.u32 %v2466, 4294901760
        %2468 = vmatpush1.msra.mxu0 %v2467
        %2469 = vmatprep.subr.mxu0 0.0
        %v2470 = vand.u32 %v349, 4294901760
        %v2471 = vsub.f32 %v349, %v2470
        %v2472 = vand.u32 %v2471, 4294901760
        %v2473 = vsub.f32 %v2471, %v2472
        %v2474 = vand.u32 %v2473, 4294901760
        %2475 = vmatpush1.msra.mxu0 %v2474
        %2476 = vmatprep.subr.mxu0 0.0
        %v2477 = vand.u32 %v348, 4294901760
        %v2478 = vsub.f32 %v348, %v2477
        %v2479 = vand.u32 %v2478, 4294901760
        %v2480 = vsub.f32 %v2478, %v2479
        %v2481 = vand.u32 %v2480, 4294901760
        %2482 = vmatpush1.msra.mxu0 %v2481
        %2483 = vmatprep.subr.mxu0 0.0
        %v2484 = vand.u32 %v347, 4294901760
        %v2485 = vsub.f32 %v347, %v2484
        %v2486 = vand.u32 %v2485, 4294901760
        %v2487 = vsub.f32 %v2485, %v2486
        %v2488 = vand.u32 %v2487, 4294901760
        %2489 = vmatpush1.msra.mxu0 %v2488
        %2490 = vmatprep.subr.mxu0 0.0
        %v2491 = vand.u32 %v346, 4294901760
        %v2492 = vsub.f32 %v346, %v2491
        %v2493 = vand.u32 %v2492, 4294901760
        %v2494 = vsub.f32 %v2492, %v2493
        %v2495 = vand.u32 %v2494, 4294901760
        %2496 = vmatpush1.msra.mxu0 %v2495
        %2497 = vmatprep.subr.mxu0 0.0
        %v2498 = vand.u32 %v345, 4294901760
        %v2499 = vsub.f32 %v345, %v2498
        %v2500 = vand.u32 %v2499, 4294901760
        %v2501 = vsub.f32 %v2499, %v2500
        %v2502 = vand.u32 %v2501, 4294901760
        %2503 = vmatpush1.msra.mxu0 %v2502
        %2504 = vmatprep.subr.mxu0 0.0
        %v2505 = vand.u32 %v344, 4294901760
        %v2506 = vsub.f32 %v344, %v2505
        %v2507 = vand.u32 %v2506, 4294901760
        %v2508 = vsub.f32 %v2506, %v2507
        %v2509 = vand.u32 %v2508, 4294901760
        %2510 = vmatpush1.msra.mxu0 %v2509
        %2511 = vmatprep.subr.mxu0 0.0
        %v2512 = vand.u32 %v343, 4294901760
        %v2513 = vsub.f32 %v343, %v2512
        %v2514 = vand.u32 %v2513, 4294901760
        %v2515 = vsub.f32 %v2513, %v2514
        %v2516 = vand.u32 %v2515, 4294901760
        %2517 = vmatpush1.msra.mxu0 %v2516
        %2518 = vmatprep.subr.mxu0 0.0
        %v2519 = vand.u32 %v342, 4294901760
        %v2520 = vsub.f32 %v342, %v2519
        %v2521 = vand.u32 %v2520, 4294901760
        %v2522 = vsub.f32 %v2520, %v2521
        %v2523 = vand.u32 %v2522, 4294901760
        %2524 = vmatpush1.msra.mxu0 %v2523
        %2525 = vmatprep.subr.mxu0 0.0
        %v2526 = vand.u32 %v341, 4294901760
        %v2527 = vsub.f32 %v341, %v2526
        %v2528 = vand.u32 %v2527, 4294901760
        %v2529 = vsub.f32 %v2527, %v2528
        %v2530 = vand.u32 %v2529, 4294901760
        %2531 = vmatpush1.msra.mxu0 %v2530
        %2532 = vmatprep.subr.mxu0 0.0
        %v2533 = vand.u32 %v340, 4294901760
        %v2534 = vsub.f32 %v340, %v2533
        %v2535 = vand.u32 %v2534, 4294901760
        %v2536 = vsub.f32 %v2534, %v2535
        %v2537 = vand.u32 %v2536, 4294901760
        %2538 = vmatpush1.msra.mxu0 %v2537
        %2539 = vmatprep.subr.mxu0 0.0
        %v2540 = vand.u32 %v339, 4294901760
        %v2541 = vsub.f32 %v339, %v2540
        %v2542 = vand.u32 %v2541, 4294901760
        %v2543 = vsub.f32 %v2541, %v2542
        %v2544 = vand.u32 %v2543, 4294901760
        %2545 = vmatpush1.msra.mxu0 %v2544
        %2546 = vmatprep.subr.mxu0 0.0
        %2547 = vmatpush2.msra.mxu0 0.0
        %2548 = vmatprep.subr.mxu0 0.0
        %2549 = vmatpush2.msra.mxu0 0.0
        %2550 = vmatprep.subr.mxu0 0.0
        %2551 = vmatpush2.msra.mxu0 0.0
        %2552 = vmatprep.subr.mxu0 0.0
        %2553 = vmatpush2.msra.mxu0 0.0
        %2554 = vmatprep.subr.mxu0 0.0
        %2555 = vmatpush2.msra.mxu0 0.0
        %2556 = vmatprep.subr.mxu0 0.0
        %2557 = vmatpush2.msra.mxu0 0.0
        %2558 = vmatprep.subr.mxu0 0.0
        %2559 = vmatpush2.msra.mxu0 0.0
        %2560 = vmatprep.subr.mxu0 0.0
        %2561 = vmatpush2.msra.mxu0 0.0
        %2562 = vmatprep.subr.mxu0 0.0
        %2563 = vmatpush2.msra.mxu0 0.0
        %2564 = vmatprep.subr.mxu0 0.0
        %2565 = vmatpush2.msra.mxu0 0.0
        %2566 = vmatprep.subr.mxu0 0.0
        %2567 = vmatpush2.msra.mxu0 0.0
        %2568 = vmatprep.subr.mxu0 0.0
        %2569 = vmatpush2.msra.mxu0 0.0
        %2570 = vmatprep.subr.mxu0 0.0
        %2571 = vmatpush2.msra.mxu0 0.0
        %2572 = vmatprep.subr.mxu0 0.0
        %2573 = vmatpush2.msra.mxu0 0.0
        %2574 = vmatprep.subr.mxu0 0.0
        %2575 = vmatpush2.msra.mxu0 0.0
        %2576 = vmatprep.subr.mxu0 0.0
        %2577 = vmatpush2.msra.mxu0 0.0
        %2578 = vmatprep.mubr.f32.mxu0 0.0
        %v2579 = vand.u32 %v338, 4294901760
        %2580 = vmatmul.mubr.f32.gmra.mxu0 %v2579
        %v2581 = vpop.f32.mrf.mxu0
        %v2582 = vadd.f32 %v2361, %v2581
        %v2583 = vpop.f32.mrf.mxu0
        %2584 = vmatprep.mubr.f32.mxu0 0.0
        %v2585 = vand.u32 %v317, 4294901760
        %2586 = vmatmul.mubr.f32.gmra.mxu0 %v2585
        %v2587 = vpop.f32.mrf.mxu0
        %v2588 = vadd.f32 %v2371, %v2587
        %v2589 = vpop.f32.mrf.mxu0
        %2590 = vmatprep.mubr.f32.mxu0 0.0
        %v2591 = vand.u32 %v319, 4294901760
        %2592 = vmatmul.mubr.f32.gmra.mxu0 %v2591
        %v2593 = vpop.f32.mrf.mxu0
        %v2594 = vadd.f32 %v2381, %v2593
        %v2595 = vpop.f32.mrf.mxu0
        %2596 = vmatprep.mubr.f32.mxu0 0.0
        %v2597 = vand.u32 %v321, 4294901760
        %2598 = vmatmul.mubr.f32.gmra.mxu0 %v2597
        %v2599 = vpop.f32.mrf.mxu0
        %v2600 = vadd.f32 %v2391, %v2599
        %v2601 = vpop.f32.mrf.mxu0
        %2602 = vmatprep.mubr.f32.mxu0 0.0
        %v2603 = vand.u32 %v323, 4294901760
        %2604 = vmatmul.mubr.f32.gmra.mxu0 %v2603
        %v2605 = vpop.f32.mrf.mxu0
        %v2606 = vadd.f32 %v2401, %v2605
        %v2607 = vpop.f32.mrf.mxu0
        %2608 = vmatprep.mubr.f32.mxu0 0.0
        %v2609 = vand.u32 %v325, 4294901760
        %2610 = vmatmul.mubr.f32.gmra.mxu0 %v2609
        %v2611 = vpop.f32.mrf.mxu0
        %v2612 = vadd.f32 %v2411, %v2611
        %v2613 = vpop.f32.mrf.mxu0
        %2614 = vmatprep.mubr.f32.mxu0 0.0
        %v2615 = vand.u32 %v327, 4294901760
        %2616 = vmatmul.mubr.f32.gmra.mxu0 %v2615
        %v2617 = vpop.f32.mrf.mxu0
        %v2618 = vadd.f32 %v2421, %v2617
        %v2619 = vpop.f32.mrf.mxu0
        %2620 = vmatprep.mubr.f32.mxu0 0.0
        %v2621 = vand.u32 %v329, 4294901760
        %2622 = vmatmul.mubr.f32.gmra.mxu0 %v2621
        %v2623 = vpop.f32.mrf.mxu0
        %v2624 = vadd.f32 %v2431, %v2623
        %v2625 = vpop.f32.mrf.mxu0
        %2626 = vdwg.mxu0
        %2627 = vmatprep.subr.mxu0 0.0
        %v2628 = vand.u32 %v354, 4294901760
        %v2629 = vsub.f32 %v354, %v2628
        %2630 = vmatpush1.msra.mxu0 %v2629
        %2631 = vmatprep.subr.mxu0 0.0
        %v2632 = vand.u32 %v353, 4294901760
        %v2633 = vsub.f32 %v353, %v2632
        %2634 = vmatpush1.msra.mxu0 %v2633
        %2635 = vmatprep.subr.mxu0 0.0
        %v2636 = vand.u32 %v352, 4294901760
        %v2637 = vsub.f32 %v352, %v2636
        %2638 = vmatpush1.msra.mxu0 %v2637
        %2639 = vmatprep.subr.mxu0 0.0
        %v2640 = vand.u32 %v351, 4294901760
        %v2641 = vsub.f32 %v351, %v2640
        %2642 = vmatpush1.msra.mxu0 %v2641
        %2643 = vmatprep.subr.mxu0 0.0
        %v2644 = vand.u32 %v350, 4294901760
        %v2645 = vsub.f32 %v350, %v2644
        %2646 = vmatpush1.msra.mxu0 %v2645
        %2647 = vmatprep.subr.mxu0 0.0
        %v2648 = vand.u32 %v349, 4294901760
        %v2649 = vsub.f32 %v349, %v2648
        %2650 = vmatpush1.msra.mxu0 %v2649
        %2651 = vmatprep.subr.mxu0 0.0
        %v2652 = vand.u32 %v348, 4294901760
        %v2653 = vsub.f32 %v348, %v2652
        %2654 = vmatpush1.msra.mxu0 %v2653
        %2655 = vmatprep.subr.mxu0 0.0
        %v2656 = vand.u32 %v347, 4294901760
        %v2657 = vsub.f32 %v347, %v2656
        %2658 = vmatpush1.msra.mxu0 %v2657
        %2659 = vmatprep.subr.mxu0 0.0
        %v2660 = vand.u32 %v346, 4294901760
        %v2661 = vsub.f32 %v346, %v2660
        %2662 = vmatpush1.msra.mxu0 %v2661
        %2663 = vmatprep.subr.mxu0 0.0
        %v2664 = vand.u32 %v345, 4294901760
        %v2665 = vsub.f32 %v345, %v2664
        %2666 = vmatpush1.msra.mxu0 %v2665
        %2667 = vmatprep.subr.mxu0 0.0
        %v2668 = vand.u32 %v344, 4294901760
        %v2669 = vsub.f32 %v344, %v2668
        %2670 = vmatpush1.msra.mxu0 %v2669
        %2671 = vmatprep.subr.mxu0 0.0
        %v2672 = vand.u32 %v343, 4294901760
        %v2673 = vsub.f32 %v343, %v2672
        %2674 = vmatpush1.msra.mxu0 %v2673
        %2675 = vmatprep.subr.mxu0 0.0
        %v2676 = vand.u32 %v342, 4294901760
        %v2677 = vsub.f32 %v342, %v2676
        %2678 = vmatpush1.msra.mxu0 %v2677
        %2679 = vmatprep.subr.mxu0 0.0
        %v2680 = vand.u32 %v341, 4294901760
        %v2681 = vsub.f32 %v341, %v2680
        %2682 = vmatpush1.msra.mxu0 %v2681
        %2683 = vmatprep.subr.mxu0 0.0
        %v2684 = vand.u32 %v340, 4294901760
        %v2685 = vsub.f32 %v340, %v2684
        %2686 = vmatpush1.msra.mxu0 %v2685
        %2687 = vmatprep.subr.mxu0 0.0
        %v2688 = vand.u32 %v339, 4294901760
        %v2689 = vsub.f32 %v339, %v2688
        %2690 = vmatpush1.msra.mxu0 %v2689
        %2691 = vmatprep.subr.mxu0 0.0
        %2692 = vmatpush2.msra.mxu0 0.0
        %2693 = vmatprep.subr.mxu0 0.0
        %2694 = vmatpush2.msra.mxu0 0.0
        %2695 = vmatprep.subr.mxu0 0.0
        %2696 = vmatpush2.msra.mxu0 0.0
        %2697 = vmatprep.subr.mxu0 0.0
        %2698 = vmatpush2.msra.mxu0 0.0
        %2699 = vmatprep.subr.mxu0 0.0
        %2700 = vmatpush2.msra.mxu0 0.0
        %2701 = vmatprep.subr.mxu0 0.0
        %2702 = vmatpush2.msra.mxu0 0.0
        %2703 = vmatprep.subr.mxu0 0.0
        %2704 = vmatpush2.msra.mxu0 0.0
        %2705 = vmatprep.subr.mxu0 0.0
        %2706 = vmatpush2.msra.mxu0 0.0
        %2707 = vmatprep.subr.mxu0 0.0
        %2708 = vmatpush2.msra.mxu0 0.0
        %2709 = vmatprep.subr.mxu0 0.0
        %2710 = vmatpush2.msra.mxu0 0.0
        %2711 = vmatprep.subr.mxu0 0.0
        %2712 = vmatpush2.msra.mxu0 0.0
        %2713 = vmatprep.subr.mxu0 0.0
        %2714 = vmatpush2.msra.mxu0 0.0
        %2715 = vmatprep.subr.mxu0 0.0
        %2716 = vmatpush2.msra.mxu0 0.0
        %2717 = vmatprep.subr.mxu0 0.0
        %2718 = vmatpush2.msra.mxu0 0.0
        %2719 = vmatprep.subr.mxu0 0.0
        %2720 = vmatpush2.msra.mxu0 0.0
        %2721 = vmatprep.subr.mxu0 0.0
        %2722 = vmatpush2.msra.mxu0 0.0
        %2723 = vmatprep.mubr.f32.mxu0 0.0
        %v2724 = vand.u32 %v338, 4294901760
        %v2725 = vsub.f32 %v338, %v2724
        %2726 = vmatmul.mubr.f32.gmra.mxu0 %v2725
        %v2727 = vpop.f32.mrf.mxu0
        %v2728 = vadd.f32 %v2582, %v2727
        %v2729 = vpop.f32.mrf.mxu0
        %2730 = vmatprep.mubr.f32.mxu0 0.0
        %v2731 = vand.u32 %v317, 4294901760
        %v2732 = vsub.f32 %v317, %v2731
        %2733 = vmatmul.mubr.f32.gmra.mxu0 %v2732
        %v2734 = vpop.f32.mrf.mxu0
        %v2735 = vadd.f32 %v2588, %v2734
        %v2736 = vpop.f32.mrf.mxu0
        %2737 = vmatprep.mubr.f32.mxu0 0.0
        %v2738 = vand.u32 %v319, 4294901760
        %v2739 = vsub.f32 %v319, %v2738
        %2740 = vmatmul.mubr.f32.gmra.mxu0 %v2739
        %v2741 = vpop.f32.mrf.mxu0
        %v2742 = vadd.f32 %v2594, %v2741
        %v2743 = vpop.f32.mrf.mxu0
        %2744 = vmatprep.mubr.f32.mxu0 0.0
        %v2745 = vand.u32 %v321, 4294901760
        %v2746 = vsub.f32 %v321, %v2745
        %2747 = vmatmul.mubr.f32.gmra.mxu0 %v2746
        %v2748 = vpop.f32.mrf.mxu0
        %v2749 = vadd.f32 %v2600, %v2748
        %v2750 = vpop.f32.mrf.mxu0
        %2751 = vmatprep.mubr.f32.mxu0 0.0
        %v2752 = vand.u32 %v323, 4294901760
        %v2753 = vsub.f32 %v323, %v2752
        %2754 = vmatmul.mubr.f32.gmra.mxu0 %v2753
        %v2755 = vpop.f32.mrf.mxu0
        %v2756 = vadd.f32 %v2606, %v2755
        %v2757 = vpop.f32.mrf.mxu0
        %2758 = vmatprep.mubr.f32.mxu0 0.0
        %v2759 = vand.u32 %v325, 4294901760
        %v2760 = vsub.f32 %v325, %v2759
        %2761 = vmatmul.mubr.f32.gmra.mxu0 %v2760
        %v2762 = vpop.f32.mrf.mxu0
        %v2763 = vadd.f32 %v2612, %v2762
        %v2764 = vpop.f32.mrf.mxu0
        %2765 = vmatprep.mubr.f32.mxu0 0.0
        %v2766 = vand.u32 %v327, 4294901760
        %v2767 = vsub.f32 %v327, %v2766
        %2768 = vmatmul.mubr.f32.gmra.mxu0 %v2767
        %v2769 = vpop.f32.mrf.mxu0
        %v2770 = vadd.f32 %v2618, %v2769
        %v2771 = vpop.f32.mrf.mxu0
        %2772 = vmatprep.mubr.f32.mxu0 0.0
        %v2773 = vand.u32 %v329, 4294901760
        %v2774 = vsub.f32 %v329, %v2773
        %2775 = vmatmul.mubr.f32.gmra.mxu0 %v2774
        %v2776 = vpop.f32.mrf.mxu0
        %v2777 = vadd.f32 %v2624, %v2776
        %v2778 = vpop.f32.mrf.mxu0
        %2779 = vdwg.mxu0
        %2780 = vmatprep.subr.mxu0 0.0
        %v2781 = vand.u32 %v354, 4294901760
        %2782 = vmatpush1.msra.mxu0 %v2781
        %2783 = vmatprep.subr.mxu0 0.0
        %v2784 = vand.u32 %v353, 4294901760
        %2785 = vmatpush1.msra.mxu0 %v2784
        %2786 = vmatprep.subr.mxu0 0.0
        %v2787 = vand.u32 %v352, 4294901760
        %2788 = vmatpush1.msra.mxu0 %v2787
        %2789 = vmatprep.subr.mxu0 0.0
        %v2790 = vand.u32 %v351, 4294901760
        %2791 = vmatpush1.msra.mxu0 %v2790
        %2792 = vmatprep.subr.mxu0 0.0
        %v2793 = vand.u32 %v350, 4294901760
        %2794 = vmatpush1.msra.mxu0 %v2793
        %2795 = vmatprep.subr.mxu0 0.0
        %v2796 = vand.u32 %v349, 4294901760
        %2797 = vmatpush1.msra.mxu0 %v2796
        %2798 = vmatprep.subr.mxu0 0.0
        %v2799 = vand.u32 %v348, 4294901760
        %2800 = vmatpush1.msra.mxu0 %v2799
        %2801 = vmatprep.subr.mxu0 0.0
        %v2802 = vand.u32 %v347, 4294901760
        %2803 = vmatpush1.msra.mxu0 %v2802
        %2804 = vmatprep.subr.mxu0 0.0
        %v2805 = vand.u32 %v346, 4294901760
        %2806 = vmatpush1.msra.mxu0 %v2805
        %2807 = vmatprep.subr.mxu0 0.0
        %v2808 = vand.u32 %v345, 4294901760
        %2809 = vmatpush1.msra.mxu0 %v2808
        %2810 = vmatprep.subr.mxu0 0.0
        %v2811 = vand.u32 %v344, 4294901760
        %2812 = vmatpush1.msra.mxu0 %v2811
        %2813 = vmatprep.subr.mxu0 0.0
        %v2814 = vand.u32 %v343, 4294901760
        %2815 = vmatpush1.msra.mxu0 %v2814
        %2816 = vmatprep.subr.mxu0 0.0
        %v2817 = vand.u32 %v342, 4294901760
        %2818 = vmatpush1.msra.mxu0 %v2817
        %2819 = vmatprep.subr.mxu0 0.0
        %v2820 = vand.u32 %v341, 4294901760
        %2821 = vmatpush1.msra.mxu0 %v2820
        %2822 = vmatprep.subr.mxu0 0.0
        %v2823 = vand.u32 %v340, 4294901760
        %2824 = vmatpush1.msra.mxu0 %v2823
        %2825 = vmatprep.subr.mxu0 0.0
        %v2826 = vand.u32 %v339, 4294901760
        %2827 = vmatpush1.msra.mxu0 %v2826
        %2828 = vmatprep.subr.mxu0 0.0
        %2829 = vmatpush2.msra.mxu0 0.0
        %2830 = vmatprep.subr.mxu0 0.0
        %2831 = vmatpush2.msra.mxu0 0.0
        %2832 = vmatprep.subr.mxu0 0.0
        %2833 = vmatpush2.msra.mxu0 0.0
        %2834 = vmatprep.subr.mxu0 0.0
        %2835 = vmatpush2.msra.mxu0 0.0
        %2836 = vmatprep.subr.mxu0 0.0
        %2837 = vmatpush2.msra.mxu0 0.0
        %2838 = vmatprep.subr.mxu0 0.0
        %2839 = vmatpush2.msra.mxu0 0.0
        %2840 = vmatprep.subr.mxu0 0.0
        %2841 = vmatpush2.msra.mxu0 0.0
        %2842 = vmatprep.subr.mxu0 0.0
        %2843 = vmatpush2.msra.mxu0 0.0
        %2844 = vmatprep.subr.mxu0 0.0
        %2845 = vmatpush2.msra.mxu0 0.0
        %2846 = vmatprep.subr.mxu0 0.0
        %2847 = vmatpush2.msra.mxu0 0.0
        %2848 = vmatprep.subr.mxu0 0.0
        %2849 = vmatpush2.msra.mxu0 0.0
        %2850 = vmatprep.subr.mxu0 0.0
        %2851 = vmatpush2.msra.mxu0 0.0
        %2852 = vmatprep.subr.mxu0 0.0
        %2853 = vmatpush2.msra.mxu0 0.0
        %2854 = vmatprep.subr.mxu0 0.0
        %2855 = vmatpush2.msra.mxu0 0.0
        %2856 = vmatprep.subr.mxu0 0.0
        %2857 = vmatpush2.msra.mxu0 0.0
        %2858 = vmatprep.subr.mxu0 0.0
        %2859 = vmatpush2.msra.mxu0 0.0
        %2860 = vmatprep.mubr.f32.mxu0 0.0
        %v2861 = vand.u32 %v338, 4294901760
        %v2862 = vsub.f32 %v338, %v2861
        %v2863 = vand.u32 %v2862, 4294901760
        %2864 = vmatmul.mubr.f32.gmra.mxu0 %v2863
        %v2865 = vpop.f32.mrf.mxu0
        %v2866 = vadd.f32 %v2728, %v2865
        %v2867 = vpop.f32.mrf.mxu0
        %2868 = vmatprep.mubr.f32.mxu0 0.0
        %v2869 = vand.u32 %v317, 4294901760
        %v2870 = vsub.f32 %v317, %v2869
        %v2871 = vand.u32 %v2870, 4294901760
        %2872 = vmatmul.mubr.f32.gmra.mxu0 %v2871
        %v2873 = vpop.f32.mrf.mxu0
        %v2874 = vadd.f32 %v2735, %v2873
        %v2875 = vpop.f32.mrf.mxu0
        %2876 = vmatprep.mubr.f32.mxu0 0.0
        %v2877 = vand.u32 %v319, 4294901760
        %v2878 = vsub.f32 %v319, %v2877
        %v2879 = vand.u32 %v2878, 4294901760
        %2880 = vmatmul.mubr.f32.gmra.mxu0 %v2879
        %v2881 = vpop.f32.mrf.mxu0
        %v2882 = vadd.f32 %v2742, %v2881
        %v2883 = vpop.f32.mrf.mxu0
        %2884 = vmatprep.mubr.f32.mxu0 0.0
        %v2885 = vand.u32 %v321, 4294901760
        %v2886 = vsub.f32 %v321, %v2885
        %v2887 = vand.u32 %v2886, 4294901760
        %2888 = vmatmul.mubr.f32.gmra.mxu0 %v2887
        %v2889 = vpop.f32.mrf.mxu0
        %v2890 = vadd.f32 %v2749, %v2889
        %v2891 = vpop.f32.mrf.mxu0
        %2892 = vmatprep.mubr.f32.mxu0 0.0
        %v2893 = vand.u32 %v323, 4294901760
        %v2894 = vsub.f32 %v323, %v2893
        %v2895 = vand.u32 %v2894, 4294901760
        %2896 = vmatmul.mubr.f32.gmra.mxu0 %v2895
        %v2897 = vpop.f32.mrf.mxu0
        %v2898 = vadd.f32 %v2756, %v2897
        %v2899 = vpop.f32.mrf.mxu0
        %2900 = vmatprep.mubr.f32.mxu0 0.0
        %v2901 = vand.u32 %v325, 4294901760
        %v2902 = vsub.f32 %v325, %v2901
        %v2903 = vand.u32 %v2902, 4294901760
        %2904 = vmatmul.mubr.f32.gmra.mxu0 %v2903
        %v2905 = vpop.f32.mrf.mxu0
        %v2906 = vadd.f32 %v2763, %v2905
        %v2907 = vpop.f32.mrf.mxu0
        %2908 = vmatprep.mubr.f32.mxu0 0.0
        %v2909 = vand.u32 %v327, 4294901760
        %v2910 = vsub.f32 %v327, %v2909
        %v2911 = vand.u32 %v2910, 4294901760
        %2912 = vmatmul.mubr.f32.gmra.mxu0 %v2911
        %v2913 = vpop.f32.mrf.mxu0
        %v2914 = vadd.f32 %v2770, %v2913
        %v2915 = vpop.f32.mrf.mxu0
        %2916 = vmatprep.mubr.f32.mxu0 0.0
        %v2917 = vand.u32 %v329, 4294901760
        %v2918 = vsub.f32 %v329, %v2917
        %v2919 = vand.u32 %v2918, 4294901760
        %2920 = vmatmul.mubr.f32.gmra.mxu0 %v2919
        %v2921 = vpop.f32.mrf.mxu0
        %v2922 = vadd.f32 %v2777, %v2921
        %v2923 = vpop.f32.mrf.mxu0
        %2924 = vdwg.mxu0
        %2925 = vmatprep.subr.mxu0 0.0
        %v2926 = vand.u32 %v354, 4294901760
        %v2927 = vsub.f32 %v354, %v2926
        %v2928 = vand.u32 %v2927, 4294901760
        %2929 = vmatpush1.msra.mxu0 %v2928
        %2930 = vmatprep.subr.mxu0 0.0
        %v2931 = vand.u32 %v353, 4294901760
        %v2932 = vsub.f32 %v353, %v2931
        %v2933 = vand.u32 %v2932, 4294901760
        %2934 = vmatpush1.msra.mxu0 %v2933
        %2935 = vmatprep.subr.mxu0 0.0
        %v2936 = vand.u32 %v352, 4294901760
        %v2937 = vsub.f32 %v352, %v2936
        %v2938 = vand.u32 %v2937, 4294901760
        %2939 = vmatpush1.msra.mxu0 %v2938
        %2940 = vmatprep.subr.mxu0 0.0
        %v2941 = vand.u32 %v351, 4294901760
        %v2942 = vsub.f32 %v351, %v2941
        %v2943 = vand.u32 %v2942, 4294901760
        %2944 = vmatpush1.msra.mxu0 %v2943
        %2945 = vmatprep.subr.mxu0 0.0
        %v2946 = vand.u32 %v350, 4294901760
        %v2947 = vsub.f32 %v350, %v2946
        %v2948 = vand.u32 %v2947, 4294901760
        %2949 = vmatpush1.msra.mxu0 %v2948
        %2950 = vmatprep.subr.mxu0 0.0
        %v2951 = vand.u32 %v349, 4294901760
        %v2952 = vsub.f32 %v349, %v2951
        %v2953 = vand.u32 %v2952, 4294901760
        %2954 = vmatpush1.msra.mxu0 %v2953
        %2955 = vmatprep.subr.mxu0 0.0
        %v2956 = vand.u32 %v348, 4294901760
        %v2957 = vsub.f32 %v348, %v2956
        %v2958 = vand.u32 %v2957, 4294901760
        %2959 = vmatpush1.msra.mxu0 %v2958
        %2960 = vmatprep.subr.mxu0 0.0
        %v2961 = vand.u32 %v347, 4294901760
        %v2962 = vsub.f32 %v347, %v2961
        %v2963 = vand.u32 %v2962, 4294901760
        %2964 = vmatpush1.msra.mxu0 %v2963
        %2965 = vmatprep.subr.mxu0 0.0
        %v2966 = vand.u32 %v346, 4294901760
        %v2967 = vsub.f32 %v346, %v2966
        %v2968 = vand.u32 %v2967, 4294901760
        %2969 = vmatpush1.msra.mxu0 %v2968
        %2970 = vmatprep.subr.mxu0 0.0
        %v2971 = vand.u32 %v345, 4294901760
        %v2972 = vsub.f32 %v345, %v2971
        %v2973 = vand.u32 %v2972, 4294901760
        %2974 = vmatpush1.msra.mxu0 %v2973
        %2975 = vmatprep.subr.mxu0 0.0
        %v2976 = vand.u32 %v344, 4294901760
        %v2977 = vsub.f32 %v344, %v2976
        %v2978 = vand.u32 %v2977, 4294901760
        %2979 = vmatpush1.msra.mxu0 %v2978
        %2980 = vmatprep.subr.mxu0 0.0
        %v2981 = vand.u32 %v343, 4294901760
        %v2982 = vsub.f32 %v343, %v2981
        %v2983 = vand.u32 %v2982, 4294901760
        %2984 = vmatpush1.msra.mxu0 %v2983
        %2985 = vmatprep.subr.mxu0 0.0
        %v2986 = vand.u32 %v342, 4294901760
        %v2987 = vsub.f32 %v342, %v2986
        %v2988 = vand.u32 %v2987, 4294901760
        %2989 = vmatpush1.msra.mxu0 %v2988
        %2990 = vmatprep.subr.mxu0 0.0
        %v2991 = vand.u32 %v341, 4294901760
        %v2992 = vsub.f32 %v341, %v2991
        %v2993 = vand.u32 %v2992, 4294901760
        %2994 = vmatpush1.msra.mxu0 %v2993
        %2995 = vmatprep.subr.mxu0 0.0
        %v2996 = vand.u32 %v340, 4294901760
        %v2997 = vsub.f32 %v340, %v2996
        %v2998 = vand.u32 %v2997, 4294901760
        %2999 = vmatpush1.msra.mxu0 %v2998
        %3000 = vmatprep.subr.mxu0 0.0
        %v3001 = vand.u32 %v339, 4294901760
        %v3002 = vsub.f32 %v339, %v3001
        %v3003 = vand.u32 %v3002, 4294901760
        %3004 = vmatpush1.msra.mxu0 %v3003
        %3005 = vmatprep.subr.mxu0 0.0
        %3006 = vmatpush2.msra.mxu0 0.0
        %3007 = vmatprep.subr.mxu0 0.0
        %3008 = vmatpush2.msra.mxu0 0.0
        %3009 = vmatprep.subr.mxu0 0.0
        %3010 = vmatpush2.msra.mxu0 0.0
        %3011 = vmatprep.subr.mxu0 0.0
        %3012 = vmatpush2.msra.mxu0 0.0
        %3013 = vmatprep.subr.mxu0 0.0
        %3014 = vmatpush2.msra.mxu0 0.0
        %3015 = vmatprep.subr.mxu0 0.0
        %3016 = vmatpush2.msra.mxu0 0.0
        %3017 = vmatprep.subr.mxu0 0.0
        %3018 = vmatpush2.msra.mxu0 0.0
        %3019 = vmatprep.subr.mxu0 0.0
        %3020 = vmatpush2.msra.mxu0 0.0
        %3021 = vmatprep.subr.mxu0 0.0
        %3022 = vmatpush2.msra.mxu0 0.0
        %3023 = vmatprep.subr.mxu0 0.0
        %3024 = vmatpush2.msra.mxu0 0.0
        %3025 = vmatprep.subr.mxu0 0.0
        %3026 = vmatpush2.msra.mxu0 0.0
        %3027 = vmatprep.subr.mxu0 0.0
        %3028 = vmatpush2.msra.mxu0 0.0
        %3029 = vmatprep.subr.mxu0 0.0
        %3030 = vmatpush2.msra.mxu0 0.0
        %3031 = vmatprep.subr.mxu0 0.0
        %3032 = vmatpush2.msra.mxu0 0.0
        %3033 = vmatprep.subr.mxu0 0.0
        %3034 = vmatpush2.msra.mxu0 0.0
        %3035 = vmatprep.subr.mxu0 0.0
        %3036 = vmatpush2.msra.mxu0 0.0
        %3037 = vmatprep.mubr.f32.mxu0 0.0
        %v3038 = vand.u32 %v338, 4294901760
        %3039 = vmatmul.mubr.f32.gmra.mxu0 %v3038
        %v3040 = vpop.f32.mrf.mxu0
        %v3041 = vadd.f32 %v2866, %v3040
        %v3042 = vpop.f32.mrf.mxu0
        %3043 = vmatprep.mubr.f32.mxu0 0.0
        %v3044 = vand.u32 %v317, 4294901760
        %3045 = vmatmul.mubr.f32.gmra.mxu0 %v3044
        %v3046 = vpop.f32.mrf.mxu0
        %v3047 = vadd.f32 %v2874, %v3046
        %v3048 = vpop.f32.mrf.mxu0
        %3049 = vmatprep.mubr.f32.mxu0 0.0
        %v3050 = vand.u32 %v319, 4294901760
        %3051 = vmatmul.mubr.f32.gmra.mxu0 %v3050
        %v3052 = vpop.f32.mrf.mxu0
        %v3053 = vadd.f32 %v2882, %v3052
        %v3054 = vpop.f32.mrf.mxu0
        %3055 = vmatprep.mubr.f32.mxu0 0.0
        %v3056 = vand.u32 %v321, 4294901760
        %3057 = vmatmul.mubr.f32.gmra.mxu0 %v3056
        %v3058 = vpop.f32.mrf.mxu0
        %v3059 = vadd.f32 %v2890, %v3058
        %v3060 = vpop.f32.mrf.mxu0
        %3061 = vmatprep.mubr.f32.mxu0 0.0
        %v3062 = vand.u32 %v323, 4294901760
        %3063 = vmatmul.mubr.f32.gmra.mxu0 %v3062
        %v3064 = vpop.f32.mrf.mxu0
        %v3065 = vadd.f32 %v2898, %v3064
        %v3066 = vpop.f32.mrf.mxu0
        %3067 = vmatprep.mubr.f32.mxu0 0.0
        %v3068 = vand.u32 %v325, 4294901760
        %3069 = vmatmul.mubr.f32.gmra.mxu0 %v3068
        %v3070 = vpop.f32.mrf.mxu0
        %v3071 = vadd.f32 %v2906, %v3070
        %v3072 = vpop.f32.mrf.mxu0
        %3073 = vmatprep.mubr.f32.mxu0 0.0
        %v3074 = vand.u32 %v327, 4294901760
        %3075 = vmatmul.mubr.f32.gmra.mxu0 %v3074
        %v3076 = vpop.f32.mrf.mxu0
        %v3077 = vadd.f32 %v2914, %v3076
        %v3078 = vpop.f32.mrf.mxu0
        %3079 = vmatprep.mubr.f32.mxu0 0.0
        %v3080 = vand.u32 %v329, 4294901760
        %3081 = vmatmul.mubr.f32.gmra.mxu0 %v3080
        %v3082 = vpop.f32.mrf.mxu0
        %v3083 = vadd.f32 %v2922, %v3082
        %v3084 = vpop.f32.mrf.mxu0
        %3085 = vdwg.mxu0
        %3086 = vmatprep.subr.mxu0 0.0
        %v3087 = vand.u32 %v354, 4294901760
        %3088 = vmatpush1.msra.mxu0 %v3087
        %3089 = vmatprep.subr.mxu0 0.0
        %v3090 = vand.u32 %v353, 4294901760
        %3091 = vmatpush1.msra.mxu0 %v3090
        %3092 = vmatprep.subr.mxu0 0.0
        %v3093 = vand.u32 %v352, 4294901760
        %3094 = vmatpush1.msra.mxu0 %v3093
        %3095 = vmatprep.subr.mxu0 0.0
        %v3096 = vand.u32 %v351, 4294901760
        %3097 = vmatpush1.msra.mxu0 %v3096
        %3098 = vmatprep.subr.mxu0 0.0
        %v3099 = vand.u32 %v350, 4294901760
        %3100 = vmatpush1.msra.mxu0 %v3099
        %3101 = vmatprep.subr.mxu0 0.0
        %v3102 = vand.u32 %v349, 4294901760
        %3103 = vmatpush1.msra.mxu0 %v3102
        %3104 = vmatprep.subr.mxu0 0.0
        %v3105 = vand.u32 %v348, 4294901760
        %3106 = vmatpush1.msra.mxu0 %v3105
        %3107 = vmatprep.subr.mxu0 0.0
        %v3108 = vand.u32 %v347, 4294901760
        %3109 = vmatpush1.msra.mxu0 %v3108
        %3110 = vmatprep.subr.mxu0 0.0
        %v3111 = vand.u32 %v346, 4294901760
        %3112 = vmatpush1.msra.mxu0 %v3111
        %3113 = vmatprep.subr.mxu0 0.0
        %v3114 = vand.u32 %v345, 4294901760
        %3115 = vmatpush1.msra.mxu0 %v3114
        %3116 = vmatprep.subr.mxu0 0.0
        %v3117 = vand.u32 %v344, 4294901760
        %3118 = vmatpush1.msra.mxu0 %v3117
        %3119 = vmatprep.subr.mxu0 0.0
        %v3120 = vand.u32 %v343, 4294901760
        %3121 = vmatpush1.msra.mxu0 %v3120
        %3122 = vmatprep.subr.mxu0 0.0
        %v3123 = vand.u32 %v342, 4294901760
        %3124 = vmatpush1.msra.mxu0 %v3123
        %3125 = vmatprep.subr.mxu0 0.0
        %v3126 = vand.u32 %v341, 4294901760
        %3127 = vmatpush1.msra.mxu0 %v3126
        %3128 = vmatprep.subr.mxu0 0.0
        %v3129 = vand.u32 %v340, 4294901760
        %3130 = vmatpush1.msra.mxu0 %v3129
        %3131 = vmatprep.subr.mxu0 0.0
        %v3132 = vand.u32 %v339, 4294901760
        %3133 = vmatpush1.msra.mxu0 %v3132
        %3134 = vmatprep.subr.mxu0 0.0
        %3135 = vmatpush2.msra.mxu0 0.0
        %3136 = vmatprep.subr.mxu0 0.0
        %3137 = vmatpush2.msra.mxu0 0.0
        %3138 = vmatprep.subr.mxu0 0.0
        %3139 = vmatpush2.msra.mxu0 0.0
        %3140 = vmatprep.subr.mxu0 0.0
        %3141 = vmatpush2.msra.mxu0 0.0
        %3142 = vmatprep.subr.mxu0 0.0
        %3143 = vmatpush2.msra.mxu0 0.0
        %3144 = vmatprep.subr.mxu0 0.0
        %3145 = vmatpush2.msra.mxu0 0.0
        %3146 = vmatprep.subr.mxu0 0.0
        %3147 = vmatpush2.msra.mxu0 0.0
        %3148 = vmatprep.subr.mxu0 0.0
        %3149 = vmatpush2.msra.mxu0 0.0
        %3150 = vmatprep.subr.mxu0 0.0
        %3151 = vmatpush2.msra.mxu0 0.0
        %3152 = vmatprep.subr.mxu0 0.0
        %3153 = vmatpush2.msra.mxu0 0.0
        %3154 = vmatprep.subr.mxu0 0.0
        %3155 = vmatpush2.msra.mxu0 0.0
        %3156 = vmatprep.subr.mxu0 0.0
        %3157 = vmatpush2.msra.mxu0 0.0
        %3158 = vmatprep.subr.mxu0 0.0
        %3159 = vmatpush2.msra.mxu0 0.0
        %3160 = vmatprep.subr.mxu0 0.0
        %3161 = vmatpush2.msra.mxu0 0.0
        %3162 = vmatprep.subr.mxu0 0.0
        %3163 = vmatpush2.msra.mxu0 0.0
        %3164 = vmatprep.subr.mxu0 0.0
        %3165 = vmatpush2.msra.mxu0 0.0
        %3166 = vmatprep.mubr.f32.mxu0 0.0
        %v3167 = vand.u32 %v338, 4294901760
        %3168 = vmatmul.mubr.f32.gmra.mxu0 %v3167
        %v3169 = vpop.f32.mrf.mxu0
        %v3170 = vadd.f32 %v3041, %v3169
        %v3171 = vpop.f32.mrf.mxu0
        %3172 = vmatprep.mubr.f32.mxu0 0.0
        %v3173 = vand.u32 %v317, 4294901760
        %3174 = vmatmul.mubr.f32.gmra.mxu0 %v3173
        %v3175 = vpop.f32.mrf.mxu0
        %v3176 = vadd.f32 %v3047, %v3175
        %v3177 = vpop.f32.mrf.mxu0
        %3178 = vmatprep.mubr.f32.mxu0 0.0
        %v3179 = vand.u32 %v319, 4294901760
        %3180 = vmatmul.mubr.f32.gmra.mxu0 %v3179
        %v3181 = vpop.f32.mrf.mxu0
        %v3182 = vadd.f32 %v3053, %v3181
        %v3183 = vpop.f32.mrf.mxu0
        %3184 = vmatprep.mubr.f32.mxu0 0.0
        %v3185 = vand.u32 %v321, 4294901760
        %3186 = vmatmul.mubr.f32.gmra.mxu0 %v3185
        %v3187 = vpop.f32.mrf.mxu0
        %v3188 = vadd.f32 %v3059, %v3187
        %v3189 = vpop.f32.mrf.mxu0
        %3190 = vmatprep.mubr.f32.mxu0 0.0
        %v3191 = vand.u32 %v323, 4294901760
        %3192 = vmatmul.mubr.f32.gmra.mxu0 %v3191
        %v3193 = vpop.f32.mrf.mxu0
        %v3194 = vadd.f32 %v3065, %v3193
        %v3195 = vpop.f32.mrf.mxu0
        %3196 = vmatprep.mubr.f32.mxu0 0.0
        %v3197 = vand.u32 %v325, 4294901760
        %3198 = vmatmul.mubr.f32.gmra.mxu0 %v3197
        %v3199 = vpop.f32.mrf.mxu0
        %v3200 = vadd.f32 %v3071, %v3199
        %v3201 = vpop.f32.mrf.mxu0
        %3202 = vmatprep.mubr.f32.mxu0 0.0
        %v3203 = vand.u32 %v327, 4294901760
        %3204 = vmatmul.mubr.f32.gmra.mxu0 %v3203
        %v3205 = vpop.f32.mrf.mxu0
        %v3206 = vadd.f32 %v3077, %v3205
        %v3207 = vpop.f32.mrf.mxu0
        %3208 = vmatprep.mubr.f32.mxu0 0.0
        %v3209 = vand.u32 %v329, 4294901760
        %3210 = vmatmul.mubr.f32.gmra.mxu0 %v3209
        %v3211 = vpop.f32.mrf.mxu0
        %v3212 = vadd.f32 %v3083, %v3211
        %v3213 = vpop.f32.mrf.mxu0
        %3214 = vdwg.mxu0
        %v3215 = vadd.f32 %v2228, %v3170
        %v3216 = vadd.f32 %v2234, %v3176
        %v3217 = vadd.f32 %v2240, %v3182
        %v3218 = vadd.f32 %v2246, %v3188
        %v3219 = vadd.f32 %v2252, %v3194
        %v3220 = vadd.f32 %v2258, %v3200
        %v3221 = vadd.f32 %v2264, %v3206
        %v3222 = vadd.f32 %v2270, %v3212
        %3223 = vadd.xlane.f32.xlu0 %v3215
        %v3224 = vpop.xlane.xlu0 %3223
        %3225 = vadd.xlane.f32.xlu0 %v3216
        %v3226 = vpop.xlane.xlu0 %3225
        %3227 = vadd.xlane.f32.xlu0 %v3217
        %v3228 = vpop.xlane.xlu0 %3227
        %3229 = vadd.xlane.f32.xlu0 %v3218
        %v3230 = vpop.xlane.xlu0 %3229
        %3231 = vadd.xlane.f32.xlu0 %v3219
        %v3232 = vpop.xlane.xlu0 %3231
        %3233 = vadd.xlane.f32.xlu0 %v3220
        %v3234 = vpop.xlane.xlu0 %3233
        %3235 = vadd.xlane.f32.xlu0 %v3221
        %v3236 = vpop.xlane.xlu0 %3235
        %3237 = vadd.xlane.f32.xlu0 %v3222
        %v3238 = vpop.xlane.xlu0 %3237
        %v3239 = vrcp.pop 128.0
        %v3240 = vmul.f32 %v3224, %v3239
        %v3241 = vmul.f32 %v3226, %v3239
        %v3242 = vmul.f32 %v3228, %v3239
        %v3243 = vmul.f32 %v3230, %v3239
        %v3244 = vmul.f32 %v3232, %v3239
        %v3245 = vmul.f32 %v3234, %v3239
        %v3246 = vmul.f32 %v3236, %v3239
        %v3247 = vmul.f32 %v3238, %v3239
        %v3248 = vsub.f32 %v3215, %v3240
        %v3249 = vsub.f32 %v3216, %v3241
        %v3250 = vsub.f32 %v3217, %v3242
        %v3251 = vsub.f32 %v3218, %v3243
        %v3252 = vsub.f32 %v3219, %v3244
        %v3253 = vsub.f32 %v3220, %v3245
        %v3254 = vsub.f32 %v3221, %v3246
        %v3255 = vsub.f32 %v3222, %v3247
        %v3256 = vmul.f32 %v3248, %v3248
        %v3257 = vmul.f32 %v3249, %v3249
        %v3258 = vmul.f32 %v3250, %v3250
        %v3259 = vmul.f32 %v3251, %v3251
        %v3260 = vmul.f32 %v3252, %v3252
        %v3261 = vmul.f32 %v3253, %v3253
        %v3262 = vmul.f32 %v3254, %v3254
        %v3263 = vmul.f32 %v3255, %v3255
        %3264 = vadd.xlane.f32.xlu0 %v3256
        %v3265 = vpop.xlane.xlu0 %3264
        %3266 = vadd.xlane.f32.xlu0 %v3257
        %v3267 = vpop.xlane.xlu0 %3266
        %3268 = vadd.xlane.f32.xlu0 %v3258
        %v3269 = vpop.xlane.xlu0 %3268
        %3270 = vadd.xlane.f32.xlu0 %v3259
        %v3271 = vpop.xlane.xlu0 %3270
        %3272 = vadd.xlane.f32.xlu0 %v3260
        %v3273 = vpop.xlane.xlu0 %3272
        %3274 = vadd.xlane.f32.xlu0 %v3261
        %v3275 = vpop.xlane.xlu0 %3274
        %3276 = vadd.xlane.f32.xlu0 %v3262
        %v3277 = vpop.xlane.xlu0 %3276
        %3278 = vadd.xlane.f32.xlu0 %v3263
        %v3279 = vpop.xlane.xlu0 %3278
        %v3280 = vmul.f32 %v3265, %v3239
        %v3281 = vmul.f32 %v3267, %v3239
        %v3282 = vmul.f32 %v3269, %v3239
        %v3283 = vmul.f32 %v3271, %v3239
        %v3284 = vmul.f32 %v3273, %v3239
        %v3285 = vmul.f32 %v3275, %v3239
        %v3286 = vmul.f32 %v3277, %v3239
        %v3287 = vmul.f32 %v3279, %v3239
        %v3288 = vadd.f32 %v3280, 1e-05
        %v3289 = vadd.f32 %v3281, 1e-05
        %v3290 = vadd.f32 %v3282, 1e-05
        %v3291 = vadd.f32 %v3283, 1e-05
        %v3292 = vadd.f32 %v3284, 1e-05
        %v3293 = vadd.f32 %v3285, 1e-05
        %v3294 = vadd.f32 %v3286, 1e-05
        %v3295 = vadd.f32 %v3287, 1e-05
        %v3296 = vrsqrt.pop %v3288
        %v3297 = vrsqrt.pop %v3289
        %v3298 = vrsqrt.pop %v3290
        %v3299 = vrsqrt.pop %v3291
        %v3300 = vrsqrt.pop %v3292
        %v3301 = vrsqrt.pop %v3293
        %v3302 = vrsqrt.pop %v3294
        %v3303 = vrsqrt.pop %v3295
        %v3304 = vmul.f32 %v3248, %v3296
        %v3305 = vmul.f32 %v3249, %v3297
        %v3306 = vmul.f32 %v3250, %v3298
        %v3307 = vmul.f32 %v3251, %v3299
        %v3308 = vmul.f32 %v3252, %v3300
        %v3309 = vmul.f32 %v3253, %v3301
        %v3310 = vmul.f32 %v3254, %v3302
        %v3311 = vmul.f32 %v3255, %v3303
        %v3312 = vld [vmem:[%s3] sm:$0x1]
        %v3314 = vlaneseq
        %v3315 = vshrl.u32 %v3314, 7
        %v3316 = vsub.s32 0, %v3315
        %v3317 = vrot.slane %v3312, %v3316
        %v3319 = vmul.f32 %v3304, %v3317
        %v3320 = vmul.f32 %v3305, %v3317
        %v3321 = vmul.f32 %v3306, %v3317
        %v3322 = vmul.f32 %v3307, %v3317
        %v3323 = vmul.f32 %v3308, %v3317
        %v3324 = vmul.f32 %v3309, %v3317
        %v3325 = vmul.f32 %v3310, %v3317
        %v3326 = vmul.f32 %v3311, %v3317
        %v3327 = vld [vmem:[%s4] sm:$0x1]
        %v3329 = vlaneseq
        %v3330 = vshrl.u32 %v3329, 7
        %v3331 = vsub.s32 0, %v3330
        %v3332 = vrot.slane %v3327, %v3331
        %v3334 = vadd.f32 %v3319, %v3332
        %v3335 = vadd.f32 %v3320, %v3332
        %v3336 = vadd.f32 %v3321, %v3332
        %v3337 = vadd.f32 %v3322, %v3332
        %v3338 = vadd.f32 %v3323, %v3332
        %v3339 = vadd.f32 %v3324, %v3332
        %v3340 = vadd.f32 %v3325, %v3332
        %v3341 = vadd.f32 %v3326, %v3332
        %v3342 = vmul.f32 %v3334, 0.5
        %v3343 = vmul.f32 %v3335, 0.5
        %v3344 = vmul.f32 %v3336, 0.5
        %v3345 = vmul.f32 %v3337, 0.5
        %v3346 = vmul.f32 %v3338, 0.5
        %v3347 = vmul.f32 %v3339, 0.5
        %v3348 = vmul.f32 %v3340, 0.5
        %v3349 = vmul.f32 %v3341, 0.5
        %v3350 = vmul.f32 %v3334, 0.70710677
        %v3351 = vmul.f32 %v3335, 0.70710677
        %v3352 = vmul.f32 %v3336, 0.70710677
        %v3353 = vmul.f32 %v3337, 0.70710677
        %v3354 = vmul.f32 %v3338, 0.70710677
        %v3355 = vmul.f32 %v3339, 0.70710677
        %v3356 = vmul.f32 %v3340, 0.70710677
        %v3357 = vmul.f32 %v3341, 0.70710677
        %v3358 = verf.f32.pop %v3350
        %v3359 = verf.f32.pop %v3351
        %v3360 = verf.f32.pop %v3352
        %v3361 = verf.f32.pop %v3353
        %v3362 = verf.f32.pop %v3354
        %v3363 = verf.f32.pop %v3355
        %v3364 = verf.f32.pop %v3356
        %v3365 = verf.f32.pop %v3357
        %v3366 = vadd.f32 %v3358, 1.0
        %v3367 = vadd.f32 %v3359, 1.0
        %v3368 = vadd.f32 %v3360, 1.0
        %v3369 = vadd.f32 %v3361, 1.0
        %v3370 = vadd.f32 %v3362, 1.0
        %v3371 = vadd.f32 %v3363, 1.0
        %v3372 = vadd.f32 %v3364, 1.0
        %v3373 = vadd.f32 %v3365, 1.0
        %v3374 = vmul.f32 %v3342, %v3366
        %v3375 = vmul.f32 %v3343, %v3367
        %v3376 = vmul.f32 %v3344, %v3368
        %v3377 = vmul.f32 %v3345, %v3369
        %v3378 = vmul.f32 %v3346, %v3370
        %v3379 = vmul.f32 %v3347, %v3371
        %v3380 = vmul.f32 %v3348, %v3372
        %v3381 = vmul.f32 %v3349, %v3373
        %3382 = vst [vmem:[%s309] sm:$0xff] %v3374
        %3383 = vst [vmem:[%s309 + $0x8] sm:$0xff] %v3375
        %3384 = vst [vmem:[%s309 + $0x10] sm:$0xff] %v3376
        %3385 = vst [vmem:[%s309 + $0x18] sm:$0xff] %v3377
        %3386 = vst [vmem:[%s309 + $0x20] sm:$0xff] %v3378
        %3387 = vst [vmem:[%s309 + $0x28] sm:$0xff] %v3379
        %3388 = vst [vmem:[%s309 + $0x30] sm:$0xff] %v3380
        %3389 = vst [vmem:[%s309 + $0x38] sm:$0xff] %v3381
        %s3390 = sand.u32 %s156, 1
        %s3391 = scalar_lea.sflag [#allocation4], %s3390
        %s3392 = sand.u32 %s156, 1
        %s3393 = smul.addr %s3392, 64
        %s3394 = scalar_lea.vmem [#allocation8], %s3393
        // Predicated region
        $region53: #{tpu_custom_call.1} parent=39 // pred_check
          %p3395 = pneg %p166
        $region54: #{tpu_custom_call.1} parent=39 // pred_check_branch
          %3397 = sbr.rel (%p3395) target = $region56
        $region55: #{tpu_custom_call.1} parent=39 // pred_region
          %s3398 = smul.u32 8, %s25
          %s3400 = ssub.s32 1024, 1024
          %3401 = vsyncadd %s3391, %s3400
          %s3402 = smul.addr %s3398, 128
          %s3403 = scalar_lea.hbm %s5, %s3402
          %s3404 = sshll.u32 %s3394, 4
          %s3405 = int_to_ptr.vmem [resolvable:$true] %s3404
          %3410 = dma.vmem_to_hbm [thread:$0]  %s3405, 1024, %s3403, %s3391, 128, 128, 8
        $region56: #{tpu_custom_call.1} parent=39 // pred_fallthru
          _
      $region40: #{tpu_custom_call.1} parent=5 // pred_fallthru
        _
      %p3411 = scmp.le.s32.totalorder 2, %s20
      // Predicated region
      $region57: #{tpu_custom_call.1} parent=5 // pred_check
        %p3412 = pneg %p3411
      $region58: #{tpu_custom_call.1} parent=5 // pred_check_branch
        %3414 = sbr.rel (%p3412) target = $region60
      $region59: #{tpu_custom_call.1} parent=5 // pred_region
        %s3415 = ssub.s32 %s20, 2
        // Predicated region
        $region61: #{tpu_custom_call.1} parent=59 // pred_check
          %p3416 = pneg %p172
        $region62: #{tpu_custom_call.1} parent=59 // pred_check_branch
          %3418 = sbr.rel (%p3416) target = $region64
        $region63: #{tpu_custom_call.1} parent=59 // pred_region
          %s3419 = sand.u32 %s157, 1
          %s3420 = scalar_lea.sflag [#allocation4], %s3419
          %s3421 = sand.u32 %s157, 1
          %s3422 = smul.addr %s3421, 64
          %s3423 = scalar_lea.vmem [#allocation8], %s3422
          %3424 = dma.done %s3420, 1024
        $region64: #{tpu_custom_call.1} parent=59 // pred_fallthru
          _
      $region60: #{tpu_custom_call.1} parent=5 // pred_fallthru
        _
    $region6: #{tpu_custom_call.1} parent=1 // loop_footer
      %s24 = sadd.s32 1, %s20
    $region7: #{tpu_custom_call.1} parent=1 // loop_footer_branch
      %19 = sbr.rel target = $region3
    $region8: #{tpu_custom_call.1} parent=1 // loop_exit
      _
    %3425 = vsyncpa [#allocation3], 1
    %s3426 = scalar_lea.sflag [#allocation3], 1
    %3427 = vsyncpa %s3426, 1
    %3428 = vsyncpa [#allocation6], 1
    %s3429 = scalar_lea.sflag [#allocation6], 1
    %3430 = vsyncpa %s3429, 1
    %3431 = vsyncpa [#allocation4], 1
    %s3432 = scalar_lea.sflag [#allocation4], 1
    %3433 = vsyncpa %s3432, 1

</llo_original>
